<compile_context>
chip_gen: v7x
topology: tpu7x:2x2x1
jax: 0.10.0
libtpu: 0.0.40
codegen_flags: <defaults>
</compile_context>

<pallas_src>
import functools

import jax
import jax.numpy as jnp
from jax.experimental import pallas as pl
from jax.experimental.pallas import tpu as pltpu


# ---------------------------------------------------------------------------
# Model hyper-parameters (small, synthetic)
# ---------------------------------------------------------------------------
BATCH          = 8
SELF_INPUT_DIM = 32
ACTION_DIM     = 8
ACTION_DIM_0   = 8
REWARD_DIM_0   = 4
MSG_DIM        = 16
H_DIM          = 32
MAX_ACTION     = 1.0
MAX_CHILDREN   = 2

ENC_DIM    = 64
COMBINED   = 4 * ENC_DIM + H_DIM                      # 288
MLP_H1     = 400
MLP_H2     = 300
MSG_OUT    = MSG_DIM * MAX_CHILDREN                   # 32

ENC_IN     = SELF_INPUT_DIM + MSG_DIM + ACTION_DIM_0 + REWARD_DIM_0   # 60
ENC_IN_PAD = 64                                       # zero-padded K for encoders
OUT_TOTAL  = ACTION_DIM + MSG_OUT + H_DIM             # 72
OUT_PAD    = 128                                      # lane-dense output slab width


# ---------------------------------------------------------------------------
# Pallas kernel: full fused forward pass
# ---------------------------------------------------------------------------
def _actor_kernel(
    # packed inputs (f32)
    xin_ref,   # (B, ENC_IN_PAD)            [x | m | a | r | zero-pad]
    h_ref,     # (B, H_DIM)
    # packed params (weights bf16, biases f32)
    wenc_ref,  # (ENC_IN_PAD, 4*ENC_DIM)    block-diagonal encoder weight
    benc_ref,  # (1, 4*ENC_DIM)
    w1_ref,    # (COMBINED, 3*MLP_H1)       fused decoder layer-1
    b1_ref,    # (1, 3*MLP_H1)
    w2_ref,    # (3, MLP_H1, MLP_H2)        per-decoder layer-2
    b2_ref,    # (3, 1, MLP_H2)
    w3_ref,    # (3, MLP_H2, OUT_PAD)       per-decoder layer-3, lane-padded
    b3_ref,    # (1, OUT_PAD)
    # output
    out_ref,   # (B, OUT_PAD)  f32: [action | msg_down | new_hidden | zero-pad]
    *, max_action,
):
    f32 = jnp.float32
    bf16 = jnp.bfloat16

    def mxu_dot(x_f32, w_bf16):
        # Native bf16 MXU matmul: cast only the tiny LHS activation, keep
        # the f32 accumulator; the bf16 weight is used as-is (no upcast).
        return jnp.dot(x_f32.astype(bf16), w_bf16, preferred_element_type=f32)

    def l2_normalize(v):
        # matches torch.nn.functional.normalize(dim=-1, eps=1e-12):
        # v / max(||v||, eps) == v * rsqrt(max(||v||^2, eps^2))
        ss = jnp.sum(v * v, axis=-1, keepdims=True)
        return v * jax.lax.rsqrt(jnp.maximum(ss, 1e-24))

    xin = xin_ref[...]                                   # (B, 64) f32
    h   = h_ref[...]                                     # (B, 32) f32
    B   = xin.shape[0]

    # ---- fused encoders (one matmul, block-diagonal weight) ----------------
    enc = mxu_dot(xin, wenc_ref[...]) + benc_ref[...]    # (B, 256) f32
    segs = [l2_normalize(enc[:, i * ENC_DIM:(i + 1) * ENC_DIM]) for i in range(4)]
    # order matches torch.cat([x, m, a, r, h], dim=-1)
    combined = jnp.tanh(jnp.concatenate(segs + [h], axis=-1))   # (B, 288) f32

    # ---- fused decoder layer-1 (one wide matmul) ---------------------------
    y1 = jnp.maximum(mxu_dot(combined, w1_ref[...]) + b1_ref[...], 0.0)  # (B, 1200)

    # ---- decoder layers 2+3: per-group, accumulate straight into y3 --------
    # (no (B, 900) concat; w3 per group already has its lane-padded block)
    y3 = jnp.broadcast_to(b3_ref[...], (B, OUT_PAD)).astype(f32)         # (B, 128)
    for g in range(3):
        y1_g = y1[:, g * MLP_H1:(g + 1) * MLP_H1]                        # (B, 400)
        y2_g = jnp.maximum(mxu_dot(y1_g, w2_ref[g]) + b2_ref[g], 0.0)    # (B, 300)
        y3 = y3 + mxu_dot(y2_g, w3_ref[g])                               # (B, 128)

    # ---- epilogue on the full 128-wide slab via lane masks (no concats) ----
    lane      = jax.lax.broadcasted_iota(jnp.int32, (B, OUT_PAD), 1)
    is_action = lane < ACTION_DIM
    is_msg    = (lane >= ACTION_DIM) & (lane < ACTION_DIM + MSG_OUT)
    is_hidden = (lane >= ACTION_DIM + MSG_OUT) & (lane < OUT_TOTAL)

    tanh_y3  = jnp.tanh(y3)
    msg_vals = jnp.where(is_msg, y3, 0.0)
    msg_ss   = jnp.sum(msg_vals * msg_vals, axis=-1, keepdims=True)
    msg_norm = msg_vals * jax.lax.rsqrt(jnp.maximum(msg_ss, 1e-24))

    out = jnp.where(is_action, max_action * tanh_y3,
          jnp.where(is_msg, msg_norm,
          jnp.where(is_hidden, tanh_y3, 0.0)))
    out_ref[...] = out.astype(out_ref.dtype)


# ---------------------------------------------------------------------------
# Wrapper
# ---------------------------------------------------------------------------
def actor_down_action_memaug(x, a, r, m, h, packed_params, *, max_action=MAX_ACTION):
    """Whole-array VMEM blocks, no grid (everything is tiny and DMA-bound)."""
    batch = x.shape[0]

    # pack [x | m | a | r] and zero-pad K to 64 for the fused encoder matmul
    enc_in = jnp.concatenate(
        [x, m, a, r, jnp.zeros((batch, ENC_IN_PAD - ENC_IN), jnp.float32)], axis=-1)

    vmem = pl.BlockSpec(memory_space=pltpu.MemorySpace.VMEM)
    n_in = 2 + len(packed_params)

    kernel = functools.partial(_actor_kernel, max_action=max_action)

    # TODO(synk): when evaluating many agent/timestep instances, add a grid
    # axis over instances with constant-index weight BlockSpecs (weights stay
    # resident) and dimension_semantics=("parallel",) to use both v7x cores.
    slab = pl.pallas_call(
        kernel,
        out_shape=jax.ShapeDtypeStruct((batch, OUT_PAD), jnp.float32),
        in_specs=[vmem] * n_in,
        out_specs=vmem,
        compiler_params=pltpu.CompilerParams(vmem_limit_bytes=6 << 20),
    )(enc_in, h, *packed_params)

    action     = slab[:, :ACTION_DIM]
    msg_down   = slab[:, ACTION_DIM:ACTION_DIM + MSG_OUT]
    new_hidden = slab[:, ACTION_DIM + MSG_OUT:OUT_TOTAL]
    return action, msg_down, new_hidden


# ---------------------------------------------------------------------------
# Parameter init (original PyTorch-equivalent layout) + packing for the kernel
# ---------------------------------------------------------------------------
def _init_linear(key, in_dim, out_dim, scale=0.05):
    kw, kb = jax.random.split(key)
    w = scale * jax.random.normal(kw, (in_dim, out_dim), dtype=jnp.float32)
    b = scale * jax.random.normal(kb, (1, out_dim), dtype=jnp.float32)
    return w, b


def init_params(key):
    keys = jax.random.split(key, 13)
    params = []
    # encoders: obs, msg, act, rew -> 64 each
    params += _init_linear(keys[0], SELF_INPUT_DIM, ENC_DIM)
    params += _init_linear(keys[1], MSG_DIM, ENC_DIM)
    params += _init_linear(keys[2], ACTION_DIM_0, ENC_DIM)
    params += _init_linear(keys[3], REWARD_DIM_0, ENC_DIM)
    # act_decoder MLP
    params += _init_linear(keys[4], COMBINED, MLP_H1)
    params += _init_linear(keys[5], MLP_H1, MLP_H2)
    params += _init_linear(keys[6], MLP_H2, ACTION_DIM)
    # msg_decoder MLP
    params += _init_linear(keys[7], COMBINED, MLP_H1)
    params += _init_linear(keys[8], MLP_H1, MLP_H2)
    params += _init_linear(keys[9], MLP_H2, MSG_OUT)
    # h_decoder MLP
    params += _init_linear(keys[10], COMBINED, MLP_H1)
    params += _init_linear(keys[11], MLP_H1, MLP_H2)
    params += _init_linear(keys[12], MLP_H2, H_DIM)
    return tuple(params)


def pack_params(raw):
    """Pack the 26 original tensors into 10 lane-dense arrays (weights bf16)."""
    (ow, ob, mw, mb, aw, ab, rw, rb,
     a1w, a1b, a2w, a2b, a3w, a3b,
     m1w, m1b, m2w, m2b, m3w, m3b,
     h1w, h1b, h2w, h2b, h3w, h3b) = raw

    # fused encoder: block-diagonal weight, concatenated input is [x|m|a|r|pad]
    w_enc = jnp.zeros((ENC_IN_PAD, 4 * ENC_DIM), jnp.float32)
    w_enc = w_enc.at[0:32, 0:64].set(ow)
    w_enc = w_enc.at[32:48, 64:128].set(mw)
    w_enc = w_enc.at[48:56, 128:192].set(aw)
    w_enc = w_enc.at[56:60, 192:256].set(rw)
    b_enc = jnp.concatenate([ob, mb, ab, rb], axis=-1)            # (1, 256)

    # fused decoder layer-1
    w1 = jnp.concatenate([a1w, m1w, h1w], axis=-1)                # (288, 1200)
    b1 = jnp.concatenate([a1b, m1b, h1b], axis=-1)                # (1, 1200)

    # decoder layer-2, packed per group
    w2 = jnp.stack([a2w, m2w, h2w], axis=0)                       # (3, 400, 300)
    b2 = jnp.stack([a2b, m2b, h2b], axis=0)                       # (3, 1, 300)

    # decoder layer-3, per group, each lane-padded to 128 with its own block
    w3 = jnp.zeros((3, MLP_H2, OUT_PAD), jnp.float32)
    w3 = w3.at[0, :, 0:ACTION_DIM].set(a3w)
    w3 = w3.at[1, :, ACTION_DIM:ACTION_DIM + MSG_OUT].set(m3w)
    w3 = w3.at[2, :, ACTION_DIM + MSG_OUT:OUT_TOTAL].set(h3w)
    b3 = jnp.zeros((1, OUT_PAD), jnp.float32)
    b3 = b3.at[:, 0:ACTION_DIM].set(a3b)
    b3 = b3.at[:, ACTION_DIM:ACTION_DIM + MSG_OUT].set(m3b)
    b3 = b3.at[:, ACTION_DIM + MSG_OUT:OUT_TOTAL].set(h3b)

    bf16 = jnp.bfloat16
    return (w_enc.astype(bf16), b_enc,
            w1.astype(bf16), b1,
            w2.astype(bf16), b2,
            w3.astype(bf16), b3)


# ---------------------------------------------------------------------------
# Pure-JAX reference (original module semantics) — run with the same bf16
# weight + per-dot bf16 LHS precision as the kernel so the comparison
# validates kernel logic, not quantization error.
# ---------------------------------------------------------------------------
def reference_forward(x, a, r, m, h, params, max_action=MAX_ACTION):
    p = list(params)
    bf16, f32 = jnp.bfloat16, jnp.float32

    def lin(v, w, b):
        return jnp.dot(v.astype(bf16), w.astype(bf16),
                       preferred_element_type=f32) + b

    def norm(v):
        ss = jnp.sum(v * v, axis=-1, keepdims=True)
        return v * jax.lax.rsqrt(jnp.maximum(ss, 1e-24))

    def mlp(c, w1, b1, w2, b2, w3, b3):
        y = jnp.maximum(lin(c, w1, b1), 0.0)
        y = jnp.maximum(lin(y, w2, b2), 0.0)
        return lin(y, w3, b3)

    ow, ob, mw, mb, aw, ab, rw, rb = p[:8]
    xe = norm(lin(x, ow, ob)); me = norm(lin(m, mw, mb))
    ae = norm(lin(a, aw, ab)); re = norm(lin(r, rw, rb))
    combined = jnp.tanh(jnp.concatenate([xe, me, ae, re, h], axis=-1))
    action = max_action * jnp.tanh(mlp(combined, *p[8:14]))
    msg_down = norm(mlp(combined, *p[14:20]))
    new_hidden = jnp.tanh(mlp(combined, *p[20:26]))
    return action, msg_down, new_hidden


# ---------------------------------------------------------------------------
if __name__ == "__main__":
    key = jax.random.PRNGKey(0)
    k_x, k_a, k_r, k_m, k_h, k_p = jax.random.split(key, 6)

    x = jax.random.normal(k_x, (BATCH, SELF_INPUT_DIM), dtype=jnp.float32)
    a = jax.random.normal(k_a, (BATCH, ACTION_DIM_0), dtype=jnp.float32)
    r = jax.random.normal(k_r, (BATCH, REWARD_DIM_0), dtype=jnp.float32)
    m = jax.random.normal(k_m, (BATCH, MSG_DIM), dtype=jnp.float32)
    h = jax.random.normal(k_h, (BATCH, H_DIM), dtype=jnp.float32)

    raw_params = init_params(k_p)
    packed = pack_params(raw_params)

    action, msg_down, new_hidden = actor_down_action_memaug(x, a, r, m, h, packed)
    jax.block_until_ready((action, msg_down, new_hidden))

    ref_action, ref_msg, ref_hidden = reference_forward(x, a, r, m, h, raw_params)

    assert jnp.allclose(action, ref_action, atol=2e-2, rtol=2e-2)
    assert jnp.allclose(msg_down, ref_msg, atol=2e-2, rtol=2e-2)
    assert jnp.allclose(new_hidden, ref_hidden, atol=2e-2, rtol=2e-2)

    print("KERNEL_OK")
</pallas_src>

<mosaic_0001>
module attributes {stable_mosaic.version = 11 : i64} {
  func.func @_actor_kernel(%arg0: memref<8x64xf32, #tpu.memory_space<vmem>>, %arg1: memref<8x32xf32, #tpu.memory_space<vmem>>, %arg2: memref<64x256xbf16, #tpu.memory_space<vmem>>, %arg3: memref<1x256xf32, #tpu.memory_space<vmem>>, %arg4: memref<288x1200xbf16, #tpu.memory_space<vmem>>, %arg5: memref<1x1200xf32, #tpu.memory_space<vmem>>, %arg6: memref<3x400x300xbf16, #tpu.memory_space<vmem>>, %arg7: memref<3x1x300xf32, #tpu.memory_space<vmem>>, %arg8: memref<3x300x128xbf16, #tpu.memory_space<vmem>>, %arg9: memref<1x128xf32, #tpu.memory_space<vmem>>, %arg10: memref<8x128xf32, #tpu.memory_space<vmem>>) attributes {dimension_semantics = [], scalar_prefetch = 0 : i64, scratch_operands = 0 : i64, tpu.core_type = #tpu.core_type<tc>} {
    %c0 = arith.constant 0 : index
    %c0_0 = arith.constant 0 : index
    %0 = vector.load %arg0[%c0, %c0_0] : memref<8x64xf32, #tpu.memory_space<vmem>>, vector<8x64xf32>
    %c0_1 = arith.constant 0 : index
    %c0_2 = arith.constant 0 : index
    %1 = vector.load %arg1[%c0_1, %c0_2] : memref<8x32xf32, #tpu.memory_space<vmem>>, vector<8x32xf32>
    %c0_3 = arith.constant 0 : index
    %c0_4 = arith.constant 0 : index
    %2 = vector.load %arg2[%c0_3, %c0_4] : memref<64x256xbf16, #tpu.memory_space<vmem>>, vector<64x256xbf16>
    %3 = arith.truncf %0 : vector<8x64xf32> to vector<8x64xbf16>
    %cst = arith.constant dense<0.000000e+00> : vector<8x256xf32>
    %4 = tpu.matmul %3, %2, %cst {dimension_numbers = #tpu.dot_dimension_numbers<[1], [0], [0], [1], [0, 0, 1, 1], [], []>} : vector<8x64xbf16>, vector<64x256xbf16>, vector<8x256xf32> -> vector<8x256xf32>
    %c0_5 = arith.constant 0 : index
    %c0_6 = arith.constant 0 : index
    %5 = vector.load %arg3[%c0_5, %c0_6] : memref<1x256xf32, #tpu.memory_space<vmem>>, vector<1x256xf32>
    %6 = vector.broadcast %5 : vector<1x256xf32> to vector<8x256xf32>
    %7 = arith.addf %4, %6 : vector<8x256xf32>
    %8 = vector.extract_strided_slice %7 {offsets = [0, 0], sizes = [8, 64], strides = [1, 1]} : vector<8x256xf32> to vector<8x64xf32>
    %9 = arith.mulf %8, %8 : vector<8x64xf32>
    %cst_7 = arith.constant dense<0.000000e+00> : vector<8xf32>
    %10 = vector.multi_reduction <add>, %9, %cst_7 [1] : vector<8x64xf32> to vector<8xf32>
    %11 = vector.shape_cast %10 : vector<8xf32> to vector<8x1xf32>
    %cst_8 = arith.constant 1.000000e-24 : f32
    %12 = vector.broadcast %cst_8 : f32 to vector<8x1xf32>
    %13 = arith.maximumf %11, %12 : vector<8x1xf32>
    %14 = math.rsqrt %13 : vector<8x1xf32>
    %15 = vector.broadcast %14 : vector<8x1xf32> to vector<8x64xf32>
    %16 = arith.mulf %8, %15 : vector<8x64xf32>
    %17 = vector.extract_strided_slice %7 {offsets = [0, 64], sizes = [8, 64], strides = [1, 1]} : vector<8x256xf32> to vector<8x64xf32>
    %18 = arith.mulf %17, %17 : vector<8x64xf32>
    %cst_9 = arith.constant dense<0.000000e+00> : vector<8xf32>
    %19 = vector.multi_reduction <add>, %18, %cst_9 [1] : vector<8x64xf32> to vector<8xf32>
    %20 = vector.shape_cast %19 : vector<8xf32> to vector<8x1xf32>
    %cst_10 = arith.constant 1.000000e-24 : f32
    %21 = vector.broadcast %cst_10 : f32 to vector<8x1xf32>
    %22 = arith.maximumf %20, %21 : vector<8x1xf32>
    %23 = math.rsqrt %22 : vector<8x1xf32>
    %24 = vector.broadcast %23 : vector<8x1xf32> to vector<8x64xf32>
    %25 = arith.mulf %17, %24 : vector<8x64xf32>
    %26 = vector.extract_strided_slice %7 {offsets = [0, 128], sizes = [8, 64], strides = [1, 1]} : vector<8x256xf32> to vector<8x64xf32>
    %27 = arith.mulf %26, %26 : vector<8x64xf32>
    %cst_11 = arith.constant dense<0.000000e+00> : vector<8xf32>
    %28 = vector.multi_reduction <add>, %27, %cst_11 [1] : vector<8x64xf32> to vector<8xf32>
    %29 = vector.shape_cast %28 : vector<8xf32> to vector<8x1xf32>
    %cst_12 = arith.constant 1.000000e-24 : f32
    %30 = vector.broadcast %cst_12 : f32 to vector<8x1xf32>
    %31 = arith.maximumf %29, %30 : vector<8x1xf32>
    %32 = math.rsqrt %31 : vector<8x1xf32>
    %33 = vector.broadcast %32 : vector<8x1xf32> to vector<8x64xf32>
    %34 = arith.mulf %26, %33 : vector<8x64xf32>
    %35 = vector.extract_strided_slice %7 {offsets = [0, 192], sizes = [8, 64], strides = [1, 1]} : vector<8x256xf32> to vector<8x64xf32>
    %36 = arith.mulf %35, %35 : vector<8x64xf32>
    %cst_13 = arith.constant dense<0.000000e+00> : vector<8xf32>
    %37 = vector.multi_reduction <add>, %36, %cst_13 [1] : vector<8x64xf32> to vector<8xf32>
    %38 = vector.shape_cast %37 : vector<8xf32> to vector<8x1xf32>
    %cst_14 = arith.constant 1.000000e-24 : f32
    %39 = vector.broadcast %cst_14 : f32 to vector<8x1xf32>
    %40 = arith.maximumf %38, %39 : vector<8x1xf32>
    %41 = math.rsqrt %40 : vector<8x1xf32>
    %42 = vector.broadcast %41 : vector<8x1xf32> to vector<8x64xf32>
    %43 = arith.mulf %35, %42 : vector<8x64xf32>
    %44 = tpu.concatenate %16, %25, %34, %43, %1 in 1 : vector<8x64xf32>, vector<8x64xf32>, vector<8x64xf32>, vector<8x64xf32>, vector<8x32xf32> -> vector<8x288xf32>
    %45 = math.tanh %44 : vector<8x288xf32>
    %c0_15 = arith.constant 0 : index
    %c0_16 = arith.constant 0 : index
    %46 = vector.load %arg4[%c0_15, %c0_16] : memref<288x1200xbf16, #tpu.memory_space<vmem>>, vector<288x1200xbf16>
    %47 = arith.truncf %45 : vector<8x288xf32> to vector<8x288xbf16>
    %cst_17 = arith.constant dense<0.000000e+00> : vector<8x1200xf32>
    %48 = tpu.matmul %47, %46, %cst_17 {dimension_numbers = #tpu.dot_dimension_numbers<[1], [0], [0], [1], [0, 0, 1, 1], [], []>} : vector<8x288xbf16>, vector<288x1200xbf16>, vector<8x1200xf32> -> vector<8x1200xf32>
    %c0_18 = arith.constant 0 : index
    %c0_19 = arith.constant 0 : index
    %49 = vector.load %arg5[%c0_18, %c0_19] : memref<1x1200xf32, #tpu.memory_space<vmem>>, vector<1x1200xf32>
    %50 = vector.broadcast %49 : vector<1x1200xf32> to vector<8x1200xf32>
    %51 = arith.addf %48, %50 : vector<8x1200xf32>
    %cst_20 = arith.constant 0.000000e+00 : f32
    %52 = vector.broadcast %cst_20 : f32 to vector<8x1200xf32>
    %53 = arith.maximumf %51, %52 : vector<8x1200xf32>
    %c0_21 = arith.constant 0 : index
    %c0_22 = arith.constant 0 : index
    %54 = vector.load %arg9[%c0_21, %c0_22] : memref<1x128xf32, #tpu.memory_space<vmem>>, vector<1x128xf32>
    %55 = vector.shape_cast %54 : vector<1x128xf32> to vector<1x128xf32>
    %56 = vector.broadcast %55 : vector<1x128xf32> to vector<8x128xf32>
    %57 = vector.extract_strided_slice %53 {offsets = [0, 0], sizes = [8, 400], strides = [1, 1]} : vector<8x1200xf32> to vector<8x400xf32>
    %c0_23 = arith.constant 0 : index
    %c0_24 = arith.constant 0 : index
    %c0_25 = arith.constant 0 : index
    %58 = vector.load %arg6[%c0_23, %c0_24, %c0_25] : memref<3x400x300xbf16, #tpu.memory_space<vmem>>, vector<1x400x300xbf16>
    %59 = vector.shape_cast %58 : vector<1x400x300xbf16> to vector<400x300xbf16>
    %60 = arith.truncf %57 : vector<8x400xf32> to vector<8x400xbf16>
    %cst_26 = arith.constant dense<0.000000e+00> : vector<8x300xf32>
    %61 = tpu.matmul %60, %59, %cst_26 {dimension_numbers = #tpu.dot_dimension_numbers<[1], [0], [0], [1], [0, 0, 1, 1], [], []>} : vector<8x400xbf16>, vector<400x300xbf16>, vector<8x300xf32> -> vector<8x300xf32>
    %c0_27 = arith.constant 0 : index
    %c0_28 = arith.constant 0 : index
    %c0_29 = arith.constant 0 : index
    %62 = vector.load %arg7[%c0_27, %c0_28, %c0_29] : memref<3x1x300xf32, #tpu.memory_space<vmem>>, vector<1x1x300xf32>
    %63 = vector.shape_cast %62 : vector<1x1x300xf32> to vector<1x300xf32>
    %64 = vector.broadcast %63 : vector<1x300xf32> to vector<8x300xf32>
    %65 = arith.addf %61, %64 : vector<8x300xf32>
    %cst_30 = arith.constant 0.000000e+00 : f32
    %66 = vector.broadcast %cst_30 : f32 to vector<8x300xf32>
    %67 = arith.maximumf %65, %66 : vector<8x300xf32>
    %c0_31 = arith.constant 0 : index
    %c0_32 = arith.constant 0 : index
    %c0_33 = arith.constant 0 : index
    %68 = vector.load %arg8[%c0_31, %c0_32, %c0_33] : memref<3x300x128xbf16, #tpu.memory_space<vmem>>, vector<1x300x128xbf16>
    %69 = vector.shape_cast %68 : vector<1x300x128xbf16> to vector<300x128xbf16>
    %70 = arith.truncf %67 : vector<8x300xf32> to vector<8x300xbf16>
    %cst_34 = arith.constant dense<0.000000e+00> : vector<8x128xf32>
    %71 = tpu.matmul %70, %69, %cst_34 {dimension_numbers = #tpu.dot_dimension_numbers<[1], [0], [0], [1], [0, 0, 1, 1], [], []>} : vector<8x300xbf16>, vector<300x128xbf16>, vector<8x128xf32> -> vector<8x128xf32>
    %72 = arith.addf %56, %71 : vector<8x128xf32>
    %73 = vector.extract_strided_slice %53 {offsets = [0, 400], sizes = [8, 400], strides = [1, 1]} : vector<8x1200xf32> to vector<8x400xf32>
    %c1 = arith.constant 1 : index
    %c0_35 = arith.constant 0 : index
    %c0_36 = arith.constant 0 : index
    %74 = vector.load %arg6[%c1, %c0_35, %c0_36] : memref<3x400x300xbf16, #tpu.memory_space<vmem>>, vector<1x400x300xbf16>
    %75 = vector.shape_cast %74 : vector<1x400x300xbf16> to vector<400x300xbf16>
    %76 = arith.truncf %73 : vector<8x400xf32> to vector<8x400xbf16>
    %cst_37 = arith.constant dense<0.000000e+00> : vector<8x300xf32>
    %77 = tpu.matmul %76, %75, %cst_37 {dimension_numbers = #tpu.dot_dimension_numbers<[1], [0], [0], [1], [0, 0, 1, 1], [], []>} : vector<8x400xbf16>, vector<400x300xbf16>, vector<8x300xf32> -> vector<8x300xf32>
    %c1_38 = arith.constant 1 : index
    %c0_39 = arith.constant 0 : index
    %c0_40 = arith.constant 0 : index
    %78 = vector.load %arg7[%c1_38, %c0_39, %c0_40] : memref<3x1x300xf32, #tpu.memory_space<vmem>>, vector<1x1x300xf32>
    %79 = vector.shape_cast %78 : vector<1x1x300xf32> to vector<1x300xf32>
    %80 = vector.broadcast %79 : vector<1x300xf32> to vector<8x300xf32>
    %81 = arith.addf %77, %80 : vector<8x300xf32>
    %cst_41 = arith.constant 0.000000e+00 : f32
    %82 = vector.broadcast %cst_41 : f32 to vector<8x300xf32>
    %83 = arith.maximumf %81, %82 : vector<8x300xf32>
    %c1_42 = arith.constant 1 : index
    %c0_43 = arith.constant 0 : index
    %c0_44 = arith.constant 0 : index
    %84 = vector.load %arg8[%c1_42, %c0_43, %c0_44] : memref<3x300x128xbf16, #tpu.memory_space<vmem>>, vector<1x300x128xbf16>
    %85 = vector.shape_cast %84 : vector<1x300x128xbf16> to vector<300x128xbf16>
    %86 = arith.truncf %83 : vector<8x300xf32> to vector<8x300xbf16>
    %cst_45 = arith.constant dense<0.000000e+00> : vector<8x128xf32>
    %87 = tpu.matmul %86, %85, %cst_45 {dimension_numbers = #tpu.dot_dimension_numbers<[1], [0], [0], [1], [0, 0, 1, 1], [], []>} : vector<8x300xbf16>, vector<300x128xbf16>, vector<8x128xf32> -> vector<8x128xf32>
    %88 = arith.addf %72, %87 : vector<8x128xf32>
    %89 = vector.extract_strided_slice %53 {offsets = [0, 800], sizes = [8, 400], strides = [1, 1]} : vector<8x1200xf32> to vector<8x400xf32>
    %c2 = arith.constant 2 : index
    %c0_46 = arith.constant 0 : index
    %c0_47 = arith.constant 0 : index
    %90 = vector.load %arg6[%c2, %c0_46, %c0_47] : memref<3x400x300xbf16, #tpu.memory_space<vmem>>, vector<1x400x300xbf16>
    %91 = vector.shape_cast %90 : vector<1x400x300xbf16> to vector<400x300xbf16>
    %92 = arith.truncf %89 : vector<8x400xf32> to vector<8x400xbf16>
    %cst_48 = arith.constant dense<0.000000e+00> : vector<8x300xf32>
    %93 = tpu.matmul %92, %91, %cst_48 {dimension_numbers = #tpu.dot_dimension_numbers<[1], [0], [0], [1], [0, 0, 1, 1], [], []>} : vector<8x400xbf16>, vector<400x300xbf16>, vector<8x300xf32> -> vector<8x300xf32>
    %c2_49 = arith.constant 2 : index
    %c0_50 = arith.constant 0 : index
    %c0_51 = arith.constant 0 : index
    %94 = vector.load %arg7[%c2_49, %c0_50, %c0_51] : memref<3x1x300xf32, #tpu.memory_space<vmem>>, vector<1x1x300xf32>
    %95 = vector.shape_cast %94 : vector<1x1x300xf32> to vector<1x300xf32>
    %96 = vector.broadcast %95 : vector<1x300xf32> to vector<8x300xf32>
    %97 = arith.addf %93, %96 : vector<8x300xf32>
    %cst_52 = arith.constant 0.000000e+00 : f32
    %98 = vector.broadcast %cst_52 : f32 to vector<8x300xf32>
    %99 = arith.maximumf %97, %98 : vector<8x300xf32>
    %c2_53 = arith.constant 2 : index
    %c0_54 = arith.constant 0 : index
    %c0_55 = arith.constant 0 : index
    %100 = vector.load %arg8[%c2_53, %c0_54, %c0_55] : memref<3x300x128xbf16, #tpu.memory_space<vmem>>, vector<1x300x128xbf16>
    %101 = vector.shape_cast %100 : vector<1x300x128xbf16> to vector<300x128xbf16>
    %102 = arith.truncf %99 : vector<8x300xf32> to vector<8x300xbf16>
    %cst_56 = arith.constant dense<0.000000e+00> : vector<8x128xf32>
    %103 = tpu.matmul %102, %101, %cst_56 {dimension_numbers = #tpu.dot_dimension_numbers<[1], [0], [0], [1], [0, 0, 1, 1], [], []>} : vector<8x300xbf16>, vector<300x128xbf16>, vector<8x128xf32> -> vector<8x128xf32>
    %104 = arith.addf %88, %103 : vector<8x128xf32>
    %105 = tpu.iota {dimensions = array<i32: 1>} : vector<8x128xi32>
    %c8_i32 = arith.constant 8 : i32
    %106 = vector.broadcast %c8_i32 : i32 to vector<8x128xi32>
    %107 = arith.cmpi slt, %105, %106 : vector<8x128xi32>
    %c8_i32_57 = arith.constant 8 : i32
    %108 = vector.broadcast %c8_i32_57 : i32 to vector<8x128xi32>
    %109 = arith.cmpi sge, %105, %108 : vector<8x128xi32>
    %c40_i32 = arith.constant 40 : i32
    %110 = vector.broadcast %c40_i32 : i32 to vector<8x128xi32>
    %111 = arith.cmpi slt, %105, %110 : vector<8x128xi32>
    %112 = arith.andi %109, %111 : vector<8x128xi1>
    %c40_i32_58 = arith.constant 40 : i32
    %113 = vector.broadcast %c40_i32_58 : i32 to vector<8x128xi32>
    %114 = arith.cmpi sge, %105, %113 : vector<8x128xi32>
    %c72_i32 = arith.constant 72 : i32
    %115 = vector.broadcast %c72_i32 : i32 to vector<8x128xi32>
    %116 = arith.cmpi slt, %105, %115 : vector<8x128xi32>
    %117 = arith.andi %114, %116 : vector<8x128xi1>
    %118 = math.tanh %104 : vector<8x128xf32>
    %cst_59 = arith.constant 0.000000e+00 : f32
    %119 = vector.broadcast %cst_59 : f32 to vector<8x128xf32>
    %120 = arith.select %112, %104, %119 : vector<8x128xi1>, vector<8x128xf32>
    %121 = arith.mulf %120, %120 : vector<8x128xf32>
    %cst_60 = arith.constant dense<0.000000e+00> : vector<8xf32>
    %122 = vector.multi_reduction <add>, %121, %cst_60 [1] : vector<8x128xf32> to vector<8xf32>
    %123 = vector.shape_cast %122 : vector<8xf32> to vector<8x1xf32>
    %cst_61 = arith.constant 1.000000e-24 : f32
    %124 = vector.broadcast %cst_61 : f32 to vector<8x1xf32>
    %125 = arith.maximumf %123, %124 : vector<8x1xf32>
    %126 = math.rsqrt %125 : vector<8x1xf32>
    %127 = vector.broadcast %126 : vector<8x1xf32> to vector<8x128xf32>
    %128 = arith.mulf %120, %127 : vector<8x128xf32>
    %cst_62 = arith.constant 1.000000e+00 : f32
    %129 = vector.broadcast %cst_62 : f32 to vector<8x128xf32>
    %130 = arith.mulf %129, %118 : vector<8x128xf32>
    %cst_63 = arith.constant 0.000000e+00 : f32
    %131 = vector.broadcast %cst_63 : f32 to vector<8x128xf32>
    %132 = arith.select %117, %118, %131 : vector<8x128xi1>, vector<8x128xf32>
    %133 = arith.select %112, %128, %132 : vector<8x128xi1>, vector<8x128xf32>
    %134 = arith.select %107, %130, %133 : vector<8x128xi1>, vector<8x128xf32>
    %c0_64 = arith.constant 0 : index
    %c0_65 = arith.constant 0 : index
    %135 = vector.load %arg10[%c0_64, %c0_65] : memref<8x128xf32, #tpu.memory_space<vmem>>, vector<8x128xf32>
    tpu.vector_store %arg10[%c0_64, %c0_65], %134 {strides = array<i32>} : memref<8x128xf32, #tpu.memory_space<vmem>>, vector<8x128xf32>,
    return
  }
}

</mosaic_0001>

<llo_original>
// kernel: tpu_custom_call.1
$region0: #{tpu_custom_call.1}
  #allocation0 [shape = 'u32[]', space=smem, size = 0x4, offset = 0x4, fixed_abs, tag = 'smem constant byte address 0x4 - core index']
  #allocation1 [shape = 'u32[144,128]{1,0:T(1,128)}', space=vmem, size = 0x12000, scoped, tag = 'internal scratch']
  %s0 = inlined_call_operand.hbm [shape: f32[8,64], index: 0, kind: input, shape index: {}]
  %s1 = inlined_call_operand.hbm [shape: f32[8,32], index: 1, kind: input, shape index: {}]
  %s2 = inlined_call_operand.hbm [shape: bf16[64,256], index: 2, kind: input, shape index: {}]
  %s3 = inlined_call_operand.vmem [shape: f32[1,256], index: 3, kind: input, shape index: {}]
  %s4 = inlined_call_operand.hbm [shape: bf16[288,1200], index: 4, kind: input, shape index: {}]
  %s5 = inlined_call_operand.vmem [shape: f32[1,1200], index: 5, kind: input, shape index: {}]
  %s6 = inlined_call_operand.hbm [shape: bf16[3,400,300], index: 6, kind: input, shape index: {}]
  %s7 = inlined_call_operand.vmem [shape: f32[3,1,300], index: 7, kind: input, shape index: {}]
  %s8 = inlined_call_operand.hbm [shape: bf16[3,300,128], index: 8, kind: input, shape index: {}]
  %s9 = inlined_call_operand.vmem [shape: f32[1,128], index: 9, kind: input, shape index: {}]
  %s10 = inlined_call_operand.hbm [shape: f32[8,128], index: 10, kind: output, shape index: {}]
  %s11 = sld [smem:[#allocation0]]
  $region74: #{tpu_custom_call.1} parent=0
    _
  %s13 = ssub.s32 1, %s11
  %s14 = scalar_select 0, %s13, %s11
  $region1: #{tpu_custom_call.1} parent=0
    #allocation2 [shape = 'u8[4096]{0}', space=vmem, size = 0x1000, scoped, tag = 'input window, operand 0, single buffered']
    #allocation3 [shape = 's32[1]{0}', space=sflag, size = 0x4, scoped, tag = 'scoped memory for tpu_custom_call.1']
    #allocation4 [shape = 's32[1]{0}', space=sflag, size = 0x4, scoped, tag = 'scoped memory for tpu_custom_call.1']
    #allocation5 [shape = 'u8[4096]{0}', space=vmem, size = 0x1000, scoped, tag = 'input window, operand 1, single buffered']
    #allocation6 [shape = 's32[1]{0}', space=sflag, size = 0x4, scoped, tag = 'scoped memory for tpu_custom_call.1']
    #allocation7 [shape = 'u8[32768]{0}', space=vmem, size = 0x8000, scoped, tag = 'input window, operand 2, single buffered']
    #allocation8 [shape = 'u8[737280]{0}', space=vmem, size = 0xb4000, scoped, tag = 'input window, operand 4, single buffered']
    #allocation9 [shape = 's32[1]{0}', space=sflag, size = 0x4, scoped, tag = 'scoped memory for tpu_custom_call.1']
    #allocation10 [shape = 'u8[921600]{0}', space=vmem, size = 0xe1000, scoped, tag = 'input window, operand 6, single buffered']
    #allocation11 [shape = 'u8[233472]{0}', space=vmem, size = 0x39000, scoped, tag = 'input window, operand 8, single buffered']
    #allocation12 [shape = 's32[1]{0}', space=sflag, size = 0x4, scoped, tag = 'scoped memory for tpu_custom_call.1']
    #allocation13 [shape = 'u8[4096]{0}', space=vmem, size = 0x1000, scoped, tag = 'output window, operand 0, single buffered']
    %15 = vsyncpa [#allocation3], 0
    %16 = vsyncpa [#allocation6], 0
    %17 = vsyncpa [#allocation9], 0
    %18 = vsyncpa [#allocation12], 0
    %19 = vsyncpa [#allocation4], 0
    // Predicated region
    $region2: #{tpu_custom_call.1} parent=1 // pred_check
      _
    $region3: #{tpu_custom_call.1} parent=1 // pred_check_branch
      %21 = sbr.rel (0) target = $region5
    $region4: #{tpu_custom_call.1} parent=1 // pred_region
      %s23 = ssub.s32 128, 128
      %24 = vsyncadd [#allocation3], %s23
      %s26 = sshll.u32 [#allocation2], 4
      %s27 = int_to_ptr.vmem [resolvable:$true] %s26
      %29 = dma.hbm_to_vmem [thread:$0]  %s0, 128, %s27, [#allocation3]
    $region5: #{tpu_custom_call.1} parent=1 // pred_fallthru
      _
    // Predicated region
    $region6: #{tpu_custom_call.1} parent=1 // pred_check
      _
    $region7: #{tpu_custom_call.1} parent=1 // pred_check_branch
      %31 = sbr.rel (0) target = $region9
    $region8: #{tpu_custom_call.1} parent=1 // pred_region
      %s33 = ssub.s32 128, 128
      %34 = vsyncadd [#allocation6], %s33
      %s36 = sshll.u32 [#allocation5], 4
      %s37 = int_to_ptr.vmem [resolvable:$true] %s36
      %39 = dma.hbm_to_vmem [thread:$0]  %s1, 128, %s37, [#allocation6]
    $region9: #{tpu_custom_call.1} parent=1 // pred_fallthru
      _
    // Predicated region
    $region10: #{tpu_custom_call.1} parent=1 // pred_check
      _
    $region11: #{tpu_custom_call.1} parent=1 // pred_check_branch
      %41 = sbr.rel (0) target = $region13
    $region12: #{tpu_custom_call.1} parent=1 // pred_region
      %s43 = ssub.s32 1024, 1024
      %44 = vsyncadd [#allocation6], %s43
      %s45 = sshll.u32 [#allocation7], 4
      %s46 = int_to_ptr.vmem [resolvable:$true] %s45
      %51 = dma.hbm_to_vmem [thread:$0]  %s2, 1024, %s46, [#allocation6], 128, 128, 8
    $region13: #{tpu_custom_call.1} parent=1 // pred_fallthru
      _
    // Predicated region
    $region14: #{tpu_custom_call.1} parent=1 // pred_check
      _
    $region15: #{tpu_custom_call.1} parent=1 // pred_check_branch
      %53 = sbr.rel (0) target = $region17
    $region16: #{tpu_custom_call.1} parent=1 // pred_region
      _
    $region17: #{tpu_custom_call.1} parent=1 // pred_fallthru
      _
    // Predicated region
    $region18: #{tpu_custom_call.1} parent=1 // pred_check
      _
    $region19: #{tpu_custom_call.1} parent=1 // pred_check_branch
      %55 = sbr.rel (0) target = $region21
    $region20: #{tpu_custom_call.1} parent=1 // pred_region
      %s57 = ssub.s32 23040, 23040
      %58 = vsyncadd [#allocation9], %s57
      %s59 = sshll.u32 [#allocation8], 4
      %s60 = int_to_ptr.vmem [resolvable:$true] %s59
      %65 = dma.hbm_to_vmem [thread:$0]  %s4, 23040, %s60, [#allocation9], 640, 640, 40
    $region21: #{tpu_custom_call.1} parent=1 // pred_fallthru
      _
    // Predicated region
    $region22: #{tpu_custom_call.1} parent=1 // pred_check
      _
    $region23: #{tpu_custom_call.1} parent=1 // pred_check_branch
      %67 = sbr.rel (0) target = $region25
    $region24: #{tpu_custom_call.1} parent=1 // pred_region
      _
    $region25: #{tpu_custom_call.1} parent=1 // pred_fallthru
      _
    // Predicated region
    $region26: #{tpu_custom_call.1} parent=1 // pred_check
      _
    $region27: #{tpu_custom_call.1} parent=1 // pred_check_branch
      %69 = sbr.rel (0) target = $region29
    $region28: #{tpu_custom_call.1} parent=1 // pred_region
      %s71 = ssub.s32 28800, 28800
      %72 = vsyncadd [#allocation9], %s71
      %s73 = sshll.u32 [#allocation10], 4
      %s74 = int_to_ptr.vmem [resolvable:$true] %s73
      %79 = dma.hbm_to_vmem [thread:$0]  %s6, 28800, %s74, [#allocation9], 192, 192, 12
    $region29: #{tpu_custom_call.1} parent=1 // pred_fallthru
      _
    // Predicated region
    $region30: #{tpu_custom_call.1} parent=1 // pred_check
      _
    $region31: #{tpu_custom_call.1} parent=1 // pred_check_branch
      %81 = sbr.rel (0) target = $region33
    $region32: #{tpu_custom_call.1} parent=1 // pred_region
      _
    $region33: #{tpu_custom_call.1} parent=1 // pred_fallthru
      _
    // Predicated region
    $region34: #{tpu_custom_call.1} parent=1 // pred_check
      _
    $region35: #{tpu_custom_call.1} parent=1 // pred_check_branch
      %83 = sbr.rel (0) target = $region37
    $region36: #{tpu_custom_call.1} parent=1 // pred_region
      %s85 = ssub.s32 7296, 7296
      %86 = vsyncadd [#allocation12], %s85
      %s87 = sshll.u32 [#allocation11], 4
      %s88 = int_to_ptr.vmem [resolvable:$true] %s87
      %93 = dma.hbm_to_vmem [thread:$0]  %s8, 7296, %s88, [#allocation12], 64, 64, 4
    $region37: #{tpu_custom_call.1} parent=1 // pred_fallthru
      _
    // Predicated region
    $region38: #{tpu_custom_call.1} parent=1 // pred_check
      _
    $region39: #{tpu_custom_call.1} parent=1 // pred_check_branch
      %95 = sbr.rel (0) target = $region41
    $region40: #{tpu_custom_call.1} parent=1 // pred_region
      _
    $region41: #{tpu_custom_call.1} parent=1 // pred_fallthru
      _
    // Predicated region
    $region42: #{tpu_custom_call.1} parent=1 // pred_check
      _
    $region43: #{tpu_custom_call.1} parent=1 // pred_check_branch
      %97 = sbr.rel (0) target = $region45
    $region44: #{tpu_custom_call.1} parent=1 // pred_region
      %98 = dma.done [#allocation3], 128
    $region45: #{tpu_custom_call.1} parent=1 // pred_fallthru
      _
    // Predicated region
    $region46: #{tpu_custom_call.1} parent=1 // pred_check
      _
    $region47: #{tpu_custom_call.1} parent=1 // pred_check_branch
      %100 = sbr.rel (0) target = $region49
    $region48: #{tpu_custom_call.1} parent=1 // pred_region
      %101 = dma.done [#allocation6], 128
    $region49: #{tpu_custom_call.1} parent=1 // pred_fallthru
      _
    // Predicated region
    $region50: #{tpu_custom_call.1} parent=1 // pred_check
      _
    $region51: #{tpu_custom_call.1} parent=1 // pred_check_branch
      %103 = sbr.rel (0) target = $region53
    $region52: #{tpu_custom_call.1} parent=1 // pred_region
      %104 = dma.done [#allocation6], 1024
    $region53: #{tpu_custom_call.1} parent=1 // pred_fallthru
      _
    // Predicated region
    $region54: #{tpu_custom_call.1} parent=1 // pred_check
      _
    $region55: #{tpu_custom_call.1} parent=1 // pred_check_branch
      %106 = sbr.rel (0) target = $region57
    $region56: #{tpu_custom_call.1} parent=1 // pred_region
      %107 = dma.done [#allocation9], 23040
    $region57: #{tpu_custom_call.1} parent=1 // pred_fallthru
      _
    // Predicated region
    $region58: #{tpu_custom_call.1} parent=1 // pred_check
      _
    $region59: #{tpu_custom_call.1} parent=1 // pred_check_branch
      %109 = sbr.rel (0) target = $region61
    $region60: #{tpu_custom_call.1} parent=1 // pred_region
      %110 = dma.done [#allocation9], 28800
    $region61: #{tpu_custom_call.1} parent=1 // pred_fallthru
      _
    // Predicated region
    $region62: #{tpu_custom_call.1} parent=1 // pred_check
      _
    $region63: #{tpu_custom_call.1} parent=1 // pred_check_branch
      %112 = sbr.rel (0) target = $region65
    $region64: #{tpu_custom_call.1} parent=1 // pred_region
      %113 = dma.done [#allocation12], 7296
    $region65: #{tpu_custom_call.1} parent=1 // pred_fallthru
      _
    %v115 = vld [vmem:[#allocation2] sm:$0xff]
    %v116 = vld [vmem:[#allocation5] sm:$0xff]
    %v117 = vld [vmem:[#allocation7] sm:$0xff]
    %v118 = vld [vmem:[#allocation7 + $0x8] sm:$0xff]
    %v119 = vld [vmem:[#allocation7 + $0x10] sm:$0xff]
    %v120 = vld [vmem:[#allocation7 + $0x18] sm:$0xff]
    %v121 = vld [vmem:[#allocation7 + $0x20] sm:$0xff]
    %v122 = vld [vmem:[#allocation7 + $0x28] sm:$0xff]
    %v123 = vld [vmem:[#allocation7 + $0x30] sm:$0xff]
    %v124 = vld [vmem:[#allocation7 + $0x38] sm:$0xff]
    %v125 = vpack.c.bf16 %v115, %v115
    %v126 = vld [vmem:[%s3] sm:$0x3]
    %v128 = vlaneseq
    %v129 = vshrl.u32 %v128, 7
    %v130 = vsub.s32 0, %v129
    %v131 = vrot.slane %v126, %v130
    %v132 = vlaneseq
    %v133 = vshrl.u32 %v132, 7
    %v134 = vsub.s32 1, %v133
    %v135 = vrot.slane %v126, %v134
    %v146 = vunpack.c.l.b16 %v117
    %v147 = vunpack.c.h.b16 %v117
    %v148 = vunpack.c.l.b16 %v118
    %v149 = vunpack.c.h.b16 %v118
    %v150 = vunpack.c.l.b16 %v119
    %v151 = vunpack.c.h.b16 %v119
    %v152 = vunpack.c.l.b16 %v120
    %v153 = vunpack.c.h.b16 %v120
    %v154 = vunpack.c.l.b16 %v121
    %v155 = vunpack.c.h.b16 %v121
    %v156 = vunpack.c.l.b16 %v122
    %v157 = vunpack.c.h.b16 %v122
    %v158 = vunpack.c.l.b16 %v123
    %v159 = vunpack.c.h.b16 %v123
    %v160 = vunpack.c.l.b16 %v124
    %v161 = vunpack.c.h.b16 %v124
    %v162 = vpack.c.b16 %v148, %v146
    %v163 = vpack.c.b16 %v149, %v147
    %v164 = vpack.c.b16 %v152, %v150
    %v165 = vpack.c.b16 %v153, %v151
    %v166 = vpack.c.b16 %v156, %v154
    %v167 = vpack.c.b16 %v157, %v155
    %v168 = vpack.c.b16 %v160, %v158
    %v169 = vpack.c.b16 %v161, %v159
    %vm178 = vcmask 523264
    %v180 = vsel %vm178, %v125, 0
    %182 = vmatprep.subr.bf16.mxu0 %v163
    %183 = vmatpush1.bf16.msra.mxu0 %v162
    %184 = vmatprep.subr.bf16.mxu0 %v165
    %185 = vmatpush1.bf16.msra.mxu0 %v164
    %186 = vmatprep.subr.bf16.mxu0 %v167
    %187 = vmatpush1.bf16.msra.mxu0 %v166
    %188 = vmatprep.subr.bf16.mxu0 %v169
    %189 = vmatpush1.bf16.msra.mxu0 %v168
    %190 = vmatprep.subr.bf16.mxu0 0
    %191 = vmatpush1.bf16.msra.mxu0 0
    %192 = vmatprep.subr.bf16.mxu0 0
    %193 = vmatpush1.bf16.msra.mxu0 0
    %194 = vmatprep.subr.bf16.mxu0 0
    %195 = vmatpush1.bf16.msra.mxu0 0
    %196 = vmatprep.subr.bf16.mxu0 0
    %197 = vmatpush1.bf16.msra.mxu0 0
    %198 = vmatprep.subr.bf16.mxu0 0
    %199 = vmatpush1.bf16.msra.mxu0 0
    %200 = vmatprep.subr.bf16.mxu0 0
    %201 = vmatpush1.bf16.msra.mxu0 0
    %202 = vmatprep.subr.bf16.mxu0 0
    %203 = vmatpush1.bf16.msra.mxu0 0
    %204 = vmatprep.subr.bf16.mxu0 0
    %205 = vmatpush1.bf16.msra.mxu0 0
    %206 = vmatprep.subr.bf16.mxu0 0
    %207 = vmatpush1.bf16.msra.mxu0 0
    %208 = vmatprep.subr.bf16.mxu0 0
    %209 = vmatpush1.bf16.msra.mxu0 0
    %210 = vmatprep.subr.bf16.mxu0 0
    %211 = vmatpush1.bf16.msra.mxu0 0
    %212 = vmatprep.subr.bf16.mxu0 0
    %213 = vmatpush1.bf16.msra.mxu0 0
    %214 = vmatprep.mubr.bf16.mxu0 0
    %215 = vmatmul.mubr.bf16.gmra.mrb[0].mxu0 %v180
    %v216 = vpop.f32.mrb[0].mxu0
    %v217 = vadd.f32 %v131, %v216
    %v218 = vpop.f32.mrb[0].mxu0
    %v219 = vadd.f32 %v135, %v218
    %v220 = vpop.f32.mrb[0].mxu0
    %v221 = vpop.f32.mrb[0].mxu0
    %222 = vdwg.mxu0
    %v223 = vmul.f32 %v217, %v217
    %v224 = vsel %vm178, %v223, 0.0
    %225 = vadd.xlane.f32.xlu0 %v224
    %v226 = vpop.xlane.xlu0 %225
    %v227 = vmax.f32 %v226, 1e-24
    %v228 = vrsqrt.pop %v227
    %v229 = vmul.f32 %v217, %v228
    %231 = vrot.lane.b32.xlu0 %v223, 64
    %v232 = vpop.permute.xlu0 %231
    %v234 = vsel %vm178, %v232, 0.0
    %235 = vadd.xlane.f32.xlu0 %v234
    %v236 = vpop.xlane.xlu0 %235
    %v237 = vmax.f32 %v236, 1e-24
    %v238 = vrsqrt.pop %v237
    %v239 = vmul.f32 %v217, %v238
    %v240 = vmul.f32 %v219, %v219
    %v241 = vsel %vm178, %v240, 0.0
    %242 = vadd.xlane.f32.xlu0 %v241
    %v243 = vpop.xlane.xlu0 %242
    %v244 = vmax.f32 %v243, 1e-24
    %v245 = vrsqrt.pop %v244
    %v246 = vmul.f32 %v219, %v245
    %248 = vrot.lane.b32.xlu0 %v240, 64
    %v249 = vpop.permute.xlu0 %248
    %v251 = vsel %vm178, %v249, 0.0
    %252 = vadd.xlane.f32.xlu0 %v251
    %v253 = vpop.xlane.xlu0 %252
    %v254 = vmax.f32 %v253, 1e-24
    %v255 = vrsqrt.pop %v254
    %v256 = vmul.f32 %v219, %v255
    %v257 = vsel %vm178, %v229, %v239
    %v258 = vsel %vm178, %v246, %v256
    %v259 = vtanh.pop %v257
    %v260 = vtanh.pop %v258
    %v261 = vtanh.pop %v116
    %v262 = vld [vmem:[#allocation8] sm:$0xff]
    %v263 = vld [vmem:[#allocation8 + $0x8] sm:$0xff]
    %v264 = vld [vmem:[#allocation8 + $0x10] sm:$0xff]
    %v265 = vld [vmem:[#allocation8 + $0x18] sm:$0xff]
    %v266 = vld [vmem:[#allocation8 + $0x20] sm:$0xff]
    %v267 = vld [vmem:[#allocation8 + $0x28] sm:$0xff]
    %v268 = vld [vmem:[#allocation8 + $0x30] sm:$0xff]
    %v269 = vld [vmem:[#allocation8 + $0x38] sm:$0xff]
    %v270 = vld [vmem:[#allocation8 + $0x40] sm:$0xff]
    %v271 = vld [vmem:[#allocation8 + $0x48] sm:$0xff]
    %v272 = vld [vmem:[#allocation8 + $0x50] sm:$0xff]
    %v273 = vld [vmem:[#allocation8 + $0x58] sm:$0xff]
    %v274 = vld [vmem:[#allocation8 + $0x60] sm:$0xff]
    %v275 = vld [vmem:[#allocation8 + $0x68] sm:$0xff]
    %v276 = vld [vmem:[#allocation8 + $0x70] sm:$0xff]
    %v277 = vld [vmem:[#allocation8 + $0x78] sm:$0xff]
    %v278 = vld [vmem:[#allocation8 + $0x80] sm:$0xff]
    %v279 = vld [vmem:[#allocation8 + $0x88] sm:$0xff]
    %v280 = vld [vmem:[#allocation8 + $0x90] sm:$0xff]
    %v281 = vld [vmem:[#allocation8 + $0x98] sm:$0xff]
    %v282 = vld [vmem:[#allocation8 + $0xa0] sm:$0xff]
    %v283 = vld [vmem:[#allocation8 + $0xa8] sm:$0xff]
    %v284 = vld [vmem:[#allocation8 + $0xb0] sm:$0xff]
    %v285 = vld [vmem:[#allocation8 + $0xb8] sm:$0xff]
    %v286 = vld [vmem:[#allocation8 + $0xc0] sm:$0xff]
    %v287 = vld [vmem:[#allocation8 + $0xc8] sm:$0xff]
    %v288 = vld [vmem:[#allocation8 + $0xd0] sm:$0xff]
    %v289 = vld [vmem:[#allocation8 + $0xd8] sm:$0xff]
    %v290 = vld [vmem:[#allocation8 + $0xe0] sm:$0xff]
    %v291 = vld [vmem:[#allocation8 + $0xe8] sm:$0xff]
    %v292 = vld [vmem:[#allocation8 + $0xf0] sm:$0xff]
    %v293 = vld [vmem:[#allocation8 + $0xf8] sm:$0xff]
    %v294 = vld [vmem:[#allocation8 + $0x100] sm:$0xff]
    %v295 = vld [vmem:[#allocation8 + $0x108] sm:$0xff]
    %v296 = vld [vmem:[#allocation8 + $0x110] sm:$0xff]
    %v297 = vld [vmem:[#allocation8 + $0x118] sm:$0xff]
    %v298 = vld [vmem:[#allocation8 + $0x120] sm:$0xff]
    %v299 = vld [vmem:[#allocation8 + $0x128] sm:$0xff]
    %v300 = vld [vmem:[#allocation8 + $0x130] sm:$0xff]
    %v301 = vld [vmem:[#allocation8 + $0x138] sm:$0xff]
    %v302 = vld [vmem:[#allocation8 + $0x140] sm:$0xff]
    %v303 = vld [vmem:[#allocation8 + $0x148] sm:$0xff]
    %v304 = vld [vmem:[#allocation8 + $0x150] sm:$0xff]
    %v305 = vld [vmem:[#allocation8 + $0x158] sm:$0xff]
    %v306 = vld [vmem:[#allocation8 + $0x160] sm:$0xff]
    %v307 = vld [vmem:[#allocation8 + $0x168] sm:$0xff]
    %v308 = vld [vmem:[#allocation8 + $0x170] sm:$0xff]
    %v309 = vld [vmem:[#allocation8 + $0x178] sm:$0xff]
    %v310 = vld [vmem:[#allocation8 + $0x180] sm:$0xff]
    %v311 = vld [vmem:[#allocation8 + $0x188] sm:$0xff]
    %v312 = vld [vmem:[#allocation8 + $0x190] sm:$0xff]
    %v313 = vld [vmem:[#allocation8 + $0x198] sm:$0xff]
    %v314 = vld [vmem:[#allocation8 + $0x1a0] sm:$0xff]
    %v315 = vld [vmem:[#allocation8 + $0x1a8] sm:$0xff]
    %v316 = vld [vmem:[#allocation8 + $0x1b0] sm:$0xff]
    %v317 = vld [vmem:[#allocation8 + $0x1b8] sm:$0xff]
    %v318 = vld [vmem:[#allocation8 + $0x1c0] sm:$0xff]
    %v319 = vld [vmem:[#allocation8 + $0x1c8] sm:$0xff]
    %v320 = vld [vmem:[#allocation8 + $0x1d0] sm:$0xff]
    %v321 = vld [vmem:[#allocation8 + $0x1d8] sm:$0xff]
    %v322 = vld [vmem:[#allocation8 + $0x1e0] sm:$0xff]
    %v323 = vld [vmem:[#allocation8 + $0x1e8] sm:$0xff]
    %v324 = vld [vmem:[#allocation8 + $0x1f0] sm:$0xff]
    %v325 = vld [vmem:[#allocation8 + $0x1f8] sm:$0xff]
    %v326 = vld [vmem:[#allocation8 + $0x200] sm:$0xff]
    %v327 = vld [vmem:[#allocation8 + $0x208] sm:$0xff]
    %v328 = vld [vmem:[#allocation8 + $0x210] sm:$0xff]
    %v329 = vld [vmem:[#allocation8 + $0x218] sm:$0xff]
    %v330 = vld [vmem:[#allocation8 + $0x220] sm:$0xff]
    %v331 = vld [vmem:[#allocation8 + $0x228] sm:$0xff]
    %v332 = vld [vmem:[#allocation8 + $0x230] sm:$0xff]
    %v333 = vld [vmem:[#allocation8 + $0x238] sm:$0xff]
    %v334 = vld [vmem:[#allocation8 + $0x240] sm:$0xff]
    %v335 = vld [vmem:[#allocation8 + $0x248] sm:$0xff]
    %v336 = vld [vmem:[#allocation8 + $0x250] sm:$0xff]
    %v337 = vld [vmem:[#allocation8 + $0x258] sm:$0xff]
    %v338 = vld [vmem:[#allocation8 + $0x260] sm:$0xff]
    %v339 = vld [vmem:[#allocation8 + $0x268] sm:$0xff]
    %v340 = vld [vmem:[#allocation8 + $0x270] sm:$0xff]
    %v341 = vld [vmem:[#allocation8 + $0x278] sm:$0xff]
    %v342 = vld [vmem:[#allocation8 + $0x280] sm:$0xff]
    %v343 = vld [vmem:[#allocation8 + $0x288] sm:$0xff]
    %v344 = vld [vmem:[#allocation8 + $0x290] sm:$0xff]
    %v345 = vld [vmem:[#allocation8 + $0x298] sm:$0xff]
    %v346 = vld [vmem:[#allocation8 + $0x2a0] sm:$0xff]
    %v347 = vld [vmem:[#allocation8 + $0x2a8] sm:$0xff]
    %v348 = vld [vmem:[#allocation8 + $0x2b0] sm:$0xff]
    %v349 = vld [vmem:[#allocation8 + $0x2b8] sm:$0xff]
    %v350 = vld [vmem:[#allocation8 + $0x2c0] sm:$0xff]
    %v351 = vld [vmem:[#allocation8 + $0x2c8] sm:$0xff]
    %v352 = vld [vmem:[#allocation8 + $0x2d0] sm:$0xff]
    %v353 = vld [vmem:[#allocation8 + $0x2d8] sm:$0xff]
    %v354 = vld [vmem:[#allocation8 + $0x2e0] sm:$0xff]
    %v355 = vld [vmem:[#allocation8 + $0x2e8] sm:$0xff]
    %v356 = vld [vmem:[#allocation8 + $0x2f0] sm:$0xff]
    %v357 = vld [vmem:[#allocation8 + $0x2f8] sm:$0xff]
    %v358 = vld [vmem:[#allocation8 + $0x300] sm:$0xff]
    %v359 = vld [vmem:[#allocation8 + $0x308] sm:$0xff]
    %v360 = vld [vmem:[#allocation8 + $0x310] sm:$0xff]
    %v361 = vld [vmem:[#allocation8 + $0x318] sm:$0xff]
    %v362 = vld [vmem:[#allocation8 + $0x320] sm:$0xff]
    %v363 = vld [vmem:[#allocation8 + $0x328] sm:$0xff]
    %v364 = vld [vmem:[#allocation8 + $0x330] sm:$0xff]
    %v365 = vld [vmem:[#allocation8 + $0x338] sm:$0xff]
    %v366 = vld [vmem:[#allocation8 + $0x340] sm:$0xff]
    %v367 = vld [vmem:[#allocation8 + $0x348] sm:$0xff]
    %v368 = vld [vmem:[#allocation8 + $0x350] sm:$0xff]
    %v369 = vld [vmem:[#allocation8 + $0x358] sm:$0xff]
    %v370 = vld [vmem:[#allocation8 + $0x360] sm:$0xff]
    %v371 = vld [vmem:[#allocation8 + $0x368] sm:$0xff]
    %v372 = vld [vmem:[#allocation8 + $0x370] sm:$0xff]
    %v373 = vld [vmem:[#allocation8 + $0x378] sm:$0xff]
    %v374 = vld [vmem:[#allocation8 + $0x380] sm:$0xff]
    %v375 = vld [vmem:[#allocation8 + $0x388] sm:$0xff]
    %v376 = vld [vmem:[#allocation8 + $0x390] sm:$0xff]
    %v377 = vld [vmem:[#allocation8 + $0x398] sm:$0xff]
    %v378 = vld [vmem:[#allocation8 + $0x3a0] sm:$0xff]
    %v379 = vld [vmem:[#allocation8 + $0x3a8] sm:$0xff]
    %v380 = vld [vmem:[#allocation8 + $0x3b0] sm:$0xff]
    %v381 = vld [vmem:[#allocation8 + $0x3b8] sm:$0xff]
    %v382 = vld [vmem:[#allocation8 + $0x3c0] sm:$0xff]
    %v383 = vld [vmem:[#allocation8 + $0x3c8] sm:$0xff]
    %v384 = vld [vmem:[#allocation8 + $0x3d0] sm:$0xff]
    %v385 = vld [vmem:[#allocation8 + $0x3d8] sm:$0xff]
    %v386 = vld [vmem:[#allocation8 + $0x3e0] sm:$0xff]
    %v387 = vld [vmem:[#allocation8 + $0x3e8] sm:$0xff]
    %v388 = vld [vmem:[#allocation8 + $0x3f0] sm:$0xff]
    %v389 = vld [vmem:[#allocation8 + $0x3f8] sm:$0xff]
    %v390 = vld [vmem:[#allocation8 + $0x400] sm:$0xff]
    %v391 = vld [vmem:[#allocation8 + $0x408] sm:$0xff]
    %v392 = vld [vmem:[#allocation8 + $0x410] sm:$0xff]
    %v393 = vld [vmem:[#allocation8 + $0x418] sm:$0xff]
    %v394 = vld [vmem:[#allocation8 + $0x420] sm:$0xff]
    %v395 = vld [vmem:[#allocation8 + $0x428] sm:$0xff]
    %v396 = vld [vmem:[#allocation8 + $0x430] sm:$0xff]
    %v397 = vld [vmem:[#allocation8 + $0x438] sm:$0xff]
    %v398 = vld [vmem:[#allocation8 + $0x440] sm:$0xff]
    %v399 = vld [vmem:[#allocation8 + $0x448] sm:$0xff]
    %v400 = vld [vmem:[#allocation8 + $0x450] sm:$0xff]
    %v401 = vld [vmem:[#allocation8 + $0x458] sm:$0xff]
    %v402 = vld [vmem:[#allocation8 + $0x460] sm:$0xff]
    %v403 = vld [vmem:[#allocation8 + $0x468] sm:$0xff]
    %v404 = vld [vmem:[#allocation8 + $0x470] sm:$0xff]
    %v405 = vld [vmem:[#allocation8 + $0x478] sm:$0xff]
    %v406 = vld [vmem:[#allocation8 + $0x480] sm:$0xff]
    %v407 = vld [vmem:[#allocation8 + $0x488] sm:$0xff]
    %v408 = vld [vmem:[#allocation8 + $0x490] sm:$0xff]
    %v409 = vld [vmem:[#allocation8 + $0x498] sm:$0xff]
    %v410 = vld [vmem:[#allocation8 + $0x4a0] sm:$0xff]
    %v411 = vld [vmem:[#allocation8 + $0x4a8] sm:$0xff]
    %v412 = vld [vmem:[#allocation8 + $0x4b0] sm:$0xff]
    %v413 = vld [vmem:[#allocation8 + $0x4b8] sm:$0xff]
    %v414 = vld [vmem:[#allocation8 + $0x4c0] sm:$0xff]
    %v415 = vld [vmem:[#allocation8 + $0x4c8] sm:$0xff]
    %v416 = vld [vmem:[#allocation8 + $0x4d0] sm:$0xff]
    %v417 = vld [vmem:[#allocation8 + $0x4d8] sm:$0xff]
    %v418 = vld [vmem:[#allocation8 + $0x4e0] sm:$0xff]
    %v419 = vld [vmem:[#allocation8 + $0x4e8] sm:$0xff]
    %v420 = vld [vmem:[#allocation8 + $0x4f0] sm:$0xff]
    %v421 = vld [vmem:[#allocation8 + $0x4f8] sm:$0xff]
    %v422 = vld [vmem:[#allocation8 + $0x500] sm:$0xff]
    %v423 = vld [vmem:[#allocation8 + $0x508] sm:$0xff]
    %v424 = vld [vmem:[#allocation8 + $0x510] sm:$0xff]
    %v425 = vld [vmem:[#allocation8 + $0x518] sm:$0xff]
    %v426 = vld [vmem:[#allocation8 + $0x520] sm:$0xff]
    %v427 = vld [vmem:[#allocation8 + $0x528] sm:$0xff]
    %v428 = vld [vmem:[#allocation8 + $0x530] sm:$0xff]
    %v429 = vld [vmem:[#allocation8 + $0x538] sm:$0xff]
    %v430 = vld [vmem:[#allocation8 + $0x540] sm:$0xff]
    %v431 = vld [vmem:[#allocation8 + $0x548] sm:$0xff]
    %v432 = vld [vmem:[#allocation8 + $0x550] sm:$0xff]
    %v433 = vld [vmem:[#allocation8 + $0x558] sm:$0xff]
    %v434 = vld [vmem:[#allocation8 + $0x560] sm:$0xff]
    %v435 = vld [vmem:[#allocation8 + $0x568] sm:$0xff]
    %v436 = vld [vmem:[#allocation8 + $0x570] sm:$0xff]
    %v437 = vld [vmem:[#allocation8 + $0x578] sm:$0xff]
    %v438 = vld [vmem:[#allocation8 + $0x580] sm:$0xff]
    %v439 = vld [vmem:[#allocation8 + $0x588] sm:$0xff]
    %v440 = vld [vmem:[#allocation8 + $0x590] sm:$0xff]
    %v441 = vld [vmem:[#allocation8 + $0x598] sm:$0xff]
    %v442 = vpack.c.bf16 %v259, %v259
    %v443 = vpack.c.bf16 %v260, %v260
    %v444 = vpack.c.bf16 %v261, %v261
    %v445 = vld [vmem:[%s5] sm:$0xff]
    %v446 = vld [vmem:[%s5 + $0x8] sm:$0x3]
    %v449 = vlaneseq
    %v450 = vshrl.u32 %v449, 7
    %v451 = vsub.s32 0, %v450
    %v452 = vrot.slane %v445, %v451
    %v453 = vlaneseq
    %v454 = vshrl.u32 %v453, 7
    %v455 = vsub.s32 1, %v454
    %v456 = vrot.slane %v445, %v455
    %v457 = vlaneseq
    %v458 = vshrl.u32 %v457, 7
    %v459 = vsub.s32 2, %v458
    %v460 = vrot.slane %v445, %v459
    %v461 = vlaneseq
    %v462 = vshrl.u32 %v461, 7
    %v463 = vsub.s32 3, %v462
    %v464 = vrot.slane %v445, %v463
    %v465 = vlaneseq
    %v466 = vshrl.u32 %v465, 7
    %v467 = vsub.s32 4, %v466
    %v468 = vrot.slane %v445, %v467
    %v469 = vlaneseq
    %v470 = vshrl.u32 %v469, 7
    %v471 = vsub.s32 5, %v470
    %v472 = vrot.slane %v445, %v471
    %v473 = vlaneseq
    %v474 = vshrl.u32 %v473, 7
    %v475 = vsub.s32 6, %v474
    %v476 = vrot.slane %v445, %v475
    %v477 = vlaneseq
    %v478 = vshrl.u32 %v477, 7
    %v479 = vsub.s32 7, %v478
    %v480 = vrot.slane %v445, %v479
    %v481 = vlaneseq
    %v482 = vshrl.u32 %v481, 7
    %v483 = vsub.s32 0, %v482
    %v484 = vrot.slane %v446, %v483
    %v485 = vlaneseq
    %v486 = vshrl.u32 %v485, 7
    %v487 = vsub.s32 1, %v486
    %v488 = vrot.slane %v446, %v487
    %v679 = vunpack.c.l.b16 %v262
    %v680 = vunpack.c.h.b16 %v262
    %v681 = vunpack.c.l.b16 %v263
    %v682 = vunpack.c.h.b16 %v263
    %v683 = vunpack.c.l.b16 %v264
    %v684 = vunpack.c.h.b16 %v264
    %v685 = vunpack.c.l.b16 %v265
    %v686 = vunpack.c.h.b16 %v265
    %v687 = vunpack.c.l.b16 %v266
    %v688 = vunpack.c.h.b16 %v266
    %v689 = vunpack.c.l.b16 %v267
    %v690 = vunpack.c.h.b16 %v267
    %v691 = vunpack.c.l.b16 %v268
    %v692 = vunpack.c.h.b16 %v268
    %v693 = vunpack.c.l.b16 %v269
    %v694 = vunpack.c.h.b16 %v269
    %v695 = vunpack.c.l.b16 %v270
    %v696 = vunpack.c.h.b16 %v270
    %v697 = vunpack.c.l.b16 %v271
    %v698 = vunpack.c.h.b16 %v271
    %v699 = vunpack.c.l.b16 %v272
    %v700 = vunpack.c.h.b16 %v272
    %v701 = vunpack.c.l.b16 %v273
    %v702 = vunpack.c.h.b16 %v273
    %v703 = vunpack.c.l.b16 %v274
    %v704 = vunpack.c.h.b16 %v274
    %v705 = vunpack.c.l.b16 %v275
    %v706 = vunpack.c.h.b16 %v275
    %v707 = vunpack.c.l.b16 %v276
    %v708 = vunpack.c.h.b16 %v276
    %v709 = vunpack.c.l.b16 %v277
    %v710 = vunpack.c.h.b16 %v277
    %v711 = vunpack.c.l.b16 %v278
    %v712 = vunpack.c.h.b16 %v278
    %v713 = vunpack.c.l.b16 %v279
    %v714 = vunpack.c.h.b16 %v279
    %v715 = vunpack.c.l.b16 %v280
    %v716 = vunpack.c.h.b16 %v280
    %v717 = vunpack.c.l.b16 %v281
    %v718 = vunpack.c.h.b16 %v281
    %v719 = vunpack.c.l.b16 %v282
    %v720 = vunpack.c.h.b16 %v282
    %v721 = vunpack.c.l.b16 %v283
    %v722 = vunpack.c.h.b16 %v283
    %v723 = vunpack.c.l.b16 %v284
    %v724 = vunpack.c.h.b16 %v284
    %v725 = vunpack.c.l.b16 %v285
    %v726 = vunpack.c.h.b16 %v285
    %v727 = vunpack.c.l.b16 %v286
    %v728 = vunpack.c.h.b16 %v286
    %v729 = vunpack.c.l.b16 %v287
    %v730 = vunpack.c.h.b16 %v287
    %v731 = vunpack.c.l.b16 %v288
    %v732 = vunpack.c.h.b16 %v288
    %v733 = vunpack.c.l.b16 %v289
    %v734 = vunpack.c.h.b16 %v289
    %v735 = vunpack.c.l.b16 %v290
    %v736 = vunpack.c.h.b16 %v290
    %v737 = vunpack.c.l.b16 %v291
    %v738 = vunpack.c.h.b16 %v291
    %v739 = vunpack.c.l.b16 %v292
    %v740 = vunpack.c.h.b16 %v292
    %v741 = vunpack.c.l.b16 %v293
    %v742 = vunpack.c.h.b16 %v293
    %v743 = vunpack.c.l.b16 %v294
    %v744 = vunpack.c.h.b16 %v294
    %v745 = vunpack.c.l.b16 %v295
    %v746 = vunpack.c.h.b16 %v295
    %v747 = vunpack.c.l.b16 %v296
    %v748 = vunpack.c.h.b16 %v296
    %v749 = vunpack.c.l.b16 %v297
    %v750 = vunpack.c.h.b16 %v297
    %v751 = vunpack.c.l.b16 %v298
    %v752 = vunpack.c.h.b16 %v298
    %v753 = vunpack.c.l.b16 %v299
    %v754 = vunpack.c.h.b16 %v299
    %v755 = vunpack.c.l.b16 %v300
    %v756 = vunpack.c.h.b16 %v300
    %v757 = vunpack.c.l.b16 %v301
    %v758 = vunpack.c.h.b16 %v301
    %v759 = vunpack.c.l.b16 %v302
    %v760 = vunpack.c.h.b16 %v302
    %v761 = vunpack.c.l.b16 %v303
    %v762 = vunpack.c.h.b16 %v303
    %v763 = vunpack.c.l.b16 %v304
    %v764 = vunpack.c.h.b16 %v304
    %v765 = vunpack.c.l.b16 %v305
    %v766 = vunpack.c.h.b16 %v305
    %v767 = vunpack.c.l.b16 %v306
    %v768 = vunpack.c.h.b16 %v306
    %v769 = vunpack.c.l.b16 %v307
    %v770 = vunpack.c.h.b16 %v307
    %v771 = vunpack.c.l.b16 %v308
    %v772 = vunpack.c.h.b16 %v308
    %v773 = vunpack.c.l.b16 %v309
    %v774 = vunpack.c.h.b16 %v309
    %v775 = vunpack.c.l.b16 %v310
    %v776 = vunpack.c.h.b16 %v310
    %v777 = vunpack.c.l.b16 %v311
    %v778 = vunpack.c.h.b16 %v311
    %v779 = vunpack.c.l.b16 %v312
    %v780 = vunpack.c.h.b16 %v312
    %v781 = vunpack.c.l.b16 %v313
    %v782 = vunpack.c.h.b16 %v313
    %v783 = vunpack.c.l.b16 %v314
    %v784 = vunpack.c.h.b16 %v314
    %v785 = vunpack.c.l.b16 %v315
    %v786 = vunpack.c.h.b16 %v315
    %v787 = vunpack.c.l.b16 %v316
    %v788 = vunpack.c.h.b16 %v316
    %v789 = vunpack.c.l.b16 %v317
    %v790 = vunpack.c.h.b16 %v317
    %v791 = vunpack.c.l.b16 %v318
    %v792 = vunpack.c.h.b16 %v318
    %v793 = vunpack.c.l.b16 %v319
    %v794 = vunpack.c.h.b16 %v319
    %v795 = vunpack.c.l.b16 %v320
    %v796 = vunpack.c.h.b16 %v320
    %v797 = vunpack.c.l.b16 %v321
    %v798 = vunpack.c.h.b16 %v321
    %v799 = vunpack.c.l.b16 %v322
    %v800 = vunpack.c.h.b16 %v322
    %v801 = vunpack.c.l.b16 %v323
    %v802 = vunpack.c.h.b16 %v323
    %v803 = vunpack.c.l.b16 %v324
    %v804 = vunpack.c.h.b16 %v324
    %v805 = vunpack.c.l.b16 %v325
    %v806 = vunpack.c.h.b16 %v325
    %v807 = vunpack.c.l.b16 %v326
    %v808 = vunpack.c.h.b16 %v326
    %v809 = vunpack.c.l.b16 %v327
    %v810 = vunpack.c.h.b16 %v327
    %v811 = vunpack.c.l.b16 %v328
    %v812 = vunpack.c.h.b16 %v328
    %v813 = vunpack.c.l.b16 %v329
    %v814 = vunpack.c.h.b16 %v329
    %v815 = vunpack.c.l.b16 %v330
    %v816 = vunpack.c.h.b16 %v330
    %v817 = vunpack.c.l.b16 %v331
    %v818 = vunpack.c.h.b16 %v331
    %v819 = vunpack.c.l.b16 %v332
    %v820 = vunpack.c.h.b16 %v332
    %v821 = vunpack.c.l.b16 %v333
    %v822 = vunpack.c.h.b16 %v333
    %v823 = vunpack.c.l.b16 %v334
    %v824 = vunpack.c.h.b16 %v334
    %v825 = vunpack.c.l.b16 %v335
    %v826 = vunpack.c.h.b16 %v335
    %v827 = vunpack.c.l.b16 %v336
    %v828 = vunpack.c.h.b16 %v336
    %v829 = vunpack.c.l.b16 %v337
    %v830 = vunpack.c.h.b16 %v337
    %v831 = vunpack.c.l.b16 %v338
    %v832 = vunpack.c.h.b16 %v338
    %v833 = vunpack.c.l.b16 %v339
    %v834 = vunpack.c.h.b16 %v339
    %v835 = vunpack.c.l.b16 %v340
    %v836 = vunpack.c.h.b16 %v340
    %v837 = vunpack.c.l.b16 %v341
    %v838 = vunpack.c.h.b16 %v341
    %v839 = vunpack.c.l.b16 %v342
    %v840 = vunpack.c.h.b16 %v342
    %v841 = vunpack.c.l.b16 %v343
    %v842 = vunpack.c.h.b16 %v343
    %v843 = vunpack.c.l.b16 %v344
    %v844 = vunpack.c.h.b16 %v344
    %v845 = vunpack.c.l.b16 %v345
    %v846 = vunpack.c.h.b16 %v345
    %v847 = vunpack.c.l.b16 %v346
    %v848 = vunpack.c.h.b16 %v346
    %v849 = vunpack.c.l.b16 %v347
    %v850 = vunpack.c.h.b16 %v347
    %v851 = vunpack.c.l.b16 %v348
    %v852 = vunpack.c.h.b16 %v348
    %v853 = vunpack.c.l.b16 %v349
    %v854 = vunpack.c.h.b16 %v349
    %v855 = vunpack.c.l.b16 %v350
    %v856 = vunpack.c.h.b16 %v350
    %v857 = vunpack.c.l.b16 %v351
    %v858 = vunpack.c.h.b16 %v351
    %v859 = vunpack.c.l.b16 %v352
    %v860 = vunpack.c.h.b16 %v352
    %v861 = vunpack.c.l.b16 %v353
    %v862 = vunpack.c.h.b16 %v353
    %v863 = vunpack.c.l.b16 %v354
    %v864 = vunpack.c.h.b16 %v354
    %v865 = vunpack.c.l.b16 %v355
    %v866 = vunpack.c.h.b16 %v355
    %v867 = vunpack.c.l.b16 %v356
    %v868 = vunpack.c.h.b16 %v356
    %v869 = vunpack.c.l.b16 %v357
    %v870 = vunpack.c.h.b16 %v357
    %v871 = vunpack.c.l.b16 %v358
    %v872 = vunpack.c.h.b16 %v358
    %v873 = vunpack.c.l.b16 %v359
    %v874 = vunpack.c.h.b16 %v359
    %v875 = vunpack.c.l.b16 %v360
    %v876 = vunpack.c.h.b16 %v360
    %v877 = vunpack.c.l.b16 %v361
    %v878 = vunpack.c.h.b16 %v361
    %v879 = vunpack.c.l.b16 %v362
    %v880 = vunpack.c.h.b16 %v362
    %v881 = vunpack.c.l.b16 %v363
    %v882 = vunpack.c.h.b16 %v363
    %v883 = vunpack.c.l.b16 %v364
    %v884 = vunpack.c.h.b16 %v364
    %v885 = vunpack.c.l.b16 %v365
    %v886 = vunpack.c.h.b16 %v365
    %v887 = vunpack.c.l.b16 %v366
    %v888 = vunpack.c.h.b16 %v366
    %v889 = vunpack.c.l.b16 %v367
    %v890 = vunpack.c.h.b16 %v367
    %v891 = vunpack.c.l.b16 %v368
    %v892 = vunpack.c.h.b16 %v368
    %v893 = vunpack.c.l.b16 %v369
    %v894 = vunpack.c.h.b16 %v369
    %v895 = vunpack.c.l.b16 %v370
    %v896 = vunpack.c.h.b16 %v370
    %v897 = vunpack.c.l.b16 %v371
    %v898 = vunpack.c.h.b16 %v371
    %v899 = vunpack.c.l.b16 %v372
    %v900 = vunpack.c.h.b16 %v372
    %v901 = vunpack.c.l.b16 %v373
    %v902 = vunpack.c.h.b16 %v373
    %v903 = vunpack.c.l.b16 %v374
    %v904 = vunpack.c.h.b16 %v374
    %v905 = vunpack.c.l.b16 %v375
    %v906 = vunpack.c.h.b16 %v375
    %v907 = vunpack.c.l.b16 %v376
    %v908 = vunpack.c.h.b16 %v376
    %v909 = vunpack.c.l.b16 %v377
    %v910 = vunpack.c.h.b16 %v377
    %v911 = vunpack.c.l.b16 %v378
    %v912 = vunpack.c.h.b16 %v378
    %v913 = vunpack.c.l.b16 %v379
    %v914 = vunpack.c.h.b16 %v379
    %v915 = vunpack.c.l.b16 %v380
    %v916 = vunpack.c.h.b16 %v380
    %v917 = vunpack.c.l.b16 %v381
    %v918 = vunpack.c.h.b16 %v381
    %v919 = vunpack.c.l.b16 %v382
    %v920 = vunpack.c.h.b16 %v382
    %v921 = vunpack.c.l.b16 %v383
    %v922 = vunpack.c.h.b16 %v383
    %v923 = vunpack.c.l.b16 %v384
    %v924 = vunpack.c.h.b16 %v384
    %v925 = vunpack.c.l.b16 %v385
    %v926 = vunpack.c.h.b16 %v385
    %v927 = vunpack.c.l.b16 %v386
    %v928 = vunpack.c.h.b16 %v386
    %v929 = vunpack.c.l.b16 %v387
    %v930 = vunpack.c.h.b16 %v387
    %v931 = vunpack.c.l.b16 %v388
    %v932 = vunpack.c.h.b16 %v388
    %v933 = vunpack.c.l.b16 %v389
    %v934 = vunpack.c.h.b16 %v389
    %v935 = vunpack.c.l.b16 %v390
    %v936 = vunpack.c.h.b16 %v390
    %v937 = vunpack.c.l.b16 %v391
    %v938 = vunpack.c.h.b16 %v391
    %v939 = vunpack.c.l.b16 %v392
    %v940 = vunpack.c.h.b16 %v392
    %v941 = vunpack.c.l.b16 %v393
    %v942 = vunpack.c.h.b16 %v393
    %v943 = vunpack.c.l.b16 %v394
    %v944 = vunpack.c.h.b16 %v394
    %v945 = vunpack.c.l.b16 %v395
    %v946 = vunpack.c.h.b16 %v395
    %v947 = vunpack.c.l.b16 %v396
    %v948 = vunpack.c.h.b16 %v396
    %v949 = vunpack.c.l.b16 %v397
    %v950 = vunpack.c.h.b16 %v397
    %v951 = vunpack.c.l.b16 %v398
    %v952 = vunpack.c.h.b16 %v398
    %v953 = vunpack.c.l.b16 %v399
    %v954 = vunpack.c.h.b16 %v399
    %v955 = vunpack.c.l.b16 %v400
    %v956 = vunpack.c.h.b16 %v400
    %v957 = vunpack.c.l.b16 %v401
    %v958 = vunpack.c.h.b16 %v401
    %v959 = vunpack.c.l.b16 %v402
    %v960 = vunpack.c.h.b16 %v402
    %v961 = vunpack.c.l.b16 %v403
    %v962 = vunpack.c.h.b16 %v403
    %v963 = vunpack.c.l.b16 %v404
    %v964 = vunpack.c.h.b16 %v404
    %v965 = vunpack.c.l.b16 %v405
    %v966 = vunpack.c.h.b16 %v405
    %v967 = vunpack.c.l.b16 %v406
    %v968 = vunpack.c.h.b16 %v406
    %v969 = vunpack.c.l.b16 %v407
    %v970 = vunpack.c.h.b16 %v407
    %v971 = vunpack.c.l.b16 %v408
    %v972 = vunpack.c.h.b16 %v408
    %v973 = vunpack.c.l.b16 %v409
    %v974 = vunpack.c.h.b16 %v409
    %v975 = vunpack.c.l.b16 %v410
    %v976 = vunpack.c.h.b16 %v410
    %v977 = vunpack.c.l.b16 %v411
    %v978 = vunpack.c.h.b16 %v411
    %v979 = vunpack.c.l.b16 %v412
    %v980 = vunpack.c.h.b16 %v412
    %v981 = vunpack.c.l.b16 %v413
    %v982 = vunpack.c.h.b16 %v413
    %v983 = vunpack.c.l.b16 %v414
    %v984 = vunpack.c.h.b16 %v414
    %v985 = vunpack.c.l.b16 %v415
    %v986 = vunpack.c.h.b16 %v415
    %v987 = vunpack.c.l.b16 %v416
    %v988 = vunpack.c.h.b16 %v416
    %v989 = vunpack.c.l.b16 %v417
    %v990 = vunpack.c.h.b16 %v417
    %v991 = vunpack.c.l.b16 %v418
    %v992 = vunpack.c.h.b16 %v418
    %v993 = vunpack.c.l.b16 %v419
    %v994 = vunpack.c.h.b16 %v419
    %v995 = vunpack.c.l.b16 %v420
    %v996 = vunpack.c.h.b16 %v420
    %v997 = vunpack.c.l.b16 %v421
    %v998 = vunpack.c.h.b16 %v421
    %v999 = vunpack.c.l.b16 %v422
    %v1000 = vunpack.c.h.b16 %v422
    %v1001 = vunpack.c.l.b16 %v423
    %v1002 = vunpack.c.h.b16 %v423
    %v1003 = vunpack.c.l.b16 %v424
    %v1004 = vunpack.c.h.b16 %v424
    %v1005 = vunpack.c.l.b16 %v425
    %v1006 = vunpack.c.h.b16 %v425
    %v1007 = vunpack.c.l.b16 %v426
    %v1008 = vunpack.c.h.b16 %v426
    %v1009 = vunpack.c.l.b16 %v427
    %v1010 = vunpack.c.h.b16 %v427
    %v1011 = vunpack.c.l.b16 %v428
    %v1012 = vunpack.c.h.b16 %v428
    %v1013 = vunpack.c.l.b16 %v429
    %v1014 = vunpack.c.h.b16 %v429
    %v1015 = vunpack.c.l.b16 %v430
    %v1016 = vunpack.c.h.b16 %v430
    %v1017 = vunpack.c.l.b16 %v431
    %v1018 = vunpack.c.h.b16 %v431
    %v1019 = vunpack.c.l.b16 %v432
    %v1020 = vunpack.c.h.b16 %v432
    %v1021 = vunpack.c.l.b16 %v433
    %v1022 = vunpack.c.h.b16 %v433
    %v1023 = vunpack.c.l.b16 %v434
    %v1024 = vunpack.c.h.b16 %v434
    %v1025 = vunpack.c.l.b16 %v435
    %v1026 = vunpack.c.h.b16 %v435
    %v1027 = vunpack.c.l.b16 %v436
    %v1028 = vunpack.c.h.b16 %v436
    %v1029 = vunpack.c.l.b16 %v437
    %v1030 = vunpack.c.h.b16 %v437
    %v1031 = vunpack.c.l.b16 %v438
    %v1032 = vunpack.c.h.b16 %v438
    %v1033 = vunpack.c.l.b16 %v439
    %v1034 = vunpack.c.h.b16 %v439
    %v1035 = vunpack.c.l.b16 %v440
    %v1036 = vunpack.c.h.b16 %v440
    %v1037 = vunpack.c.l.b16 %v441
    %v1038 = vunpack.c.h.b16 %v441
    %v1039 = vpack.c.b16 %v689, %v679
    %v1040 = vpack.c.b16 %v690, %v680
    %v1041 = vpack.c.b16 %v691, %v681
    %v1042 = vpack.c.b16 %v692, %v682
    %v1043 = vpack.c.b16 %v693, %v683
    %v1044 = vpack.c.b16 %v694, %v684
    %v1045 = vpack.c.b16 %v695, %v685
    %v1046 = vpack.c.b16 %v696, %v686
    %v1047 = vpack.c.b16 %v697, %v687
    %v1048 = vpack.c.b16 %v698, %v688
    %v1049 = vpack.c.b16 %v709, %v699
    %v1050 = vpack.c.b16 %v710, %v700
    %v1051 = vpack.c.b16 %v711, %v701
    %v1052 = vpack.c.b16 %v712, %v702
    %v1053 = vpack.c.b16 %v713, %v703
    %v1054 = vpack.c.b16 %v714, %v704
    %v1055 = vpack.c.b16 %v715, %v705
    %v1056 = vpack.c.b16 %v716, %v706
    %v1057 = vpack.c.b16 %v717, %v707
    %v1058 = vpack.c.b16 %v718, %v708
    %v1059 = vpack.c.b16 %v729, %v719
    %v1060 = vpack.c.b16 %v730, %v720
    %v1061 = vpack.c.b16 %v731, %v721
    %v1062 = vpack.c.b16 %v732, %v722
    %v1063 = vpack.c.b16 %v733, %v723
    %v1064 = vpack.c.b16 %v734, %v724
    %v1065 = vpack.c.b16 %v735, %v725
    %v1066 = vpack.c.b16 %v736, %v726
    %v1067 = vpack.c.b16 %v737, %v727
    %v1068 = vpack.c.b16 %v738, %v728
    %v1069 = vpack.c.b16 %v749, %v739
    %v1070 = vpack.c.b16 %v750, %v740
    %v1071 = vpack.c.b16 %v751, %v741
    %v1072 = vpack.c.b16 %v752, %v742
    %v1073 = vpack.c.b16 %v753, %v743
    %v1074 = vpack.c.b16 %v754, %v744
    %v1075 = vpack.c.b16 %v755, %v745
    %v1076 = vpack.c.b16 %v756, %v746
    %v1077 = vpack.c.b16 %v757, %v747
    %v1078 = vpack.c.b16 %v758, %v748
    %v1079 = vpack.c.b16 %v769, %v759
    %v1080 = vpack.c.b16 %v770, %v760
    %v1081 = vpack.c.b16 %v771, %v761
    %v1082 = vpack.c.b16 %v772, %v762
    %v1083 = vpack.c.b16 %v773, %v763
    %v1084 = vpack.c.b16 %v774, %v764
    %v1085 = vpack.c.b16 %v775, %v765
    %v1086 = vpack.c.b16 %v776, %v766
    %v1087 = vpack.c.b16 %v777, %v767
    %v1088 = vpack.c.b16 %v778, %v768
    %v1089 = vpack.c.b16 %v789, %v779
    %v1090 = vpack.c.b16 %v790, %v780
    %v1091 = vpack.c.b16 %v791, %v781
    %v1092 = vpack.c.b16 %v792, %v782
    %v1093 = vpack.c.b16 %v793, %v783
    %v1094 = vpack.c.b16 %v794, %v784
    %v1095 = vpack.c.b16 %v795, %v785
    %v1096 = vpack.c.b16 %v796, %v786
    %v1097 = vpack.c.b16 %v797, %v787
    %v1098 = vpack.c.b16 %v798, %v788
    %v1099 = vpack.c.b16 %v809, %v799
    %v1100 = vpack.c.b16 %v810, %v800
    %v1101 = vpack.c.b16 %v811, %v801
    %v1102 = vpack.c.b16 %v812, %v802
    %v1103 = vpack.c.b16 %v813, %v803
    %v1104 = vpack.c.b16 %v814, %v804
    %v1105 = vpack.c.b16 %v815, %v805
    %v1106 = vpack.c.b16 %v816, %v806
    %v1107 = vpack.c.b16 %v817, %v807
    %v1108 = vpack.c.b16 %v818, %v808
    %v1109 = vpack.c.b16 %v829, %v819
    %v1110 = vpack.c.b16 %v830, %v820
    %v1111 = vpack.c.b16 %v831, %v821
    %v1112 = vpack.c.b16 %v832, %v822
    %v1113 = vpack.c.b16 %v833, %v823
    %v1114 = vpack.c.b16 %v834, %v824
    %v1115 = vpack.c.b16 %v835, %v825
    %v1116 = vpack.c.b16 %v836, %v826
    %v1117 = vpack.c.b16 %v837, %v827
    %v1118 = vpack.c.b16 %v838, %v828
    %v1119 = vpack.c.b16 %v849, %v839
    %v1120 = vpack.c.b16 %v850, %v840
    %v1121 = vpack.c.b16 %v851, %v841
    %v1122 = vpack.c.b16 %v852, %v842
    %v1123 = vpack.c.b16 %v853, %v843
    %v1124 = vpack.c.b16 %v854, %v844
    %v1125 = vpack.c.b16 %v855, %v845
    %v1126 = vpack.c.b16 %v856, %v846
    %v1127 = vpack.c.b16 %v857, %v847
    %v1128 = vpack.c.b16 %v858, %v848
    %v1129 = vpack.c.b16 %v869, %v859
    %v1130 = vpack.c.b16 %v870, %v860
    %v1131 = vpack.c.b16 %v871, %v861
    %v1132 = vpack.c.b16 %v872, %v862
    %v1133 = vpack.c.b16 %v873, %v863
    %v1134 = vpack.c.b16 %v874, %v864
    %v1135 = vpack.c.b16 %v875, %v865
    %v1136 = vpack.c.b16 %v876, %v866
    %v1137 = vpack.c.b16 %v877, %v867
    %v1138 = vpack.c.b16 %v878, %v868
    %v1139 = vpack.c.b16 %v889, %v879
    %v1140 = vpack.c.b16 %v890, %v880
    %v1141 = vpack.c.b16 %v891, %v881
    %v1142 = vpack.c.b16 %v892, %v882
    %v1143 = vpack.c.b16 %v893, %v883
    %v1144 = vpack.c.b16 %v894, %v884
    %v1145 = vpack.c.b16 %v895, %v885
    %v1146 = vpack.c.b16 %v896, %v886
    %v1147 = vpack.c.b16 %v897, %v887
    %v1148 = vpack.c.b16 %v898, %v888
    %v1149 = vpack.c.b16 %v909, %v899
    %v1150 = vpack.c.b16 %v910, %v900
    %v1151 = vpack.c.b16 %v911, %v901
    %v1152 = vpack.c.b16 %v912, %v902
    %v1153 = vpack.c.b16 %v913, %v903
    %v1154 = vpack.c.b16 %v914, %v904
    %v1155 = vpack.c.b16 %v915, %v905
    %v1156 = vpack.c.b16 %v916, %v906
    %v1157 = vpack.c.b16 %v917, %v907
    %v1158 = vpack.c.b16 %v918, %v908
    %v1159 = vpack.c.b16 %v929, %v919
    %v1160 = vpack.c.b16 %v930, %v920
    %v1161 = vpack.c.b16 %v931, %v921
    %v1162 = vpack.c.b16 %v932, %v922
    %v1163 = vpack.c.b16 %v933, %v923
    %v1164 = vpack.c.b16 %v934, %v924
    %v1165 = vpack.c.b16 %v935, %v925
    %v1166 = vpack.c.b16 %v936, %v926
    %v1167 = vpack.c.b16 %v937, %v927
    %v1168 = vpack.c.b16 %v938, %v928
    %v1169 = vpack.c.b16 %v949, %v939
    %v1170 = vpack.c.b16 %v950, %v940
    %v1171 = vpack.c.b16 %v951, %v941
    %v1172 = vpack.c.b16 %v952, %v942
    %v1173 = vpack.c.b16 %v953, %v943
    %v1174 = vpack.c.b16 %v954, %v944
    %v1175 = vpack.c.b16 %v955, %v945
    %v1176 = vpack.c.b16 %v956, %v946
    %v1177 = vpack.c.b16 %v957, %v947
    %v1178 = vpack.c.b16 %v958, %v948
    %v1179 = vpack.c.b16 %v969, %v959
    %v1180 = vpack.c.b16 %v970, %v960
    %v1181 = vpack.c.b16 %v971, %v961
    %v1182 = vpack.c.b16 %v972, %v962
    %v1183 = vpack.c.b16 %v973, %v963
    %v1184 = vpack.c.b16 %v974, %v964
    %v1185 = vpack.c.b16 %v975, %v965
    %v1186 = vpack.c.b16 %v976, %v966
    %v1187 = vpack.c.b16 %v977, %v967
    %v1188 = vpack.c.b16 %v978, %v968
    %v1189 = vpack.c.b16 %v989, %v979
    %v1190 = vpack.c.b16 %v990, %v980
    %v1191 = vpack.c.b16 %v991, %v981
    %v1192 = vpack.c.b16 %v992, %v982
    %v1193 = vpack.c.b16 %v993, %v983
    %v1194 = vpack.c.b16 %v994, %v984
    %v1195 = vpack.c.b16 %v995, %v985
    %v1196 = vpack.c.b16 %v996, %v986
    %v1197 = vpack.c.b16 %v997, %v987
    %v1198 = vpack.c.b16 %v998, %v988
    %v1199 = vpack.c.b16 %v1009, %v999
    %v1200 = vpack.c.b16 %v1010, %v1000
    %v1201 = vpack.c.b16 %v1011, %v1001
    %v1202 = vpack.c.b16 %v1012, %v1002
    %v1203 = vpack.c.b16 %v1013, %v1003
    %v1204 = vpack.c.b16 %v1014, %v1004
    %v1205 = vpack.c.b16 %v1015, %v1005
    %v1206 = vpack.c.b16 %v1016, %v1006
    %v1207 = vpack.c.b16 %v1017, %v1007
    %v1208 = vpack.c.b16 %v1018, %v1008
    %v1209 = vpack.c.b16 %v1029, %v1019
    %v1210 = vpack.c.b16 %v1030, %v1020
    %v1211 = vpack.c.b16 %v1031, %v1021
    %v1212 = vpack.c.b16 %v1032, %v1022
    %v1213 = vpack.c.b16 %v1033, %v1023
    %v1214 = vpack.c.b16 %v1034, %v1024
    %v1215 = vpack.c.b16 %v1035, %v1025
    %v1216 = vpack.c.b16 %v1036, %v1026
    %v1217 = vpack.c.b16 %v1037, %v1027
    %v1218 = vpack.c.b16 %v1038, %v1028
    %vm1399 = vcmask 261120
    %v1401 = vsel %vm1399, %v444, 0
    %1403 = vmatprep.subr.bf16.mxu0 %v1040
    %1404 = vmatpush1.bf16.msra.mxu0 %v1039
    %1405 = vmatprep.subr.bf16.mxu0 %v1050
    %1406 = vmatpush1.bf16.msra.mxu0 %v1049
    %1407 = vmatprep.subr.bf16.mxu0 %v1060
    %1408 = vmatpush1.bf16.msra.mxu0 %v1059
    %1409 = vmatprep.subr.bf16.mxu0 %v1070
    %1410 = vmatpush1.bf16.msra.mxu0 %v1069
    %1411 = vmatprep.subr.bf16.mxu0 %v1080
    %1412 = vmatpush1.bf16.msra.mxu0 %v1079
    %1413 = vmatprep.subr.bf16.mxu0 %v1090
    %1414 = vmatpush1.bf16.msra.mxu0 %v1089
    %1415 = vmatprep.subr.bf16.mxu0 %v1100
    %1416 = vmatpush1.bf16.msra.mxu0 %v1099
    %1417 = vmatprep.subr.bf16.mxu0 %v1110
    %1418 = vmatpush1.bf16.msra.mxu0 %v1109
    %1419 = vmatprep.subr.bf16.mxu0 %v1120
    %1420 = vmatpush1.bf16.msra.mxu0 %v1119
    %1421 = vmatprep.subr.bf16.mxu0 %v1130
    %1422 = vmatpush1.bf16.msra.mxu0 %v1129
    %1423 = vmatprep.subr.bf16.mxu0 %v1140
    %1424 = vmatpush1.bf16.msra.mxu0 %v1139
    %1425 = vmatprep.subr.bf16.mxu0 %v1150
    %1426 = vmatpush1.bf16.msra.mxu0 %v1149
    %1427 = vmatprep.subr.bf16.mxu0 %v1160
    %1428 = vmatpush1.bf16.msra.mxu0 %v1159
    %1429 = vmatprep.subr.bf16.mxu0 %v1170
    %1430 = vmatpush1.bf16.msra.mxu0 %v1169
    %1431 = vmatprep.subr.bf16.mxu0 %v1180
    %1432 = vmatpush1.bf16.msra.mxu0 %v1179
    %1433 = vmatprep.subr.bf16.mxu0 %v1190
    %1434 = vmatpush1.bf16.msra.mxu0 %v1189
    %1435 = vmatprep.mubr.bf16.mxu0 %v443
    %1436 = vmatmul.mubr.bf16.gmra.mrb[0].mxu0 %v442
    %v1437 = vpop.f32.mrb[0].mxu0
    %v1438 = vadd.f32 %v452, %v1437
    %v1439 = vpop.f32.mrb[0].mxu0
    %v1440 = vadd.f32 %v456, %v1439
    %v1441 = vpop.f32.mrb[0].mxu0
    %v1442 = vpop.f32.mrb[0].mxu0
    %1443 = vdwg.mxu0
    %1444 = vmatprep.subr.bf16.mxu0 %v1200
    %1445 = vmatpush1.bf16.msra.mxu0 %v1199
    %1446 = vmatprep.subr.bf16.mxu0 %v1210
    %1447 = vmatpush1.bf16.msra.mxu0 %v1209
    %1448 = vmatprep.subr.bf16.mxu0 0
    %1449 = vmatpush1.bf16.msra.mxu0 0
    %1450 = vmatprep.subr.bf16.mxu0 0
    %1451 = vmatpush1.bf16.msra.mxu0 0
    %1452 = vmatprep.subr.bf16.mxu0 0
    %1453 = vmatpush1.bf16.msra.mxu0 0
    %1454 = vmatprep.subr.bf16.mxu0 0
    %1455 = vmatpush1.bf16.msra.mxu0 0
    %1456 = vmatprep.subr.bf16.mxu0 0
    %1457 = vmatpush1.bf16.msra.mxu0 0
    %1458 = vmatprep.subr.bf16.mxu0 0
    %1459 = vmatpush1.bf16.msra.mxu0 0
    %1460 = vmatprep.subr.bf16.mxu0 0
    %1461 = vmatpush1.bf16.msra.mxu0 0
    %1462 = vmatprep.subr.bf16.mxu0 0
    %1463 = vmatpush1.bf16.msra.mxu0 0
    %1464 = vmatprep.subr.bf16.mxu0 0
    %1465 = vmatpush1.bf16.msra.mxu0 0
    %1466 = vmatprep.subr.bf16.mxu0 0
    %1467 = vmatpush1.bf16.msra.mxu0 0
    %1468 = vmatprep.subr.bf16.mxu0 0
    %1469 = vmatpush1.bf16.msra.mxu0 0
    %1470 = vmatprep.subr.bf16.mxu0 0
    %1471 = vmatpush1.bf16.msra.mxu0 0
    %1472 = vmatprep.subr.bf16.mxu0 0
    %1473 = vmatpush1.bf16.msra.mxu0 0
    %1474 = vmatprep.subr.bf16.mxu0 0
    %1475 = vmatpush1.bf16.msra.mxu0 0
    %1476 = vmatprep.mubr.bf16.mxu0 0
    %1477 = vmatmul.mubr.bf16.gmra.mrb[0].mxu0 %v1401
    %v1478 = vpop.f32.mrb[0].mxu0
    %v1479 = vadd.f32 %v1438, %v1478
    %v1480 = vpop.f32.mrb[0].mxu0
    %v1481 = vadd.f32 %v1440, %v1480
    %v1482 = vpop.f32.mrb[0].mxu0
    %v1483 = vpop.f32.mrb[0].mxu0
    %1484 = vdwg.mxu0
    %1485 = vmatprep.subr.bf16.mxu0 %v1042
    %1486 = vmatpush1.bf16.msra.mxu0 %v1041
    %1487 = vmatprep.subr.bf16.mxu0 %v1052
    %1488 = vmatpush1.bf16.msra.mxu0 %v1051
    %1489 = vmatprep.subr.bf16.mxu0 %v1062
    %1490 = vmatpush1.bf16.msra.mxu0 %v1061
    %1491 = vmatprep.subr.bf16.mxu0 %v1072
    %1492 = vmatpush1.bf16.msra.mxu0 %v1071
    %1493 = vmatprep.subr.bf16.mxu0 %v1082
    %1494 = vmatpush1.bf16.msra.mxu0 %v1081
    %1495 = vmatprep.subr.bf16.mxu0 %v1092
    %1496 = vmatpush1.bf16.msra.mxu0 %v1091
    %1497 = vmatprep.subr.bf16.mxu0 %v1102
    %1498 = vmatpush1.bf16.msra.mxu0 %v1101
    %1499 = vmatprep.subr.bf16.mxu0 %v1112
    %1500 = vmatpush1.bf16.msra.mxu0 %v1111
    %1501 = vmatprep.subr.bf16.mxu0 %v1122
    %1502 = vmatpush1.bf16.msra.mxu0 %v1121
    %1503 = vmatprep.subr.bf16.mxu0 %v1132
    %1504 = vmatpush1.bf16.msra.mxu0 %v1131
    %1505 = vmatprep.subr.bf16.mxu0 %v1142
    %1506 = vmatpush1.bf16.msra.mxu0 %v1141
    %1507 = vmatprep.subr.bf16.mxu0 %v1152
    %1508 = vmatpush1.bf16.msra.mxu0 %v1151
    %1509 = vmatprep.subr.bf16.mxu0 %v1162
    %1510 = vmatpush1.bf16.msra.mxu0 %v1161
    %1511 = vmatprep.subr.bf16.mxu0 %v1172
    %1512 = vmatpush1.bf16.msra.mxu0 %v1171
    %1513 = vmatprep.subr.bf16.mxu0 %v1182
    %1514 = vmatpush1.bf16.msra.mxu0 %v1181
    %1515 = vmatprep.subr.bf16.mxu0 %v1192
    %1516 = vmatpush1.bf16.msra.mxu0 %v1191
    %1517 = vmatprep.mubr.bf16.mxu0 %v443
    %1518 = vmatmul.mubr.bf16.gmra.mrb[0].mxu0 %v442
    %v1519 = vpop.f32.mrb[0].mxu0
    %v1520 = vadd.f32 %v460, %v1519
    %v1521 = vpop.f32.mrb[0].mxu0
    %v1522 = vadd.f32 %v464, %v1521
    %v1523 = vpop.f32.mrb[0].mxu0
    %v1524 = vpop.f32.mrb[0].mxu0
    %1525 = vdwg.mxu0
    %1526 = vmatprep.subr.bf16.mxu0 %v1202
    %1527 = vmatpush1.bf16.msra.mxu0 %v1201
    %1528 = vmatprep.subr.bf16.mxu0 %v1212
    %1529 = vmatpush1.bf16.msra.mxu0 %v1211
    %1530 = vmatprep.subr.bf16.mxu0 0
    %1531 = vmatpush1.bf16.msra.mxu0 0
    %1532 = vmatprep.subr.bf16.mxu0 0
    %1533 = vmatpush1.bf16.msra.mxu0 0
    %1534 = vmatprep.subr.bf16.mxu0 0
    %1535 = vmatpush1.bf16.msra.mxu0 0
    %1536 = vmatprep.subr.bf16.mxu0 0
    %1537 = vmatpush1.bf16.msra.mxu0 0
    %1538 = vmatprep.subr.bf16.mxu0 0
    %1539 = vmatpush1.bf16.msra.mxu0 0
    %1540 = vmatprep.subr.bf16.mxu0 0
    %1541 = vmatpush1.bf16.msra.mxu0 0
    %1542 = vmatprep.subr.bf16.mxu0 0
    %1543 = vmatpush1.bf16.msra.mxu0 0
    %1544 = vmatprep.subr.bf16.mxu0 0
    %1545 = vmatpush1.bf16.msra.mxu0 0
    %1546 = vmatprep.subr.bf16.mxu0 0
    %1547 = vmatpush1.bf16.msra.mxu0 0
    %1548 = vmatprep.subr.bf16.mxu0 0
    %1549 = vmatpush1.bf16.msra.mxu0 0
    %1550 = vmatprep.subr.bf16.mxu0 0
    %1551 = vmatpush1.bf16.msra.mxu0 0
    %1552 = vmatprep.subr.bf16.mxu0 0
    %1553 = vmatpush1.bf16.msra.mxu0 0
    %1554 = vmatprep.subr.bf16.mxu0 0
    %1555 = vmatpush1.bf16.msra.mxu0 0
    %1556 = vmatprep.subr.bf16.mxu0 0
    %1557 = vmatpush1.bf16.msra.mxu0 0
    %1558 = vmatprep.mubr.bf16.mxu0 0
    %1559 = vmatmul.mubr.bf16.gmra.mrb[0].mxu0 %v1401
    %v1560 = vpop.f32.mrb[0].mxu0
    %v1561 = vadd.f32 %v1520, %v1560
    %v1562 = vpop.f32.mrb[0].mxu0
    %v1563 = vadd.f32 %v1522, %v1562
    %v1564 = vpop.f32.mrb[0].mxu0
    %v1565 = vpop.f32.mrb[0].mxu0
    %1566 = vdwg.mxu0
    %1567 = vmatprep.subr.bf16.mxu0 %v1044
    %1568 = vmatpush1.bf16.msra.mxu0 %v1043
    %1569 = vmatprep.subr.bf16.mxu0 %v1054
    %1570 = vmatpush1.bf16.msra.mxu0 %v1053
    %1571 = vmatprep.subr.bf16.mxu0 %v1064
    %1572 = vmatpush1.bf16.msra.mxu0 %v1063
    %1573 = vmatprep.subr.bf16.mxu0 %v1074
    %1574 = vmatpush1.bf16.msra.mxu0 %v1073
    %1575 = vmatprep.subr.bf16.mxu0 %v1084
    %1576 = vmatpush1.bf16.msra.mxu0 %v1083
    %1577 = vmatprep.subr.bf16.mxu0 %v1094
    %1578 = vmatpush1.bf16.msra.mxu0 %v1093
    %1579 = vmatprep.subr.bf16.mxu0 %v1104
    %1580 = vmatpush1.bf16.msra.mxu0 %v1103
    %1581 = vmatprep.subr.bf16.mxu0 %v1114
    %1582 = vmatpush1.bf16.msra.mxu0 %v1113
    %1583 = vmatprep.subr.bf16.mxu0 %v1124
    %1584 = vmatpush1.bf16.msra.mxu0 %v1123
    %1585 = vmatprep.subr.bf16.mxu0 %v1134
    %1586 = vmatpush1.bf16.msra.mxu0 %v1133
    %1587 = vmatprep.subr.bf16.mxu0 %v1144
    %1588 = vmatpush1.bf16.msra.mxu0 %v1143
    %1589 = vmatprep.subr.bf16.mxu0 %v1154
    %1590 = vmatpush1.bf16.msra.mxu0 %v1153
    %1591 = vmatprep.subr.bf16.mxu0 %v1164
    %1592 = vmatpush1.bf16.msra.mxu0 %v1163
    %1593 = vmatprep.subr.bf16.mxu0 %v1174
    %1594 = vmatpush1.bf16.msra.mxu0 %v1173
    %1595 = vmatprep.subr.bf16.mxu0 %v1184
    %1596 = vmatpush1.bf16.msra.mxu0 %v1183
    %1597 = vmatprep.subr.bf16.mxu0 %v1194
    %1598 = vmatpush1.bf16.msra.mxu0 %v1193
    %1599 = vmatprep.mubr.bf16.mxu0 %v443
    %1600 = vmatmul.mubr.bf16.gmra.mrb[0].mxu0 %v442
    %v1601 = vpop.f32.mrb[0].mxu0
    %v1602 = vadd.f32 %v468, %v1601
    %v1603 = vpop.f32.mrb[0].mxu0
    %v1604 = vadd.f32 %v472, %v1603
    %v1605 = vpop.f32.mrb[0].mxu0
    %v1606 = vpop.f32.mrb[0].mxu0
    %1607 = vdwg.mxu0
    %1608 = vmatprep.subr.bf16.mxu0 %v1204
    %1609 = vmatpush1.bf16.msra.mxu0 %v1203
    %1610 = vmatprep.subr.bf16.mxu0 %v1214
    %1611 = vmatpush1.bf16.msra.mxu0 %v1213
    %1612 = vmatprep.subr.bf16.mxu0 0
    %1613 = vmatpush1.bf16.msra.mxu0 0
    %1614 = vmatprep.subr.bf16.mxu0 0
    %1615 = vmatpush1.bf16.msra.mxu0 0
    %1616 = vmatprep.subr.bf16.mxu0 0
    %1617 = vmatpush1.bf16.msra.mxu0 0
    %1618 = vmatprep.subr.bf16.mxu0 0
    %1619 = vmatpush1.bf16.msra.mxu0 0
    %1620 = vmatprep.subr.bf16.mxu0 0
    %1621 = vmatpush1.bf16.msra.mxu0 0
    %1622 = vmatprep.subr.bf16.mxu0 0
    %1623 = vmatpush1.bf16.msra.mxu0 0
    %1624 = vmatprep.subr.bf16.mxu0 0
    %1625 = vmatpush1.bf16.msra.mxu0 0
    %1626 = vmatprep.subr.bf16.mxu0 0
    %1627 = vmatpush1.bf16.msra.mxu0 0
    %1628 = vmatprep.subr.bf16.mxu0 0
    %1629 = vmatpush1.bf16.msra.mxu0 0
    %1630 = vmatprep.subr.bf16.mxu0 0
    %1631 = vmatpush1.bf16.msra.mxu0 0
    %1632 = vmatprep.subr.bf16.mxu0 0
    %1633 = vmatpush1.bf16.msra.mxu0 0
    %1634 = vmatprep.subr.bf16.mxu0 0
    %1635 = vmatpush1.bf16.msra.mxu0 0
    %1636 = vmatprep.subr.bf16.mxu0 0
    %1637 = vmatpush1.bf16.msra.mxu0 0
    %1638 = vmatprep.subr.bf16.mxu0 0
    %1639 = vmatpush1.bf16.msra.mxu0 0
    %1640 = vmatprep.mubr.bf16.mxu0 0
    %1641 = vmatmul.mubr.bf16.gmra.mrb[0].mxu0 %v1401
    %v1642 = vpop.f32.mrb[0].mxu0
    %v1643 = vadd.f32 %v1602, %v1642
    %v1644 = vpop.f32.mrb[0].mxu0
    %v1645 = vadd.f32 %v1604, %v1644
    %v1646 = vpop.f32.mrb[0].mxu0
    %v1647 = vpop.f32.mrb[0].mxu0
    %1648 = vdwg.mxu0
    %1649 = vmatprep.subr.bf16.mxu0 %v1046
    %1650 = vmatpush1.bf16.msra.mxu0 %v1045
    %1651 = vmatprep.subr.bf16.mxu0 %v1056
    %1652 = vmatpush1.bf16.msra.mxu0 %v1055
    %1653 = vmatprep.subr.bf16.mxu0 %v1066
    %1654 = vmatpush1.bf16.msra.mxu0 %v1065
    %1655 = vmatprep.subr.bf16.mxu0 %v1076
    %1656 = vmatpush1.bf16.msra.mxu0 %v1075
    %1657 = vmatprep.subr.bf16.mxu0 %v1086
    %1658 = vmatpush1.bf16.msra.mxu0 %v1085
    %1659 = vmatprep.subr.bf16.mxu0 %v1096
    %1660 = vmatpush1.bf16.msra.mxu0 %v1095
    %1661 = vmatprep.subr.bf16.mxu0 %v1106
    %1662 = vmatpush1.bf16.msra.mxu0 %v1105
    %1663 = vmatprep.subr.bf16.mxu0 %v1116
    %1664 = vmatpush1.bf16.msra.mxu0 %v1115
    %1665 = vmatprep.subr.bf16.mxu0 %v1126
    %1666 = vmatpush1.bf16.msra.mxu0 %v1125
    %1667 = vmatprep.subr.bf16.mxu0 %v1136
    %1668 = vmatpush1.bf16.msra.mxu0 %v1135
    %1669 = vmatprep.subr.bf16.mxu0 %v1146
    %1670 = vmatpush1.bf16.msra.mxu0 %v1145
    %1671 = vmatprep.subr.bf16.mxu0 %v1156
    %1672 = vmatpush1.bf16.msra.mxu0 %v1155
    %1673 = vmatprep.subr.bf16.mxu0 %v1166
    %1674 = vmatpush1.bf16.msra.mxu0 %v1165
    %1675 = vmatprep.subr.bf16.mxu0 %v1176
    %1676 = vmatpush1.bf16.msra.mxu0 %v1175
    %1677 = vmatprep.subr.bf16.mxu0 %v1186
    %1678 = vmatpush1.bf16.msra.mxu0 %v1185
    %1679 = vmatprep.subr.bf16.mxu0 %v1196
    %1680 = vmatpush1.bf16.msra.mxu0 %v1195
    %1681 = vmatprep.mubr.bf16.mxu0 %v443
    %1682 = vmatmul.mubr.bf16.gmra.mrb[0].mxu0 %v442
    %v1683 = vpop.f32.mrb[0].mxu0
    %v1684 = vadd.f32 %v476, %v1683
    %v1685 = vpop.f32.mrb[0].mxu0
    %v1686 = vadd.f32 %v480, %v1685
    %v1687 = vpop.f32.mrb[0].mxu0
    %v1688 = vpop.f32.mrb[0].mxu0
    %1689 = vdwg.mxu0
    %1690 = vmatprep.subr.bf16.mxu0 %v1206
    %1691 = vmatpush1.bf16.msra.mxu0 %v1205
    %1692 = vmatprep.subr.bf16.mxu0 %v1216
    %1693 = vmatpush1.bf16.msra.mxu0 %v1215
    %1694 = vmatprep.subr.bf16.mxu0 0
    %1695 = vmatpush1.bf16.msra.mxu0 0
    %1696 = vmatprep.subr.bf16.mxu0 0
    %1697 = vmatpush1.bf16.msra.mxu0 0
    %1698 = vmatprep.subr.bf16.mxu0 0
    %1699 = vmatpush1.bf16.msra.mxu0 0
    %1700 = vmatprep.subr.bf16.mxu0 0
    %1701 = vmatpush1.bf16.msra.mxu0 0
    %1702 = vmatprep.subr.bf16.mxu0 0
    %1703 = vmatpush1.bf16.msra.mxu0 0
    %1704 = vmatprep.subr.bf16.mxu0 0
    %1705 = vmatpush1.bf16.msra.mxu0 0
    %1706 = vmatprep.subr.bf16.mxu0 0
    %1707 = vmatpush1.bf16.msra.mxu0 0
    %1708 = vmatprep.subr.bf16.mxu0 0
    %1709 = vmatpush1.bf16.msra.mxu0 0
    %1710 = vmatprep.subr.bf16.mxu0 0
    %1711 = vmatpush1.bf16.msra.mxu0 0
    %1712 = vmatprep.subr.bf16.mxu0 0
    %1713 = vmatpush1.bf16.msra.mxu0 0
    %1714 = vmatprep.subr.bf16.mxu0 0
    %1715 = vmatpush1.bf16.msra.mxu0 0
    %1716 = vmatprep.subr.bf16.mxu0 0
    %1717 = vmatpush1.bf16.msra.mxu0 0
    %1718 = vmatprep.subr.bf16.mxu0 0
    %1719 = vmatpush1.bf16.msra.mxu0 0
    %1720 = vmatprep.subr.bf16.mxu0 0
    %1721 = vmatpush1.bf16.msra.mxu0 0
    %1722 = vmatprep.mubr.bf16.mxu0 0
    %1723 = vmatmul.mubr.bf16.gmra.mrb[0].mxu0 %v1401
    %v1724 = vpop.f32.mrb[0].mxu0
    %v1725 = vadd.f32 %v1684, %v1724
    %v1726 = vpop.f32.mrb[0].mxu0
    %v1727 = vadd.f32 %v1686, %v1726
    %v1728 = vpop.f32.mrb[0].mxu0
    %v1729 = vpop.f32.mrb[0].mxu0
    %1730 = vdwg.mxu0
    %1731 = vmatprep.subr.bf16.mxu0 %v1048
    %1732 = vmatpush1.bf16.msra.mxu0 %v1047
    %1733 = vmatprep.subr.bf16.mxu0 %v1058
    %1734 = vmatpush1.bf16.msra.mxu0 %v1057
    %1735 = vmatprep.subr.bf16.mxu0 %v1068
    %1736 = vmatpush1.bf16.msra.mxu0 %v1067
    %1737 = vmatprep.subr.bf16.mxu0 %v1078
    %1738 = vmatpush1.bf16.msra.mxu0 %v1077
    %1739 = vmatprep.subr.bf16.mxu0 %v1088
    %1740 = vmatpush1.bf16.msra.mxu0 %v1087
    %1741 = vmatprep.subr.bf16.mxu0 %v1098
    %1742 = vmatpush1.bf16.msra.mxu0 %v1097
    %1743 = vmatprep.subr.bf16.mxu0 %v1108
    %1744 = vmatpush1.bf16.msra.mxu0 %v1107
    %1745 = vmatprep.subr.bf16.mxu0 %v1118
    %1746 = vmatpush1.bf16.msra.mxu0 %v1117
    %1747 = vmatprep.subr.bf16.mxu0 %v1128
    %1748 = vmatpush1.bf16.msra.mxu0 %v1127
    %1749 = vmatprep.subr.bf16.mxu0 %v1138
    %1750 = vmatpush1.bf16.msra.mxu0 %v1137
    %1751 = vmatprep.subr.bf16.mxu0 %v1148
    %1752 = vmatpush1.bf16.msra.mxu0 %v1147
    %1753 = vmatprep.subr.bf16.mxu0 %v1158
    %1754 = vmatpush1.bf16.msra.mxu0 %v1157
    %1755 = vmatprep.subr.bf16.mxu0 %v1168
    %1756 = vmatpush1.bf16.msra.mxu0 %v1167
    %1757 = vmatprep.subr.bf16.mxu0 %v1178
    %1758 = vmatpush1.bf16.msra.mxu0 %v1177
    %1759 = vmatprep.subr.bf16.mxu0 %v1188
    %1760 = vmatpush1.bf16.msra.mxu0 %v1187
    %1761 = vmatprep.subr.bf16.mxu0 %v1198
    %1762 = vmatpush1.bf16.msra.mxu0 %v1197
    %1763 = vmatprep.mubr.bf16.mxu0 %v443
    %1764 = vmatmul.mubr.bf16.gmra.mrb[0].mxu0 %v442
    %v1765 = vpop.f32.mrb[0].mxu0
    %v1766 = vadd.f32 %v484, %v1765
    %v1767 = vpop.f32.mrb[0].mxu0
    %v1768 = vadd.f32 %v488, %v1767
    %v1769 = vpop.f32.mrb[0].mxu0
    %v1770 = vpop.f32.mrb[0].mxu0
    %1771 = vdwg.mxu0
    %1772 = vmatprep.subr.bf16.mxu0 %v1208
    %1773 = vmatpush1.bf16.msra.mxu0 %v1207
    %1774 = vmatprep.subr.bf16.mxu0 %v1218
    %1775 = vmatpush1.bf16.msra.mxu0 %v1217
    %1776 = vmatprep.subr.bf16.mxu0 0
    %1777 = vmatpush1.bf16.msra.mxu0 0
    %1778 = vmatprep.subr.bf16.mxu0 0
    %1779 = vmatpush1.bf16.msra.mxu0 0
    %1780 = vmatprep.subr.bf16.mxu0 0
    %1781 = vmatpush1.bf16.msra.mxu0 0
    %1782 = vmatprep.subr.bf16.mxu0 0
    %1783 = vmatpush1.bf16.msra.mxu0 0
    %1784 = vmatprep.subr.bf16.mxu0 0
    %1785 = vmatpush1.bf16.msra.mxu0 0
    %1786 = vmatprep.subr.bf16.mxu0 0
    %1787 = vmatpush1.bf16.msra.mxu0 0
    %1788 = vmatprep.subr.bf16.mxu0 0
    %1789 = vmatpush1.bf16.msra.mxu0 0
    %1790 = vmatprep.subr.bf16.mxu0 0
    %1791 = vmatpush1.bf16.msra.mxu0 0
    %1792 = vmatprep.subr.bf16.mxu0 0
    %1793 = vmatpush1.bf16.msra.mxu0 0
    %1794 = vmatprep.subr.bf16.mxu0 0
    %1795 = vmatpush1.bf16.msra.mxu0 0
    %1796 = vmatprep.subr.bf16.mxu0 0
    %1797 = vmatpush1.bf16.msra.mxu0 0
    %1798 = vmatprep.subr.bf16.mxu0 0
    %1799 = vmatpush1.bf16.msra.mxu0 0
    %1800 = vmatprep.subr.bf16.mxu0 0
    %1801 = vmatpush1.bf16.msra.mxu0 0
    %1802 = vmatprep.subr.bf16.mxu0 0
    %1803 = vmatpush1.bf16.msra.mxu0 0
    %1804 = vmatprep.mubr.bf16.mxu0 0
    %1805 = vmatmul.mubr.bf16.gmra.mrb[0].mxu0 %v1401
    %v1806 = vpop.f32.mrb[0].mxu0
    %v1807 = vadd.f32 %v1766, %v1806
    %v1808 = vpop.f32.mrb[0].mxu0
    %v1809 = vadd.f32 %v1768, %v1808
    %v1810 = vpop.f32.mrb[0].mxu0
    %v1811 = vpop.f32.mrb[0].mxu0
    %1812 = vdwg.mxu0
    %v1813 = vmax.f32 %v1479, 0.0
    %v1814 = vmax.f32 %v1481, 0.0
    %v1815 = vmax.f32 %v1561, 0.0
    %v1816 = vmax.f32 %v1563, 0.0
    %v1817 = vmax.f32 %v1643, 0.0
    %v1818 = vmax.f32 %v1645, 0.0
    %v1819 = vmax.f32 %v1725, 0.0
    %v1820 = vmax.f32 %v1727, 0.0
    %v1821 = vmax.f32 %v1807, 0.0
    %v1822 = vmax.f32 %v1809, 0.0
    %v1823 = vld [vmem:[%s9] sm:$0x1]
    %v1825 = vlaneseq
    %v1826 = vshrl.u32 %v1825, 7
    %v1827 = vsub.s32 0, %v1826
    %v1828 = vrot.slane %v1823, %v1827
    %v1830 = vld [vmem:[#allocation10] sm:$0xff]
    %v1831 = vld [vmem:[#allocation10 + $0x8] sm:$0xf]
    %v1832 = vld [vmem:[#allocation10 + $0xc] sm:$0xff]
    %v1833 = vld [vmem:[#allocation10 + $0x14] sm:$0xf]
    %v1834 = vld [vmem:[#allocation10 + $0x18] sm:$0xff]
    %v1835 = vld [vmem:[#allocation10 + $0x20] sm:$0xf]
    %v1836 = vld [vmem:[#allocation10 + $0x24] sm:$0xff]
    %v1837 = vld [vmem:[#allocation10 + $0x2c] sm:$0xf]
    %v1838 = vld [vmem:[#allocation10 + $0x30] sm:$0xff]
    %v1839 = vld [vmem:[#allocation10 + $0x38] sm:$0xf]
    %v1840 = vld [vmem:[#allocation10 + $0x3c] sm:$0xff]
    %v1841 = vld [vmem:[#allocation10 + $0x44] sm:$0xf]
    %v1842 = vld [vmem:[#allocation10 + $0x48] sm:$0xff]
    %v1843 = vld [vmem:[#allocation10 + $0x50] sm:$0xf]
    %v1844 = vld [vmem:[#allocation10 + $0x54] sm:$0xff]
    %v1845 = vld [vmem:[#allocation10 + $0x5c] sm:$0xf]
    %v1846 = vld [vmem:[#allocation10 + $0x60] sm:$0xff]
    %v1847 = vld [vmem:[#allocation10 + $0x68] sm:$0xf]
    %v1848 = vld [vmem:[#allocation10 + $0x6c] sm:$0xff]
    %v1849 = vld [vmem:[#allocation10 + $0x74] sm:$0xf]
    %v1850 = vld [vmem:[#allocation10 + $0x78] sm:$0xff]
    %v1851 = vld [vmem:[#allocation10 + $0x80] sm:$0xf]
    %v1852 = vld [vmem:[#allocation10 + $0x84] sm:$0xff]
    %v1853 = vld [vmem:[#allocation10 + $0x8c] sm:$0xf]
    %v1854 = vld [vmem:[#allocation10 + $0x90] sm:$0xff]
    %v1855 = vld [vmem:[#allocation10 + $0x98] sm:$0xf]
    %v1856 = vld [vmem:[#allocation10 + $0x9c] sm:$0xff]
    %v1857 = vld [vmem:[#allocation10 + $0xa4] sm:$0xf]
    %v1858 = vld [vmem:[#allocation10 + $0xa8] sm:$0xff]
    %v1859 = vld [vmem:[#allocation10 + $0xb0] sm:$0xf]
    %v1860 = vld [vmem:[#allocation10 + $0xb4] sm:$0xff]
    %v1861 = vld [vmem:[#allocation10 + $0xbc] sm:$0xf]
    %v1862 = vld [vmem:[#allocation10 + $0xc0] sm:$0xff]
    %v1863 = vld [vmem:[#allocation10 + $0xc8] sm:$0xf]
    %v1864 = vld [vmem:[#allocation10 + $0xcc] sm:$0xff]
    %v1865 = vld [vmem:[#allocation10 + $0xd4] sm:$0xf]
    %v1866 = vld [vmem:[#allocation10 + $0xd8] sm:$0xff]
    %v1867 = vld [vmem:[#allocation10 + $0xe0] sm:$0xf]
    %v1868 = vld [vmem:[#allocation10 + $0xe4] sm:$0xff]
    %v1869 = vld [vmem:[#allocation10 + $0xec] sm:$0xf]
    %v1870 = vld [vmem:[#allocation10 + $0xf0] sm:$0xff]
    %v1871 = vld [vmem:[#allocation10 + $0xf8] sm:$0xf]
    %v1872 = vld [vmem:[#allocation10 + $0xfc] sm:$0xff]
    %v1873 = vld [vmem:[#allocation10 + $0x104] sm:$0xf]
    %v1874 = vld [vmem:[#allocation10 + $0x108] sm:$0xff]
    %v1875 = vld [vmem:[#allocation10 + $0x110] sm:$0xf]
    %v1876 = vld [vmem:[#allocation10 + $0x114] sm:$0xff]
    %v1877 = vld [vmem:[#allocation10 + $0x11c] sm:$0xf]
    %v1878 = vld [vmem:[#allocation10 + $0x120] sm:$0xff]
    %v1879 = vld [vmem:[#allocation10 + $0x128] sm:$0xf]
    %v1880 = vld [vmem:[#allocation10 + $0x12c] sm:$0xff]
    %v1881 = vld [vmem:[#allocation10 + $0x134] sm:$0xf]
    %v1882 = vld [vmem:[#allocation10 + $0x138] sm:$0xff]
    %v1883 = vld [vmem:[#allocation10 + $0x140] sm:$0xf]
    %v1884 = vld [vmem:[#allocation10 + $0x144] sm:$0xff]
    %v1885 = vld [vmem:[#allocation10 + $0x14c] sm:$0xf]
    %v1886 = vld [vmem:[#allocation10 + $0x150] sm:$0xff]
    %v1887 = vld [vmem:[#allocation10 + $0x158] sm:$0xf]
    %v1888 = vld [vmem:[#allocation10 + $0x15c] sm:$0xff]
    %v1889 = vld [vmem:[#allocation10 + $0x164] sm:$0xf]
    %v1890 = vld [vmem:[#allocation10 + $0x168] sm:$0xff]
    %v1891 = vld [vmem:[#allocation10 + $0x170] sm:$0xf]
    %v1892 = vld [vmem:[#allocation10 + $0x174] sm:$0xff]
    %v1893 = vld [vmem:[#allocation10 + $0x17c] sm:$0xf]
    %v1894 = vld [vmem:[#allocation10 + $0x180] sm:$0xff]
    %v1895 = vld [vmem:[#allocation10 + $0x188] sm:$0xf]
    %v1896 = vld [vmem:[#allocation10 + $0x18c] sm:$0xff]
    %v1897 = vld [vmem:[#allocation10 + $0x194] sm:$0xf]
    %v1898 = vld [vmem:[#allocation10 + $0x198] sm:$0xff]
    %v1899 = vld [vmem:[#allocation10 + $0x1a0] sm:$0xf]
    %v1900 = vld [vmem:[#allocation10 + $0x1a4] sm:$0xff]
    %v1901 = vld [vmem:[#allocation10 + $0x1ac] sm:$0xf]
    %v1902 = vld [vmem:[#allocation10 + $0x1b0] sm:$0xff]
    %v1903 = vld [vmem:[#allocation10 + $0x1b8] sm:$0xf]
    %v1904 = vld [vmem:[#allocation10 + $0x1bc] sm:$0xff]
    %v1905 = vld [vmem:[#allocation10 + $0x1c4] sm:$0xf]
    %v1906 = vld [vmem:[#allocation10 + $0x1c8] sm:$0xff]
    %v1907 = vld [vmem:[#allocation10 + $0x1d0] sm:$0xf]
    %v1908 = vld [vmem:[#allocation10 + $0x1d4] sm:$0xff]
    %v1909 = vld [vmem:[#allocation10 + $0x1dc] sm:$0xf]
    %v1910 = vld [vmem:[#allocation10 + $0x1e0] sm:$0xff]
    %v1911 = vld [vmem:[#allocation10 + $0x1e8] sm:$0xf]
    %v1912 = vld [vmem:[#allocation10 + $0x1ec] sm:$0xff]
    %v1913 = vld [vmem:[#allocation10 + $0x1f4] sm:$0xf]
    %v1914 = vld [vmem:[#allocation10 + $0x1f8] sm:$0xff]
    %v1915 = vld [vmem:[#allocation10 + $0x200] sm:$0xf]
    %v1916 = vld [vmem:[#allocation10 + $0x204] sm:$0xff]
    %v1917 = vld [vmem:[#allocation10 + $0x20c] sm:$0xf]
    %v1918 = vld [vmem:[#allocation10 + $0x210] sm:$0xff]
    %v1919 = vld [vmem:[#allocation10 + $0x218] sm:$0xf]
    %v1920 = vld [vmem:[#allocation10 + $0x21c] sm:$0xff]
    %v1921 = vld [vmem:[#allocation10 + $0x224] sm:$0xf]
    %v1922 = vld [vmem:[#allocation10 + $0x228] sm:$0xff]
    %v1923 = vld [vmem:[#allocation10 + $0x230] sm:$0xf]
    %v1924 = vld [vmem:[#allocation10 + $0x234] sm:$0xff]
    %v1925 = vld [vmem:[#allocation10 + $0x23c] sm:$0xf]
    %v1926 = vld [vmem:[#allocation10 + $0x240] sm:$0xff]
    %v1927 = vld [vmem:[#allocation10 + $0x248] sm:$0xf]
    %v1928 = vld [vmem:[#allocation10 + $0x24c] sm:$0xff]
    %v1929 = vld [vmem:[#allocation10 + $0x254] sm:$0xf]
    %v1930 = vpack.c.bf16 %v1813, %v1813
    %v1931 = vpack.c.bf16 %v1814, %v1814
    %v1932 = vpack.c.bf16 %v1815, %v1815
    %v1933 = vpack.c.bf16 %v1816, %v1816
    %v1934 = vld [vmem:[%s7] sm:$0x7]
    %v1936 = vlaneseq
    %v1937 = vshrl.u32 %v1936, 7
    %v1938 = vsub.s32 0, %v1937
    %v1939 = vrot.slane %v1934, %v1938
    %v1940 = vlaneseq
    %v1941 = vshrl.u32 %v1940, 7
    %v1942 = vsub.s32 1, %v1941
    %v1943 = vrot.slane %v1934, %v1942
    %v1944 = vlaneseq
    %v1945 = vshrl.u32 %v1944, 7
    %v1946 = vsub.s32 2, %v1945
    %v1947 = vrot.slane %v1934, %v1946
    %v2051 = vunpack.c.l.b16 %v1830
    %v2052 = vunpack.c.h.b16 %v1830
    %v2053 = vunpack.c.l.b16 %v1831
    %v2054 = vunpack.c.l.b16 %v1832
    %v2055 = vunpack.c.h.b16 %v1832
    %v2056 = vunpack.c.l.b16 %v1833
    %v2057 = vunpack.c.l.b16 %v1834
    %v2058 = vunpack.c.h.b16 %v1834
    %v2059 = vunpack.c.l.b16 %v1835
    %v2060 = vunpack.c.l.b16 %v1836
    %v2061 = vunpack.c.h.b16 %v1836
    %v2062 = vunpack.c.l.b16 %v1837
    %v2063 = vunpack.c.l.b16 %v1838
    %v2064 = vunpack.c.h.b16 %v1838
    %v2065 = vunpack.c.l.b16 %v1839
    %v2066 = vunpack.c.l.b16 %v1840
    %v2067 = vunpack.c.h.b16 %v1840
    %v2068 = vunpack.c.l.b16 %v1841
    %v2069 = vunpack.c.l.b16 %v1842
    %v2070 = vunpack.c.h.b16 %v1842
    %v2071 = vunpack.c.l.b16 %v1843
    %v2072 = vunpack.c.l.b16 %v1844
    %v2073 = vunpack.c.h.b16 %v1844
    %v2074 = vunpack.c.l.b16 %v1845
    %v2075 = vunpack.c.l.b16 %v1846
    %v2076 = vunpack.c.h.b16 %v1846
    %v2077 = vunpack.c.l.b16 %v1847
    %v2078 = vunpack.c.l.b16 %v1848
    %v2079 = vunpack.c.h.b16 %v1848
    %v2080 = vunpack.c.l.b16 %v1849
    %v2081 = vunpack.c.l.b16 %v1850
    %v2082 = vunpack.c.h.b16 %v1850
    %v2083 = vunpack.c.l.b16 %v1851
    %v2084 = vunpack.c.l.b16 %v1852
    %v2085 = vunpack.c.h.b16 %v1852
    %v2086 = vunpack.c.l.b16 %v1853
    %v2087 = vunpack.c.l.b16 %v1854
    %v2088 = vunpack.c.h.b16 %v1854
    %v2089 = vunpack.c.l.b16 %v1855
    %v2090 = vunpack.c.l.b16 %v1856
    %v2091 = vunpack.c.h.b16 %v1856
    %v2092 = vunpack.c.l.b16 %v1857
    %v2093 = vunpack.c.l.b16 %v1858
    %v2094 = vunpack.c.h.b16 %v1858
    %v2095 = vunpack.c.l.b16 %v1859
    %v2096 = vunpack.c.l.b16 %v1860
    %v2097 = vunpack.c.h.b16 %v1860
    %v2098 = vunpack.c.l.b16 %v1861
    %v2099 = vunpack.c.l.b16 %v1862
    %v2100 = vunpack.c.h.b16 %v1862
    %v2101 = vunpack.c.l.b16 %v1863
    %v2102 = vunpack.c.l.b16 %v1864
    %v2103 = vunpack.c.h.b16 %v1864
    %v2104 = vunpack.c.l.b16 %v1865
    %v2105 = vunpack.c.l.b16 %v1866
    %v2106 = vunpack.c.h.b16 %v1866
    %v2107 = vunpack.c.l.b16 %v1867
    %v2108 = vunpack.c.l.b16 %v1868
    %v2109 = vunpack.c.h.b16 %v1868
    %v2110 = vunpack.c.l.b16 %v1869
    %v2111 = vunpack.c.l.b16 %v1870
    %v2112 = vunpack.c.h.b16 %v1870
    %v2113 = vunpack.c.l.b16 %v1871
    %v2114 = vunpack.c.l.b16 %v1872
    %v2115 = vunpack.c.h.b16 %v1872
    %v2116 = vunpack.c.l.b16 %v1873
    %v2117 = vunpack.c.l.b16 %v1874
    %v2118 = vunpack.c.h.b16 %v1874
    %v2119 = vunpack.c.l.b16 %v1875
    %v2120 = vunpack.c.l.b16 %v1876
    %v2121 = vunpack.c.h.b16 %v1876
    %v2122 = vunpack.c.l.b16 %v1877
    %v2123 = vunpack.c.l.b16 %v1878
    %v2124 = vunpack.c.h.b16 %v1878
    %v2125 = vunpack.c.l.b16 %v1879
    %v2126 = vunpack.c.l.b16 %v1880
    %v2127 = vunpack.c.h.b16 %v1880
    %v2128 = vunpack.c.l.b16 %v1881
    %v2129 = vunpack.c.l.b16 %v1882
    %v2130 = vunpack.c.h.b16 %v1882
    %v2131 = vunpack.c.l.b16 %v1883
    %v2132 = vunpack.c.l.b16 %v1884
    %v2133 = vunpack.c.h.b16 %v1884
    %v2134 = vunpack.c.l.b16 %v1885
    %v2135 = vunpack.c.l.b16 %v1886
    %v2136 = vunpack.c.h.b16 %v1886
    %v2137 = vunpack.c.l.b16 %v1887
    %v2138 = vunpack.c.l.b16 %v1888
    %v2139 = vunpack.c.h.b16 %v1888
    %v2140 = vunpack.c.l.b16 %v1889
    %v2141 = vunpack.c.l.b16 %v1890
    %v2142 = vunpack.c.h.b16 %v1890
    %v2143 = vunpack.c.l.b16 %v1891
    %v2144 = vunpack.c.l.b16 %v1892
    %v2145 = vunpack.c.h.b16 %v1892
    %v2146 = vunpack.c.l.b16 %v1893
    %v2147 = vunpack.c.l.b16 %v1894
    %v2148 = vunpack.c.h.b16 %v1894
    %v2149 = vunpack.c.l.b16 %v1895
    %v2150 = vunpack.c.l.b16 %v1896
    %v2151 = vunpack.c.h.b16 %v1896
    %v2152 = vunpack.c.l.b16 %v1897
    %v2153 = vunpack.c.l.b16 %v1898
    %v2154 = vunpack.c.h.b16 %v1898
    %v2155 = vunpack.c.l.b16 %v1899
    %v2156 = vunpack.c.l.b16 %v1900
    %v2157 = vunpack.c.h.b16 %v1900
    %v2158 = vunpack.c.l.b16 %v1901
    %v2159 = vunpack.c.l.b16 %v1902
    %v2160 = vunpack.c.h.b16 %v1902
    %v2161 = vunpack.c.l.b16 %v1903
    %v2162 = vunpack.c.l.b16 %v1904
    %v2163 = vunpack.c.h.b16 %v1904
    %v2164 = vunpack.c.l.b16 %v1905
    %v2165 = vunpack.c.l.b16 %v1906
    %v2166 = vunpack.c.h.b16 %v1906
    %v2167 = vunpack.c.l.b16 %v1907
    %v2168 = vunpack.c.l.b16 %v1908
    %v2169 = vunpack.c.h.b16 %v1908
    %v2170 = vunpack.c.l.b16 %v1909
    %v2171 = vunpack.c.l.b16 %v1910
    %v2172 = vunpack.c.h.b16 %v1910
    %v2173 = vunpack.c.l.b16 %v1911
    %v2174 = vunpack.c.l.b16 %v1912
    %v2175 = vunpack.c.h.b16 %v1912
    %v2176 = vunpack.c.l.b16 %v1913
    %v2177 = vunpack.c.l.b16 %v1914
    %v2178 = vunpack.c.h.b16 %v1914
    %v2179 = vunpack.c.l.b16 %v1915
    %v2180 = vunpack.c.l.b16 %v1916
    %v2181 = vunpack.c.h.b16 %v1916
    %v2182 = vunpack.c.l.b16 %v1917
    %v2183 = vunpack.c.l.b16 %v1918
    %v2184 = vunpack.c.h.b16 %v1918
    %v2185 = vunpack.c.l.b16 %v1919
    %v2186 = vunpack.c.l.b16 %v1920
    %v2187 = vunpack.c.h.b16 %v1920
    %v2188 = vunpack.c.l.b16 %v1921
    %v2189 = vunpack.c.l.b16 %v1922
    %v2190 = vunpack.c.h.b16 %v1922
    %v2191 = vunpack.c.l.b16 %v1923
    %v2192 = vunpack.c.l.b16 %v1924
    %v2193 = vunpack.c.h.b16 %v1924
    %v2194 = vunpack.c.l.b16 %v1925
    %v2195 = vunpack.c.l.b16 %v1926
    %v2196 = vunpack.c.h.b16 %v1926
    %v2197 = vunpack.c.l.b16 %v1927
    %v2198 = vunpack.c.l.b16 %v1928
    %v2199 = vunpack.c.h.b16 %v1928
    %v2200 = vunpack.c.l.b16 %v1929
    %v2201 = vpack.c.b16 %v2054, %v2051
    %v2202 = vpack.c.b16 %v2055, %v2052
    %v2203 = vpack.c.b16 %v2056, %v2053
    %v2204 = vpack.c.b16 %v2060, %v2057
    %v2205 = vpack.c.b16 %v2061, %v2058
    %v2206 = vpack.c.b16 %v2062, %v2059
    %v2207 = vpack.c.b16 %v2066, %v2063
    %v2208 = vpack.c.b16 %v2067, %v2064
    %v2209 = vpack.c.b16 %v2068, %v2065
    %v2210 = vpack.c.b16 %v2072, %v2069
    %v2211 = vpack.c.b16 %v2073, %v2070
    %v2212 = vpack.c.b16 %v2074, %v2071
    %v2213 = vpack.c.b16 %v2078, %v2075
    %v2214 = vpack.c.b16 %v2079, %v2076
    %v2215 = vpack.c.b16 %v2080, %v2077
    %v2216 = vpack.c.b16 %v2084, %v2081
    %v2217 = vpack.c.b16 %v2085, %v2082
    %v2218 = vpack.c.b16 %v2086, %v2083
    %v2219 = vpack.c.b16 %v2090, %v2087
    %v2220 = vpack.c.b16 %v2091, %v2088
    %v2221 = vpack.c.b16 %v2092, %v2089
    %v2222 = vpack.c.b16 %v2096, %v2093
    %v2223 = vpack.c.b16 %v2097, %v2094
    %v2224 = vpack.c.b16 %v2098, %v2095
    %v2225 = vpack.c.b16 %v2102, %v2099
    %v2226 = vpack.c.b16 %v2103, %v2100
    %v2227 = vpack.c.b16 %v2104, %v2101
    %v2228 = vpack.c.b16 %v2108, %v2105
    %v2229 = vpack.c.b16 %v2109, %v2106
    %v2230 = vpack.c.b16 %v2110, %v2107
    %v2231 = vpack.c.b16 %v2114, %v2111
    %v2232 = vpack.c.b16 %v2115, %v2112
    %v2233 = vpack.c.b16 %v2116, %v2113
    %v2234 = vpack.c.b16 %v2120, %v2117
    %v2235 = vpack.c.b16 %v2121, %v2118
    %v2236 = vpack.c.b16 %v2122, %v2119
    %v2237 = vpack.c.b16 %v2126, %v2123
    %v2238 = vpack.c.b16 %v2127, %v2124
    %v2239 = vpack.c.b16 %v2128, %v2125
    %v2240 = vpack.c.b16 %v2132, %v2129
    %v2241 = vpack.c.b16 %v2133, %v2130
    %v2242 = vpack.c.b16 %v2134, %v2131
    %v2243 = vpack.c.b16 %v2138, %v2135
    %v2244 = vpack.c.b16 %v2139, %v2136
    %v2245 = vpack.c.b16 %v2140, %v2137
    %v2246 = vpack.c.b16 %v2144, %v2141
    %v2247 = vpack.c.b16 %v2145, %v2142
    %v2248 = vpack.c.b16 %v2146, %v2143
    %v2249 = vpack.c.b16 %v2150, %v2147
    %v2250 = vpack.c.b16 %v2151, %v2148
    %v2251 = vpack.c.b16 %v2152, %v2149
    %v2252 = vpack.c.b16 %v2156, %v2153
    %v2253 = vpack.c.b16 %v2157, %v2154
    %v2254 = vpack.c.b16 %v2158, %v2155
    %v2255 = vpack.c.b16 %v2162, %v2159
    %v2256 = vpack.c.b16 %v2163, %v2160
    %v2257 = vpack.c.b16 %v2164, %v2161
    %v2258 = vpack.c.b16 %v2168, %v2165
    %v2259 = vpack.c.b16 %v2169, %v2166
    %v2260 = vpack.c.b16 %v2170, %v2167
    %v2261 = vpack.c.b16 %v2174, %v2171
    %v2262 = vpack.c.b16 %v2175, %v2172
    %v2263 = vpack.c.b16 %v2176, %v2173
    %v2264 = vpack.c.b16 %v2180, %v2177
    %v2265 = vpack.c.b16 %v2181, %v2178
    %v2266 = vpack.c.b16 %v2182, %v2179
    %v2267 = vpack.c.b16 %v2186, %v2183
    %v2268 = vpack.c.b16 %v2187, %v2184
    %v2269 = vpack.c.b16 %v2188, %v2185
    %v2270 = vpack.c.b16 %v2192, %v2189
    %v2271 = vpack.c.b16 %v2193, %v2190
    %v2272 = vpack.c.b16 %v2194, %v2191
    %v2273 = vpack.c.b16 %v2198, %v2195
    %v2274 = vpack.c.b16 %v2199, %v2196
    %v2275 = vpack.c.b16 %v2200, %v2197
    %vm2351 = vcmask 130048
    %v2353 = vsel %vm2351, %v1933, 0
    %2355 = vmatprep.subr.bf16.mxu0 %v2202
    %2356 = vmatpush1.bf16.msra.mxu0 %v2201
    %2357 = vmatprep.subr.bf16.mxu0 %v2205
    %2358 = vmatpush1.bf16.msra.mxu0 %v2204
    %2359 = vmatprep.subr.bf16.mxu0 %v2208
    %2360 = vmatpush1.bf16.msra.mxu0 %v2207
    %2361 = vmatprep.subr.bf16.mxu0 %v2211
    %2362 = vmatpush1.bf16.msra.mxu0 %v2210
    %2363 = vmatprep.subr.bf16.mxu0 %v2214
    %2364 = vmatpush1.bf16.msra.mxu0 %v2213
    %2365 = vmatprep.subr.bf16.mxu0 %v2217
    %2366 = vmatpush1.bf16.msra.mxu0 %v2216
    %2367 = vmatprep.subr.bf16.mxu0 %v2220
    %2368 = vmatpush1.bf16.msra.mxu0 %v2219
    %2369 = vmatprep.subr.bf16.mxu0 %v2223
    %2370 = vmatpush1.bf16.msra.mxu0 %v2222
    %2371 = vmatprep.subr.bf16.mxu0 %v2226
    %2372 = vmatpush1.bf16.msra.mxu0 %v2225
    %2373 = vmatprep.subr.bf16.mxu0 %v2229
    %2374 = vmatpush1.bf16.msra.mxu0 %v2228
    %2375 = vmatprep.subr.bf16.mxu0 %v2232
    %2376 = vmatpush1.bf16.msra.mxu0 %v2231
    %2377 = vmatprep.subr.bf16.mxu0 %v2235
    %2378 = vmatpush1.bf16.msra.mxu0 %v2234
    %2379 = vmatprep.subr.bf16.mxu0 %v2238
    %2380 = vmatpush1.bf16.msra.mxu0 %v2237
    %2381 = vmatprep.subr.bf16.mxu0 %v2241
    %2382 = vmatpush1.bf16.msra.mxu0 %v2240
    %2383 = vmatprep.subr.bf16.mxu0 %v2244
    %2384 = vmatpush1.bf16.msra.mxu0 %v2243
    %2385 = vmatprep.subr.bf16.mxu0 %v2247
    %2386 = vmatpush1.bf16.msra.mxu0 %v2246
    %2387 = vmatprep.mubr.bf16.mxu0 %v1931
    %2388 = vmatmul.mubr.bf16.gmra.mrb[0].mxu0 %v1930
    %v2389 = vpop.f32.mrb[0].mxu0
    %v2390 = vadd.f32 %v1939, %v2389
    %v2391 = vpop.f32.mrb[0].mxu0
    %v2392 = vadd.f32 %v1943, %v2391
    %v2393 = vpop.f32.mrb[0].mxu0
    %v2394 = vpop.f32.mrb[0].mxu0
    %2395 = vdwg.mxu0
    %2396 = vmatprep.subr.bf16.mxu0 %v2250
    %2397 = vmatpush1.bf16.msra.mxu0 %v2249
    %2398 = vmatprep.subr.bf16.mxu0 %v2253
    %2399 = vmatpush1.bf16.msra.mxu0 %v2252
    %2400 = vmatprep.subr.bf16.mxu0 %v2256
    %2401 = vmatpush1.bf16.msra.mxu0 %v2255
    %2402 = vmatprep.subr.bf16.mxu0 %v2259
    %2403 = vmatpush1.bf16.msra.mxu0 %v2258
    %2404 = vmatprep.subr.bf16.mxu0 %v2262
    %2405 = vmatpush1.bf16.msra.mxu0 %v2261
    %2406 = vmatprep.subr.bf16.mxu0 %v2265
    %2407 = vmatpush1.bf16.msra.mxu0 %v2264
    %2408 = vmatprep.subr.bf16.mxu0 %v2268
    %2409 = vmatpush1.bf16.msra.mxu0 %v2267
    %2410 = vmatprep.subr.bf16.mxu0 %v2271
    %2411 = vmatpush1.bf16.msra.mxu0 %v2270
    %2412 = vmatprep.subr.bf16.mxu0 %v2274
    %2413 = vmatpush1.bf16.msra.mxu0 %v2273
    %2414 = vmatprep.subr.bf16.mxu0 0
    %2415 = vmatpush1.bf16.msra.mxu0 0
    %2416 = vmatprep.subr.bf16.mxu0 0
    %2417 = vmatpush1.bf16.msra.mxu0 0
    %2418 = vmatprep.subr.bf16.mxu0 0
    %2419 = vmatpush1.bf16.msra.mxu0 0
    %2420 = vmatprep.subr.bf16.mxu0 0
    %2421 = vmatpush1.bf16.msra.mxu0 0
    %2422 = vmatprep.subr.bf16.mxu0 0
    %2423 = vmatpush1.bf16.msra.mxu0 0
    %2424 = vmatprep.subr.bf16.mxu0 0
    %2425 = vmatpush1.bf16.msra.mxu0 0
    %2426 = vmatprep.subr.bf16.mxu0 0
    %2427 = vmatpush1.bf16.msra.mxu0 0
    %2428 = vmatprep.mubr.bf16.mxu0 %v2353
    %2429 = vmatmul.mubr.bf16.gmra.mrb[0].mxu0 %v1932
    %v2430 = vpop.f32.mrb[0].mxu0
    %v2431 = vadd.f32 %v2390, %v2430
    %v2432 = vpop.f32.mrb[0].mxu0
    %v2433 = vadd.f32 %v2392, %v2432
    %v2434 = vpop.f32.mrb[0].mxu0
    %v2435 = vpop.f32.mrb[0].mxu0
    %2436 = vdwg.mxu0
    %2437 = vmatprep.subr.bf16.mxu0 0
    %2438 = vmatpush1.bf16.msra.mxu0 %v2203
    %2439 = vmatprep.subr.bf16.mxu0 0
    %2440 = vmatpush1.bf16.msra.mxu0 %v2206
    %2441 = vmatprep.subr.bf16.mxu0 0
    %2442 = vmatpush1.bf16.msra.mxu0 %v2209
    %2443 = vmatprep.subr.bf16.mxu0 0
    %2444 = vmatpush1.bf16.msra.mxu0 %v2212
    %2445 = vmatprep.subr.bf16.mxu0 0
    %2446 = vmatpush1.bf16.msra.mxu0 %v2215
    %2447 = vmatprep.subr.bf16.mxu0 0
    %2448 = vmatpush1.bf16.msra.mxu0 %v2218
    %2449 = vmatprep.subr.bf16.mxu0 0
    %2450 = vmatpush1.bf16.msra.mxu0 %v2221
    %2451 = vmatprep.subr.bf16.mxu0 0
    %2452 = vmatpush1.bf16.msra.mxu0 %v2224
    %2453 = vmatprep.subr.bf16.mxu0 0
    %2454 = vmatpush1.bf16.msra.mxu0 %v2227
    %2455 = vmatprep.subr.bf16.mxu0 0
    %2456 = vmatpush1.bf16.msra.mxu0 %v2230
    %2457 = vmatprep.subr.bf16.mxu0 0
    %2458 = vmatpush1.bf16.msra.mxu0 %v2233
    %2459 = vmatprep.subr.bf16.mxu0 0
    %2460 = vmatpush1.bf16.msra.mxu0 %v2236
    %2461 = vmatprep.subr.bf16.mxu0 0
    %2462 = vmatpush1.bf16.msra.mxu0 %v2239
    %2463 = vmatprep.subr.bf16.mxu0 0
    %2464 = vmatpush1.bf16.msra.mxu0 %v2242
    %2465 = vmatprep.subr.bf16.mxu0 0
    %2466 = vmatpush1.bf16.msra.mxu0 %v2245
    %2467 = vmatprep.subr.bf16.mxu0 0
    %2468 = vmatpush1.bf16.msra.mxu0 %v2248
    %2469 = vmatprep.mubr.bf16.mxu0 %v1931
    %2470 = vmatmul.mubr.bf16.gmra.mrb[0].mxu0 %v1930
    %v2471 = vpop.f32.mrb[0].mxu0
    %v2472 = vadd.f32 %v1947, %v2471
    %v2473 = vpop.f32.mrb[0].mxu0
    %v2474 = vpop.f32.mrb[0].mxu0
    %v2475 = vpop.f32.mrb[0].mxu0
    %2476 = vdwg.mxu0
    %2477 = vmatprep.subr.bf16.mxu0 0
    %2478 = vmatpush1.bf16.msra.mxu0 %v2251
    %2479 = vmatprep.subr.bf16.mxu0 0
    %2480 = vmatpush1.bf16.msra.mxu0 %v2254
    %2481 = vmatprep.subr.bf16.mxu0 0
    %2482 = vmatpush1.bf16.msra.mxu0 %v2257
    %2483 = vmatprep.subr.bf16.mxu0 0
    %2484 = vmatpush1.bf16.msra.mxu0 %v2260
    %2485 = vmatprep.subr.bf16.mxu0 0
    %2486 = vmatpush1.bf16.msra.mxu0 %v2263
    %2487 = vmatprep.subr.bf16.mxu0 0
    %2488 = vmatpush1.bf16.msra.mxu0 %v2266
    %2489 = vmatprep.subr.bf16.mxu0 0
    %2490 = vmatpush1.bf16.msra.mxu0 %v2269
    %2491 = vmatprep.subr.bf16.mxu0 0
    %2492 = vmatpush1.bf16.msra.mxu0 %v2272
    %2493 = vmatprep.subr.bf16.mxu0 0
    %2494 = vmatpush1.bf16.msra.mxu0 %v2275
    %2495 = vmatprep.subr.bf16.mxu0 0
    %2496 = vmatpush1.bf16.msra.mxu0 0
    %2497 = vmatprep.subr.bf16.mxu0 0
    %2498 = vmatpush1.bf16.msra.mxu0 0
    %2499 = vmatprep.subr.bf16.mxu0 0
    %2500 = vmatpush1.bf16.msra.mxu0 0
    %2501 = vmatprep.subr.bf16.mxu0 0
    %2502 = vmatpush1.bf16.msra.mxu0 0
    %2503 = vmatprep.subr.bf16.mxu0 0
    %2504 = vmatpush1.bf16.msra.mxu0 0
    %2505 = vmatprep.subr.bf16.mxu0 0
    %2506 = vmatpush1.bf16.msra.mxu0 0
    %2507 = vmatprep.subr.bf16.mxu0 0
    %2508 = vmatpush1.bf16.msra.mxu0 0
    %2509 = vmatprep.mubr.bf16.mxu0 %v2353
    %2510 = vmatmul.mubr.bf16.gmra.mrb[0].mxu0 %v1932
    %v2511 = vpop.f32.mrb[0].mxu0
    %v2512 = vadd.f32 %v2472, %v2511
    %v2513 = vpop.f32.mrb[0].mxu0
    %v2514 = vpop.f32.mrb[0].mxu0
    %v2515 = vpop.f32.mrb[0].mxu0
    %2516 = vdwg.mxu0
    %v2517 = vmax.f32 %v2431, 0.0
    %v2518 = vmax.f32 %v2433, 0.0
    %v2519 = vmax.f32 %v2512, 0.0
    %v2520 = vld [vmem:[#allocation11] sm:$0xf]
    %v2521 = vld [vmem:[#allocation11 + $0x4] sm:$0xf]
    %v2522 = vld [vmem:[#allocation11 + $0x8] sm:$0xf]
    %v2523 = vld [vmem:[#allocation11 + $0xc] sm:$0xf]
    %v2524 = vld [vmem:[#allocation11 + $0x10] sm:$0xf]
    %v2525 = vld [vmem:[#allocation11 + $0x14] sm:$0xf]
    %v2526 = vld [vmem:[#allocation11 + $0x18] sm:$0xf]
    %v2527 = vld [vmem:[#allocation11 + $0x1c] sm:$0xf]
    %v2528 = vld [vmem:[#allocation11 + $0x20] sm:$0xf]
    %v2529 = vld [vmem:[#allocation11 + $0x24] sm:$0xf]
    %v2530 = vld [vmem:[#allocation11 + $0x28] sm:$0xf]
    %v2531 = vld [vmem:[#allocation11 + $0x2c] sm:$0xf]
    %v2532 = vld [vmem:[#allocation11 + $0x30] sm:$0xf]
    %v2533 = vld [vmem:[#allocation11 + $0x34] sm:$0xf]
    %v2534 = vld [vmem:[#allocation11 + $0x38] sm:$0xf]
    %v2535 = vld [vmem:[#allocation11 + $0x3c] sm:$0xf]
    %v2536 = vld [vmem:[#allocation11 + $0x40] sm:$0xf]
    %v2537 = vld [vmem:[#allocation11 + $0x44] sm:$0xf]
    %v2538 = vld [vmem:[#allocation11 + $0x48] sm:$0xf]
    %v2539 = vld [vmem:[#allocation11 + $0x4c] sm:$0xf]
    %v2540 = vld [vmem:[#allocation11 + $0x50] sm:$0xf]
    %v2541 = vld [vmem:[#allocation11 + $0x54] sm:$0xf]
    %v2542 = vld [vmem:[#allocation11 + $0x58] sm:$0xf]
    %v2543 = vld [vmem:[#allocation11 + $0x5c] sm:$0xf]
    %v2544 = vld [vmem:[#allocation11 + $0x60] sm:$0xf]
    %v2545 = vld [vmem:[#allocation11 + $0x64] sm:$0xf]
    %v2546 = vld [vmem:[#allocation11 + $0x68] sm:$0xf]
    %v2547 = vld [vmem:[#allocation11 + $0x6c] sm:$0xf]
    %v2548 = vld [vmem:[#allocation11 + $0x70] sm:$0xf]
    %v2549 = vld [vmem:[#allocation11 + $0x74] sm:$0xf]
    %v2550 = vld [vmem:[#allocation11 + $0x78] sm:$0xf]
    %v2551 = vld [vmem:[#allocation11 + $0x7c] sm:$0xf]
    %v2552 = vld [vmem:[#allocation11 + $0x80] sm:$0xf]
    %v2553 = vld [vmem:[#allocation11 + $0x84] sm:$0xf]
    %v2554 = vld [vmem:[#allocation11 + $0x88] sm:$0xf]
    %v2555 = vld [vmem:[#allocation11 + $0x8c] sm:$0xf]
    %v2556 = vld [vmem:[#allocation11 + $0x90] sm:$0xf]
    %v2557 = vld [vmem:[#allocation11 + $0x94] sm:$0x3]
    %v2558 = vpack.c.bf16 %v2517, %v2517
    %v2559 = vpack.c.bf16 %v2518, %v2518
    %v2560 = vpack.c.bf16 %v2519, %v2519
    %v2599 = vunpack.c.l.b16 %v2520
    %v2600 = vunpack.c.l.b16 %v2521
    %v2601 = vunpack.c.l.b16 %v2522
    %v2602 = vunpack.c.l.b16 %v2523
    %v2603 = vunpack.c.l.b16 %v2524
    %v2604 = vunpack.c.l.b16 %v2525
    %v2605 = vunpack.c.l.b16 %v2526
    %v2606 = vunpack.c.l.b16 %v2527
    %v2607 = vunpack.c.l.b16 %v2528
    %v2608 = vunpack.c.l.b16 %v2529
    %v2609 = vunpack.c.l.b16 %v2530
    %v2610 = vunpack.c.l.b16 %v2531
    %v2611 = vunpack.c.l.b16 %v2532
    %v2612 = vunpack.c.l.b16 %v2533
    %v2613 = vunpack.c.l.b16 %v2534
    %v2614 = vunpack.c.l.b16 %v2535
    %v2615 = vunpack.c.l.b16 %v2536
    %v2616 = vunpack.c.l.b16 %v2537
    %v2617 = vunpack.c.l.b16 %v2538
    %v2618 = vunpack.c.l.b16 %v2539
    %v2619 = vunpack.c.l.b16 %v2540
    %v2620 = vunpack.c.l.b16 %v2541
    %v2621 = vunpack.c.l.b16 %v2542
    %v2622 = vunpack.c.l.b16 %v2543
    %v2623 = vunpack.c.l.b16 %v2544
    %v2624 = vunpack.c.l.b16 %v2545
    %v2625 = vunpack.c.l.b16 %v2546
    %v2626 = vunpack.c.l.b16 %v2547
    %v2627 = vunpack.c.l.b16 %v2548
    %v2628 = vunpack.c.l.b16 %v2549
    %v2629 = vunpack.c.l.b16 %v2550
    %v2630 = vunpack.c.l.b16 %v2551
    %v2631 = vunpack.c.l.b16 %v2552
    %v2632 = vunpack.c.l.b16 %v2553
    %v2633 = vunpack.c.l.b16 %v2554
    %v2634 = vunpack.c.l.b16 %v2555
    %v2635 = vunpack.c.l.b16 %v2556
    %v2636 = vunpack.c.l.b16 %v2557
    %v2637 = vpack.c.b16 %v2600, %v2599
    %v2638 = vpack.c.b16 %v2602, %v2601
    %v2639 = vpack.c.b16 %v2604, %v2603
    %v2640 = vpack.c.b16 %v2606, %v2605
    %v2641 = vpack.c.b16 %v2608, %v2607
    %v2642 = vpack.c.b16 %v2610, %v2609
    %v2643 = vpack.c.b16 %v2612, %v2611
    %v2644 = vpack.c.b16 %v2614, %v2613
    %v2645 = vpack.c.b16 %v2616, %v2615
    %v2646 = vpack.c.b16 %v2618, %v2617
    %v2647 = vpack.c.b16 %v2620, %v2619
    %v2648 = vpack.c.b16 %v2622, %v2621
    %v2649 = vpack.c.b16 %v2624, %v2623
    %v2650 = vpack.c.b16 %v2626, %v2625
    %v2651 = vpack.c.b16 %v2628, %v2627
    %v2652 = vpack.c.b16 %v2630, %v2629
    %v2653 = vpack.c.b16 %v2632, %v2631
    %v2654 = vpack.c.b16 %v2634, %v2633
    %v2655 = vpack.c.b16 %v2636, %v2635
    %vm2674 = vcmask 359424
    %v2676 = vsel %vm2674, %v2560, 0
    %vm2678 = vcmask 1045504
    %v2680 = vsel %vm2678, %v2655, 0
    %2682 = vmatprep.subr.bf16.mxu0 0
    %2683 = vmatpush1.bf16.msra.mxu0 %v2637
    %2684 = vmatprep.subr.bf16.mxu0 0
    %2685 = vmatpush1.bf16.msra.mxu0 %v2638
    %2686 = vmatprep.subr.bf16.mxu0 0
    %2687 = vmatpush1.bf16.msra.mxu0 %v2639
    %2688 = vmatprep.subr.bf16.mxu0 0
    %2689 = vmatpush1.bf16.msra.mxu0 %v2640
    %2690 = vmatprep.subr.bf16.mxu0 0
    %2691 = vmatpush1.bf16.msra.mxu0 %v2641
    %2692 = vmatprep.subr.bf16.mxu0 0
    %2693 = vmatpush1.bf16.msra.mxu0 %v2642
    %2694 = vmatprep.subr.bf16.mxu0 0
    %2695 = vmatpush1.bf16.msra.mxu0 %v2643
    %2696 = vmatprep.subr.bf16.mxu0 0
    %2697 = vmatpush1.bf16.msra.mxu0 %v2644
    %2698 = vmatprep.subr.bf16.mxu0 0
    %2699 = vmatpush1.bf16.msra.mxu0 %v2645
    %2700 = vmatprep.subr.bf16.mxu0 0
    %2701 = vmatpush1.bf16.msra.mxu0 %v2646
    %2702 = vmatprep.subr.bf16.mxu0 0
    %2703 = vmatpush1.bf16.msra.mxu0 %v2647
    %2704 = vmatprep.subr.bf16.mxu0 0
    %2705 = vmatpush1.bf16.msra.mxu0 %v2648
    %2706 = vmatprep.subr.bf16.mxu0 0
    %2707 = vmatpush1.bf16.msra.mxu0 %v2649
    %2708 = vmatprep.subr.bf16.mxu0 0
    %2709 = vmatpush1.bf16.msra.mxu0 %v2650
    %2710 = vmatprep.subr.bf16.mxu0 0
    %2711 = vmatpush1.bf16.msra.mxu0 %v2651
    %2712 = vmatprep.subr.bf16.mxu0 0
    %2713 = vmatpush1.bf16.msra.mxu0 %v2652
    %2714 = vmatprep.mubr.bf16.mxu0 %v2559
    %2715 = vmatmul.mubr.bf16.gmra.mrb[0].mxu0 %v2558
    %v2716 = vpop.f32.mrb[0].mxu0
    %v2717 = vadd.f32 0.0, %v2716
    %v2718 = vpop.f32.mrb[0].mxu0
    %v2719 = vpop.f32.mrb[0].mxu0
    %v2720 = vpop.f32.mrb[0].mxu0
    %2721 = vdwg.mxu0
    %2722 = vmatprep.subr.bf16.mxu0 0
    %2723 = vmatpush1.bf16.msra.mxu0 %v2653
    %2724 = vmatprep.subr.bf16.mxu0 0
    %2725 = vmatpush1.bf16.msra.mxu0 %v2654
    %2726 = vmatprep.subr.bf16.mxu0 0
    %2727 = vmatpush1.bf16.msra.mxu0 %v2680
    %2728 = vmatprep.subr.bf16.mxu0 0
    %2729 = vmatpush1.bf16.msra.mxu0 0
    %2730 = vmatprep.subr.bf16.mxu0 0
    %2731 = vmatpush1.bf16.msra.mxu0 0
    %2732 = vmatprep.subr.bf16.mxu0 0
    %2733 = vmatpush1.bf16.msra.mxu0 0
    %2734 = vmatprep.subr.bf16.mxu0 0
    %2735 = vmatpush1.bf16.msra.mxu0 0
    %2736 = vmatprep.subr.bf16.mxu0 0
    %2737 = vmatpush1.bf16.msra.mxu0 0
    %2738 = vmatprep.subr.bf16.mxu0 0
    %2739 = vmatpush1.bf16.msra.mxu0 0
    %2740 = vmatprep.subr.bf16.mxu0 0
    %2741 = vmatpush1.bf16.msra.mxu0 0
    %2742 = vmatprep.subr.bf16.mxu0 0
    %2743 = vmatpush1.bf16.msra.mxu0 0
    %2744 = vmatprep.subr.bf16.mxu0 0
    %2745 = vmatpush1.bf16.msra.mxu0 0
    %2746 = vmatprep.subr.bf16.mxu0 0
    %2747 = vmatpush1.bf16.msra.mxu0 0
    %2748 = vmatprep.subr.bf16.mxu0 0
    %2749 = vmatpush1.bf16.msra.mxu0 0
    %2750 = vmatprep.subr.bf16.mxu0 0
    %2751 = vmatpush1.bf16.msra.mxu0 0
    %2752 = vmatprep.subr.bf16.mxu0 0
    %2753 = vmatpush1.bf16.msra.mxu0 0
    %2754 = vmatprep.mubr.bf16.mxu0 0
    %2755 = vmatmul.mubr.bf16.gmra.mrb[0].mxu0 %v2676
    %v2756 = vpop.f32.mrb[0].mxu0
    %v2757 = vadd.f32 %v2717, %v2756
    %v2758 = vpop.f32.mrb[0].mxu0
    %v2759 = vpop.f32.mrb[0].mxu0
    %v2760 = vpop.f32.mrb[0].mxu0
    %2761 = vdwg.mxu0
    %v2762 = vadd.f32 %v1828, %v2757
    %s2763 = scalar_lea.vmem [#allocation10], 600
    %v2764 = vld [vmem:[%s2763] sm:$0xff]
    %v2765 = vld [vmem:[%s2763 + $0x8] sm:$0xf]
    %v2766 = vld [vmem:[%s2763 + $0xc] sm:$0xff]
    %v2767 = vld [vmem:[%s2763 + $0x14] sm:$0xf]
    %v2768 = vld [vmem:[%s2763 + $0x18] sm:$0xff]
    %v2769 = vld [vmem:[%s2763 + $0x20] sm:$0xf]
    %v2770 = vld [vmem:[%s2763 + $0x24] sm:$0xff]
    %v2771 = vld [vmem:[%s2763 + $0x2c] sm:$0xf]
    %v2772 = vld [vmem:[%s2763 + $0x30] sm:$0xff]
    %v2773 = vld [vmem:[%s2763 + $0x38] sm:$0xf]
    %v2774 = vld [vmem:[%s2763 + $0x3c] sm:$0xff]
    %v2775 = vld [vmem:[%s2763 + $0x44] sm:$0xf]
    %v2776 = vld [vmem:[%s2763 + $0x48] sm:$0xff]
    %v2777 = vld [vmem:[%s2763 + $0x50] sm:$0xf]
    %v2778 = vld [vmem:[%s2763 + $0x54] sm:$0xff]
    %v2779 = vld [vmem:[%s2763 + $0x5c] sm:$0xf]
    %v2780 = vld [vmem:[%s2763 + $0x60] sm:$0xff]
    %v2781 = vld [vmem:[%s2763 + $0x68] sm:$0xf]
    %v2782 = vld [vmem:[%s2763 + $0x6c] sm:$0xff]
    %v2783 = vld [vmem:[%s2763 + $0x74] sm:$0xf]
    %v2784 = vld [vmem:[%s2763 + $0x78] sm:$0xff]
    %v2785 = vld [vmem:[%s2763 + $0x80] sm:$0xf]
    %v2786 = vld [vmem:[%s2763 + $0x84] sm:$0xff]
    %v2787 = vld [vmem:[%s2763 + $0x8c] sm:$0xf]
    %v2788 = vld [vmem:[%s2763 + $0x90] sm:$0xff]
    %v2789 = vld [vmem:[%s2763 + $0x98] sm:$0xf]
    %v2790 = vld [vmem:[%s2763 + $0x9c] sm:$0xff]
    %v2791 = vld [vmem:[%s2763 + $0xa4] sm:$0xf]
    %v2792 = vld [vmem:[%s2763 + $0xa8] sm:$0xff]
    %v2793 = vld [vmem:[%s2763 + $0xb0] sm:$0xf]
    %v2794 = vld [vmem:[%s2763 + $0xb4] sm:$0xff]
    %v2795 = vld [vmem:[%s2763 + $0xbc] sm:$0xf]
    %v2796 = vld [vmem:[%s2763 + $0xc0] sm:$0xff]
    %v2797 = vld [vmem:[%s2763 + $0xc8] sm:$0xf]
    %v2798 = vld [vmem:[%s2763 + $0xcc] sm:$0xff]
    %v2799 = vld [vmem:[%s2763 + $0xd4] sm:$0xf]
    %v2800 = vld [vmem:[%s2763 + $0xd8] sm:$0xff]
    %v2801 = vld [vmem:[%s2763 + $0xe0] sm:$0xf]
    %v2802 = vld [vmem:[%s2763 + $0xe4] sm:$0xff]
    %v2803 = vld [vmem:[%s2763 + $0xec] sm:$0xf]
    %v2804 = vld [vmem:[%s2763 + $0xf0] sm:$0xff]
    %v2805 = vld [vmem:[%s2763 + $0xf8] sm:$0xf]
    %v2806 = vld [vmem:[%s2763 + $0xfc] sm:$0xff]
    %v2807 = vld [vmem:[%s2763 + $0x104] sm:$0xf]
    %v2808 = vld [vmem:[%s2763 + $0x108] sm:$0xff]
    %v2809 = vld [vmem:[%s2763 + $0x110] sm:$0xf]
    %v2810 = vld [vmem:[%s2763 + $0x114] sm:$0xff]
    %v2811 = vld [vmem:[%s2763 + $0x11c] sm:$0xf]
    %v2812 = vld [vmem:[%s2763 + $0x120] sm:$0xff]
    %v2813 = vld [vmem:[%s2763 + $0x128] sm:$0xf]
    %v2814 = vld [vmem:[%s2763 + $0x12c] sm:$0xff]
    %v2815 = vld [vmem:[%s2763 + $0x134] sm:$0xf]
    %v2816 = vld [vmem:[%s2763 + $0x138] sm:$0xff]
    %v2817 = vld [vmem:[%s2763 + $0x140] sm:$0xf]
    %v2818 = vld [vmem:[%s2763 + $0x144] sm:$0xff]
    %v2819 = vld [vmem:[%s2763 + $0x14c] sm:$0xf]
    %v2820 = vld [vmem:[%s2763 + $0x150] sm:$0xff]
    %v2821 = vld [vmem:[%s2763 + $0x158] sm:$0xf]
    %v2822 = vld [vmem:[%s2763 + $0x15c] sm:$0xff]
    %v2823 = vld [vmem:[%s2763 + $0x164] sm:$0xf]
    %v2824 = vld [vmem:[%s2763 + $0x168] sm:$0xff]
    %v2825 = vld [vmem:[%s2763 + $0x170] sm:$0xf]
    %v2826 = vld [vmem:[%s2763 + $0x174] sm:$0xff]
    %v2827 = vld [vmem:[%s2763 + $0x17c] sm:$0xf]
    %v2828 = vld [vmem:[%s2763 + $0x180] sm:$0xff]
    %v2829 = vld [vmem:[%s2763 + $0x188] sm:$0xf]
    %v2830 = vld [vmem:[%s2763 + $0x18c] sm:$0xff]
    %v2831 = vld [vmem:[%s2763 + $0x194] sm:$0xf]
    %v2832 = vld [vmem:[%s2763 + $0x198] sm:$0xff]
    %v2833 = vld [vmem:[%s2763 + $0x1a0] sm:$0xf]
    %v2834 = vld [vmem:[%s2763 + $0x1a4] sm:$0xff]
    %v2835 = vld [vmem:[%s2763 + $0x1ac] sm:$0xf]
    %v2836 = vld [vmem:[%s2763 + $0x1b0] sm:$0xff]
    %v2837 = vld [vmem:[%s2763 + $0x1b8] sm:$0xf]
    %v2838 = vld [vmem:[%s2763 + $0x1bc] sm:$0xff]
    %v2839 = vld [vmem:[%s2763 + $0x1c4] sm:$0xf]
    %v2840 = vld [vmem:[%s2763 + $0x1c8] sm:$0xff]
    %v2841 = vld [vmem:[%s2763 + $0x1d0] sm:$0xf]
    %v2842 = vld [vmem:[%s2763 + $0x1d4] sm:$0xff]
    %v2843 = vld [vmem:[%s2763 + $0x1dc] sm:$0xf]
    %v2844 = vld [vmem:[%s2763 + $0x1e0] sm:$0xff]
    %v2845 = vld [vmem:[%s2763 + $0x1e8] sm:$0xf]
    %v2846 = vld [vmem:[%s2763 + $0x1ec] sm:$0xff]
    %v2847 = vld [vmem:[%s2763 + $0x1f4] sm:$0xf]
    %v2848 = vld [vmem:[%s2763 + $0x1f8] sm:$0xff]
    %v2849 = vld [vmem:[%s2763 + $0x200] sm:$0xf]
    %v2850 = vld [vmem:[%s2763 + $0x204] sm:$0xff]
    %v2851 = vld [vmem:[%s2763 + $0x20c] sm:$0xf]
    %v2852 = vld [vmem:[%s2763 + $0x210] sm:$0xff]
    %v2853 = vld [vmem:[%s2763 + $0x218] sm:$0xf]
    %v2854 = vld [vmem:[%s2763 + $0x21c] sm:$0xff]
    %v2855 = vld [vmem:[%s2763 + $0x224] sm:$0xf]
    %v2856 = vld [vmem:[%s2763 + $0x228] sm:$0xff]
    %v2857 = vld [vmem:[%s2763 + $0x230] sm:$0xf]
    %v2858 = vld [vmem:[%s2763 + $0x234] sm:$0xff]
    %v2859 = vld [vmem:[%s2763 + $0x23c] sm:$0xf]
    %v2860 = vld [vmem:[%s2763 + $0x240] sm:$0xff]
    %v2861 = vld [vmem:[%s2763 + $0x248] sm:$0xf]
    %v2862 = vld [vmem:[%s2763 + $0x24c] sm:$0xff]
    %v2863 = vld [vmem:[%s2763 + $0x254] sm:$0xf]
    %v2864 = vpack.c.bf16 %v1817, %v1817
    %v2865 = vpack.c.bf16 %v1818, %v1818
    %v2866 = vpack.c.bf16 %v1819, %v1819
    %s2867 = scalar_lea.vmem %s7, 3
    %v2868 = vld [vmem:[%s2867] sm:$0x7]
    %v2870 = vlaneseq
    %v2871 = vshrl.u32 %v2870, 7
    %v2872 = vsub.s32 0, %v2871
    %v2873 = vrot.slane %v2868, %v2872
    %v2874 = vlaneseq
    %v2875 = vshrl.u32 %v2874, 7
    %v2876 = vsub.s32 1, %v2875
    %v2877 = vrot.slane %v2868, %v2876
    %v2878 = vlaneseq
    %v2879 = vshrl.u32 %v2878, 7
    %v2880 = vsub.s32 2, %v2879
    %v2881 = vrot.slane %v2868, %v2880
    %2889 = vrot.lane.b32.xlu0 %v1933, 112
    %v2890 = vpop.permute.xlu0 %2889
    %2891 = vrot.lane.b32.xlu0 %v2864, 112
    %v2892 = vpop.permute.xlu0 %2891
    %2893 = vrot.lane.b32.xlu0 %v2865, 112
    %v2894 = vpop.permute.xlu0 %2893
    %2895 = vrot.lane.b32.xlu0 %v2866, 112
    %v2896 = vpop.permute.xlu0 %2895
    %vm2897 = vcmask 916480
    %v2898 = vsel %vm2897, %v2890, %v2892
    %v2899 = vsel %vm2897, %v2892, %v2894
    %v2900 = vsel %vm2897, %v2894, %v2896
    %v3004 = vunpack.c.l.b16 %v2764
    %v3005 = vunpack.c.h.b16 %v2764
    %v3006 = vunpack.c.l.b16 %v2765
    %v3007 = vunpack.c.l.b16 %v2766
    %v3008 = vunpack.c.h.b16 %v2766
    %v3009 = vunpack.c.l.b16 %v2767
    %v3010 = vunpack.c.l.b16 %v2768
    %v3011 = vunpack.c.h.b16 %v2768
    %v3012 = vunpack.c.l.b16 %v2769
    %v3013 = vunpack.c.l.b16 %v2770
    %v3014 = vunpack.c.h.b16 %v2770
    %v3015 = vunpack.c.l.b16 %v2771
    %v3016 = vunpack.c.l.b16 %v2772
    %v3017 = vunpack.c.h.b16 %v2772
    %v3018 = vunpack.c.l.b16 %v2773
    %v3019 = vunpack.c.l.b16 %v2774
    %v3020 = vunpack.c.h.b16 %v2774
    %v3021 = vunpack.c.l.b16 %v2775
    %v3022 = vunpack.c.l.b16 %v2776
    %v3023 = vunpack.c.h.b16 %v2776
    %v3024 = vunpack.c.l.b16 %v2777
    %v3025 = vunpack.c.l.b16 %v2778
    %v3026 = vunpack.c.h.b16 %v2778
    %v3027 = vunpack.c.l.b16 %v2779
    %v3028 = vunpack.c.l.b16 %v2780
    %v3029 = vunpack.c.h.b16 %v2780
    %v3030 = vunpack.c.l.b16 %v2781
    %v3031 = vunpack.c.l.b16 %v2782
    %v3032 = vunpack.c.h.b16 %v2782
    %v3033 = vunpack.c.l.b16 %v2783
    %v3034 = vunpack.c.l.b16 %v2784
    %v3035 = vunpack.c.h.b16 %v2784
    %v3036 = vunpack.c.l.b16 %v2785
    %v3037 = vunpack.c.l.b16 %v2786
    %v3038 = vunpack.c.h.b16 %v2786
    %v3039 = vunpack.c.l.b16 %v2787
    %v3040 = vunpack.c.l.b16 %v2788
    %v3041 = vunpack.c.h.b16 %v2788
    %v3042 = vunpack.c.l.b16 %v2789
    %v3043 = vunpack.c.l.b16 %v2790
    %v3044 = vunpack.c.h.b16 %v2790
    %v3045 = vunpack.c.l.b16 %v2791
    %v3046 = vunpack.c.l.b16 %v2792
    %v3047 = vunpack.c.h.b16 %v2792
    %v3048 = vunpack.c.l.b16 %v2793
    %v3049 = vunpack.c.l.b16 %v2794
    %v3050 = vunpack.c.h.b16 %v2794
    %v3051 = vunpack.c.l.b16 %v2795
    %v3052 = vunpack.c.l.b16 %v2796
    %v3053 = vunpack.c.h.b16 %v2796
    %v3054 = vunpack.c.l.b16 %v2797
    %v3055 = vunpack.c.l.b16 %v2798
    %v3056 = vunpack.c.h.b16 %v2798
    %v3057 = vunpack.c.l.b16 %v2799
    %v3058 = vunpack.c.l.b16 %v2800
    %v3059 = vunpack.c.h.b16 %v2800
    %v3060 = vunpack.c.l.b16 %v2801
    %v3061 = vunpack.c.l.b16 %v2802
    %v3062 = vunpack.c.h.b16 %v2802
    %v3063 = vunpack.c.l.b16 %v2803
    %v3064 = vunpack.c.l.b16 %v2804
    %v3065 = vunpack.c.h.b16 %v2804
    %v3066 = vunpack.c.l.b16 %v2805
    %v3067 = vunpack.c.l.b16 %v2806
    %v3068 = vunpack.c.h.b16 %v2806
    %v3069 = vunpack.c.l.b16 %v2807
    %v3070 = vunpack.c.l.b16 %v2808
    %v3071 = vunpack.c.h.b16 %v2808
    %v3072 = vunpack.c.l.b16 %v2809
    %v3073 = vunpack.c.l.b16 %v2810
    %v3074 = vunpack.c.h.b16 %v2810
    %v3075 = vunpack.c.l.b16 %v2811
    %v3076 = vunpack.c.l.b16 %v2812
    %v3077 = vunpack.c.h.b16 %v2812
    %v3078 = vunpack.c.l.b16 %v2813
    %v3079 = vunpack.c.l.b16 %v2814
    %v3080 = vunpack.c.h.b16 %v2814
    %v3081 = vunpack.c.l.b16 %v2815
    %v3082 = vunpack.c.l.b16 %v2816
    %v3083 = vunpack.c.h.b16 %v2816
    %v3084 = vunpack.c.l.b16 %v2817
    %v3085 = vunpack.c.l.b16 %v2818
    %v3086 = vunpack.c.h.b16 %v2818
    %v3087 = vunpack.c.l.b16 %v2819
    %v3088 = vunpack.c.l.b16 %v2820
    %v3089 = vunpack.c.h.b16 %v2820
    %v3090 = vunpack.c.l.b16 %v2821
    %v3091 = vunpack.c.l.b16 %v2822
    %v3092 = vunpack.c.h.b16 %v2822
    %v3093 = vunpack.c.l.b16 %v2823
    %v3094 = vunpack.c.l.b16 %v2824
    %v3095 = vunpack.c.h.b16 %v2824
    %v3096 = vunpack.c.l.b16 %v2825
    %v3097 = vunpack.c.l.b16 %v2826
    %v3098 = vunpack.c.h.b16 %v2826
    %v3099 = vunpack.c.l.b16 %v2827
    %v3100 = vunpack.c.l.b16 %v2828
    %v3101 = vunpack.c.h.b16 %v2828
    %v3102 = vunpack.c.l.b16 %v2829
    %v3103 = vunpack.c.l.b16 %v2830
    %v3104 = vunpack.c.h.b16 %v2830
    %v3105 = vunpack.c.l.b16 %v2831
    %v3106 = vunpack.c.l.b16 %v2832
    %v3107 = vunpack.c.h.b16 %v2832
    %v3108 = vunpack.c.l.b16 %v2833
    %v3109 = vunpack.c.l.b16 %v2834
    %v3110 = vunpack.c.h.b16 %v2834
    %v3111 = vunpack.c.l.b16 %v2835
    %v3112 = vunpack.c.l.b16 %v2836
    %v3113 = vunpack.c.h.b16 %v2836
    %v3114 = vunpack.c.l.b16 %v2837
    %v3115 = vunpack.c.l.b16 %v2838
    %v3116 = vunpack.c.h.b16 %v2838
    %v3117 = vunpack.c.l.b16 %v2839
    %v3118 = vunpack.c.l.b16 %v2840
    %v3119 = vunpack.c.h.b16 %v2840
    %v3120 = vunpack.c.l.b16 %v2841
    %v3121 = vunpack.c.l.b16 %v2842
    %v3122 = vunpack.c.h.b16 %v2842
    %v3123 = vunpack.c.l.b16 %v2843
    %v3124 = vunpack.c.l.b16 %v2844
    %v3125 = vunpack.c.h.b16 %v2844
    %v3126 = vunpack.c.l.b16 %v2845
    %v3127 = vunpack.c.l.b16 %v2846
    %v3128 = vunpack.c.h.b16 %v2846
    %v3129 = vunpack.c.l.b16 %v2847
    %v3130 = vunpack.c.l.b16 %v2848
    %v3131 = vunpack.c.h.b16 %v2848
    %v3132 = vunpack.c.l.b16 %v2849
    %v3133 = vunpack.c.l.b16 %v2850
    %v3134 = vunpack.c.h.b16 %v2850
    %v3135 = vunpack.c.l.b16 %v2851
    %v3136 = vunpack.c.l.b16 %v2852
    %v3137 = vunpack.c.h.b16 %v2852
    %v3138 = vunpack.c.l.b16 %v2853
    %v3139 = vunpack.c.l.b16 %v2854
    %v3140 = vunpack.c.h.b16 %v2854
    %v3141 = vunpack.c.l.b16 %v2855
    %v3142 = vunpack.c.l.b16 %v2856
    %v3143 = vunpack.c.h.b16 %v2856
    %v3144 = vunpack.c.l.b16 %v2857
    %v3145 = vunpack.c.l.b16 %v2858
    %v3146 = vunpack.c.h.b16 %v2858
    %v3147 = vunpack.c.l.b16 %v2859
    %v3148 = vunpack.c.l.b16 %v2860
    %v3149 = vunpack.c.h.b16 %v2860
    %v3150 = vunpack.c.l.b16 %v2861
    %v3151 = vunpack.c.l.b16 %v2862
    %v3152 = vunpack.c.h.b16 %v2862
    %v3153 = vunpack.c.l.b16 %v2863
    %v3154 = vpack.c.b16 %v3007, %v3004
    %v3155 = vpack.c.b16 %v3008, %v3005
    %v3156 = vpack.c.b16 %v3009, %v3006
    %v3157 = vpack.c.b16 %v3013, %v3010
    %v3158 = vpack.c.b16 %v3014, %v3011
    %v3159 = vpack.c.b16 %v3015, %v3012
    %v3160 = vpack.c.b16 %v3019, %v3016
    %v3161 = vpack.c.b16 %v3020, %v3017
    %v3162 = vpack.c.b16 %v3021, %v3018
    %v3163 = vpack.c.b16 %v3025, %v3022
    %v3164 = vpack.c.b16 %v3026, %v3023
    %v3165 = vpack.c.b16 %v3027, %v3024
    %v3166 = vpack.c.b16 %v3031, %v3028
    %v3167 = vpack.c.b16 %v3032, %v3029
    %v3168 = vpack.c.b16 %v3033, %v3030
    %v3169 = vpack.c.b16 %v3037, %v3034
    %v3170 = vpack.c.b16 %v3038, %v3035
    %v3171 = vpack.c.b16 %v3039, %v3036
    %v3172 = vpack.c.b16 %v3043, %v3040
    %v3173 = vpack.c.b16 %v3044, %v3041
    %v3174 = vpack.c.b16 %v3045, %v3042
    %v3175 = vpack.c.b16 %v3049, %v3046
    %v3176 = vpack.c.b16 %v3050, %v3047
    %v3177 = vpack.c.b16 %v3051, %v3048
    %v3178 = vpack.c.b16 %v3055, %v3052
    %v3179 = vpack.c.b16 %v3056, %v3053
    %v3180 = vpack.c.b16 %v3057, %v3054
    %v3181 = vpack.c.b16 %v3061, %v3058
    %v3182 = vpack.c.b16 %v3062, %v3059
    %v3183 = vpack.c.b16 %v3063, %v3060
    %v3184 = vpack.c.b16 %v3067, %v3064
    %v3185 = vpack.c.b16 %v3068, %v3065
    %v3186 = vpack.c.b16 %v3069, %v3066
    %v3187 = vpack.c.b16 %v3073, %v3070
    %v3188 = vpack.c.b16 %v3074, %v3071
    %v3189 = vpack.c.b16 %v3075, %v3072
    %v3190 = vpack.c.b16 %v3079, %v3076
    %v3191 = vpack.c.b16 %v3080, %v3077
    %v3192 = vpack.c.b16 %v3081, %v3078
    %v3193 = vpack.c.b16 %v3085, %v3082
    %v3194 = vpack.c.b16 %v3086, %v3083
    %v3195 = vpack.c.b16 %v3087, %v3084
    %v3196 = vpack.c.b16 %v3091, %v3088
    %v3197 = vpack.c.b16 %v3092, %v3089
    %v3198 = vpack.c.b16 %v3093, %v3090
    %v3199 = vpack.c.b16 %v3097, %v3094
    %v3200 = vpack.c.b16 %v3098, %v3095
    %v3201 = vpack.c.b16 %v3099, %v3096
    %v3202 = vpack.c.b16 %v3103, %v3100
    %v3203 = vpack.c.b16 %v3104, %v3101
    %v3204 = vpack.c.b16 %v3105, %v3102
    %v3205 = vpack.c.b16 %v3109, %v3106
    %v3206 = vpack.c.b16 %v3110, %v3107
    %v3207 = vpack.c.b16 %v3111, %v3108
    %v3208 = vpack.c.b16 %v3115, %v3112
    %v3209 = vpack.c.b16 %v3116, %v3113
    %v3210 = vpack.c.b16 %v3117, %v3114
    %v3211 = vpack.c.b16 %v3121, %v3118
    %v3212 = vpack.c.b16 %v3122, %v3119
    %v3213 = vpack.c.b16 %v3123, %v3120
    %v3214 = vpack.c.b16 %v3127, %v3124
    %v3215 = vpack.c.b16 %v3128, %v3125
    %v3216 = vpack.c.b16 %v3129, %v3126
    %v3217 = vpack.c.b16 %v3133, %v3130
    %v3218 = vpack.c.b16 %v3134, %v3131
    %v3219 = vpack.c.b16 %v3135, %v3132
    %v3220 = vpack.c.b16 %v3139, %v3136
    %v3221 = vpack.c.b16 %v3140, %v3137
    %v3222 = vpack.c.b16 %v3141, %v3138
    %v3223 = vpack.c.b16 %v3145, %v3142
    %v3224 = vpack.c.b16 %v3146, %v3143
    %v3225 = vpack.c.b16 %v3147, %v3144
    %v3226 = vpack.c.b16 %v3151, %v3148
    %v3227 = vpack.c.b16 %v3152, %v3149
    %v3228 = vpack.c.b16 %v3153, %v3150
    %v3305 = vsel %vm2351, %v2896, 0
    %3307 = vmatprep.subr.bf16.mxu0 %v3155
    %3308 = vmatpush1.bf16.msra.mxu0 %v3154
    %3309 = vmatprep.subr.bf16.mxu0 %v3158
    %3310 = vmatpush1.bf16.msra.mxu0 %v3157
    %3311 = vmatprep.subr.bf16.mxu0 %v3161
    %3312 = vmatpush1.bf16.msra.mxu0 %v3160
    %3313 = vmatprep.subr.bf16.mxu0 %v3164
    %3314 = vmatpush1.bf16.msra.mxu0 %v3163
    %3315 = vmatprep.subr.bf16.mxu0 %v3167
    %3316 = vmatpush1.bf16.msra.mxu0 %v3166
    %3317 = vmatprep.subr.bf16.mxu0 %v3170
    %3318 = vmatpush1.bf16.msra.mxu0 %v3169
    %3319 = vmatprep.subr.bf16.mxu0 %v3173
    %3320 = vmatpush1.bf16.msra.mxu0 %v3172
    %3321 = vmatprep.subr.bf16.mxu0 %v3176
    %3322 = vmatpush1.bf16.msra.mxu0 %v3175
    %3323 = vmatprep.subr.bf16.mxu0 %v3179
    %3324 = vmatpush1.bf16.msra.mxu0 %v3178
    %3325 = vmatprep.subr.bf16.mxu0 %v3182
    %3326 = vmatpush1.bf16.msra.mxu0 %v3181
    %3327 = vmatprep.subr.bf16.mxu0 %v3185
    %3328 = vmatpush1.bf16.msra.mxu0 %v3184
    %3329 = vmatprep.subr.bf16.mxu0 %v3188
    %3330 = vmatpush1.bf16.msra.mxu0 %v3187
    %3331 = vmatprep.subr.bf16.mxu0 %v3191
    %3332 = vmatpush1.bf16.msra.mxu0 %v3190
    %3333 = vmatprep.subr.bf16.mxu0 %v3194
    %3334 = vmatpush1.bf16.msra.mxu0 %v3193
    %3335 = vmatprep.subr.bf16.mxu0 %v3197
    %3336 = vmatpush1.bf16.msra.mxu0 %v3196
    %3337 = vmatprep.subr.bf16.mxu0 %v3200
    %3338 = vmatpush1.bf16.msra.mxu0 %v3199
    %3339 = vmatprep.mubr.bf16.mxu0 %v2899
    %3340 = vmatmul.mubr.bf16.gmra.mrb[0].mxu0 %v2898
    %v3341 = vpop.f32.mrb[0].mxu0
    %v3342 = vadd.f32 %v2873, %v3341
    %v3343 = vpop.f32.mrb[0].mxu0
    %v3344 = vadd.f32 %v2877, %v3343
    %v3345 = vpop.f32.mrb[0].mxu0
    %v3346 = vpop.f32.mrb[0].mxu0
    %3347 = vdwg.mxu0
    %3348 = vmatprep.subr.bf16.mxu0 %v3203
    %3349 = vmatpush1.bf16.msra.mxu0 %v3202
    %3350 = vmatprep.subr.bf16.mxu0 %v3206
    %3351 = vmatpush1.bf16.msra.mxu0 %v3205
    %3352 = vmatprep.subr.bf16.mxu0 %v3209
    %3353 = vmatpush1.bf16.msra.mxu0 %v3208
    %3354 = vmatprep.subr.bf16.mxu0 %v3212
    %3355 = vmatpush1.bf16.msra.mxu0 %v3211
    %3356 = vmatprep.subr.bf16.mxu0 %v3215
    %3357 = vmatpush1.bf16.msra.mxu0 %v3214
    %3358 = vmatprep.subr.bf16.mxu0 %v3218
    %3359 = vmatpush1.bf16.msra.mxu0 %v3217
    %3360 = vmatprep.subr.bf16.mxu0 %v3221
    %3361 = vmatpush1.bf16.msra.mxu0 %v3220
    %3362 = vmatprep.subr.bf16.mxu0 %v3224
    %3363 = vmatpush1.bf16.msra.mxu0 %v3223
    %3364 = vmatprep.subr.bf16.mxu0 %v3227
    %3365 = vmatpush1.bf16.msra.mxu0 %v3226
    %3366 = vmatprep.subr.bf16.mxu0 0
    %3367 = vmatpush1.bf16.msra.mxu0 0
    %3368 = vmatprep.subr.bf16.mxu0 0
    %3369 = vmatpush1.bf16.msra.mxu0 0
    %3370 = vmatprep.subr.bf16.mxu0 0
    %3371 = vmatpush1.bf16.msra.mxu0 0
    %3372 = vmatprep.subr.bf16.mxu0 0
    %3373 = vmatpush1.bf16.msra.mxu0 0
    %3374 = vmatprep.subr.bf16.mxu0 0
    %3375 = vmatpush1.bf16.msra.mxu0 0
    %3376 = vmatprep.subr.bf16.mxu0 0
    %3377 = vmatpush1.bf16.msra.mxu0 0
    %3378 = vmatprep.subr.bf16.mxu0 0
    %3379 = vmatpush1.bf16.msra.mxu0 0
    %3380 = vmatprep.mubr.bf16.mxu0 %v3305
    %3381 = vmatmul.mubr.bf16.gmra.mrb[0].mxu0 %v2900
    %v3382 = vpop.f32.mrb[0].mxu0
    %v3383 = vadd.f32 %v3342, %v3382
    %v3384 = vpop.f32.mrb[0].mxu0
    %v3385 = vadd.f32 %v3344, %v3384
    %v3386 = vpop.f32.mrb[0].mxu0
    %v3387 = vpop.f32.mrb[0].mxu0
    %3388 = vdwg.mxu0
    %3389 = vmatprep.subr.bf16.mxu0 0
    %3390 = vmatpush1.bf16.msra.mxu0 %v3156
    %3391 = vmatprep.subr.bf16.mxu0 0
    %3392 = vmatpush1.bf16.msra.mxu0 %v3159
    %3393 = vmatprep.subr.bf16.mxu0 0
    %3394 = vmatpush1.bf16.msra.mxu0 %v3162
    %3395 = vmatprep.subr.bf16.mxu0 0
    %3396 = vmatpush1.bf16.msra.mxu0 %v3165
    %3397 = vmatprep.subr.bf16.mxu0 0
    %3398 = vmatpush1.bf16.msra.mxu0 %v3168
    %3399 = vmatprep.subr.bf16.mxu0 0
    %3400 = vmatpush1.bf16.msra.mxu0 %v3171
    %3401 = vmatprep.subr.bf16.mxu0 0
    %3402 = vmatpush1.bf16.msra.mxu0 %v3174
    %3403 = vmatprep.subr.bf16.mxu0 0
    %3404 = vmatpush1.bf16.msra.mxu0 %v3177
    %3405 = vmatprep.subr.bf16.mxu0 0
    %3406 = vmatpush1.bf16.msra.mxu0 %v3180
    %3407 = vmatprep.subr.bf16.mxu0 0
    %3408 = vmatpush1.bf16.msra.mxu0 %v3183
    %3409 = vmatprep.subr.bf16.mxu0 0
    %3410 = vmatpush1.bf16.msra.mxu0 %v3186
    %3411 = vmatprep.subr.bf16.mxu0 0
    %3412 = vmatpush1.bf16.msra.mxu0 %v3189
    %3413 = vmatprep.subr.bf16.mxu0 0
    %3414 = vmatpush1.bf16.msra.mxu0 %v3192
    %3415 = vmatprep.subr.bf16.mxu0 0
    %3416 = vmatpush1.bf16.msra.mxu0 %v3195
    %3417 = vmatprep.subr.bf16.mxu0 0
    %3418 = vmatpush1.bf16.msra.mxu0 %v3198
    %3419 = vmatprep.subr.bf16.mxu0 0
    %3420 = vmatpush1.bf16.msra.mxu0 %v3201
    %3421 = vmatprep.mubr.bf16.mxu0 %v2899
    %3422 = vmatmul.mubr.bf16.gmra.mrb[0].mxu0 %v2898
    %v3423 = vpop.f32.mrb[0].mxu0
    %v3424 = vadd.f32 %v2881, %v3423
    %v3425 = vpop.f32.mrb[0].mxu0
    %v3426 = vpop.f32.mrb[0].mxu0
    %v3427 = vpop.f32.mrb[0].mxu0
    %3428 = vdwg.mxu0
    %3429 = vmatprep.subr.bf16.mxu0 0
    %3430 = vmatpush1.bf16.msra.mxu0 %v3204
    %3431 = vmatprep.subr.bf16.mxu0 0
    %3432 = vmatpush1.bf16.msra.mxu0 %v3207
    %3433 = vmatprep.subr.bf16.mxu0 0
    %3434 = vmatpush1.bf16.msra.mxu0 %v3210
    %3435 = vmatprep.subr.bf16.mxu0 0
    %3436 = vmatpush1.bf16.msra.mxu0 %v3213
    %3437 = vmatprep.subr.bf16.mxu0 0
    %3438 = vmatpush1.bf16.msra.mxu0 %v3216
    %3439 = vmatprep.subr.bf16.mxu0 0
    %3440 = vmatpush1.bf16.msra.mxu0 %v3219
    %3441 = vmatprep.subr.bf16.mxu0 0
    %3442 = vmatpush1.bf16.msra.mxu0 %v3222
    %3443 = vmatprep.subr.bf16.mxu0 0
    %3444 = vmatpush1.bf16.msra.mxu0 %v3225
    %3445 = vmatprep.subr.bf16.mxu0 0
    %3446 = vmatpush1.bf16.msra.mxu0 %v3228
    %3447 = vmatprep.subr.bf16.mxu0 0
    %3448 = vmatpush1.bf16.msra.mxu0 0
    %3449 = vmatprep.subr.bf16.mxu0 0
    %3450 = vmatpush1.bf16.msra.mxu0 0
    %3451 = vmatprep.subr.bf16.mxu0 0
    %3452 = vmatpush1.bf16.msra.mxu0 0
    %3453 = vmatprep.subr.bf16.mxu0 0
    %3454 = vmatpush1.bf16.msra.mxu0 0
    %3455 = vmatprep.subr.bf16.mxu0 0
    %3456 = vmatpush1.bf16.msra.mxu0 0
    %3457 = vmatprep.subr.bf16.mxu0 0
    %3458 = vmatpush1.bf16.msra.mxu0 0
    %3459 = vmatprep.subr.bf16.mxu0 0
    %3460 = vmatpush1.bf16.msra.mxu0 0
    %3461 = vmatprep.mubr.bf16.mxu0 %v3305
    %3462 = vmatmul.mubr.bf16.gmra.mrb[0].mxu0 %v2900
    %v3463 = vpop.f32.mrb[0].mxu0
    %v3464 = vadd.f32 %v3424, %v3463
    %v3465 = vpop.f32.mrb[0].mxu0
    %v3466 = vpop.f32.mrb[0].mxu0
    %v3467 = vpop.f32.mrb[0].mxu0
    %3468 = vdwg.mxu0
    %v3469 = vmax.f32 %v3383, 0.0
    %v3470 = vmax.f32 %v3385, 0.0
    %v3471 = vmax.f32 %v3464, 0.0
    %s3472 = scalar_lea.vmem [#allocation11], 152
    %v3473 = vld [vmem:[%s3472] sm:$0xf]
    %v3474 = vld [vmem:[%s3472 + $0x4] sm:$0xf]
    %v3475 = vld [vmem:[%s3472 + $0x8] sm:$0xf]
    %v3476 = vld [vmem:[%s3472 + $0xc] sm:$0xf]
    %v3477 = vld [vmem:[%s3472 + $0x10] sm:$0xf]
    %v3478 = vld [vmem:[%s3472 + $0x14] sm:$0xf]
    %v3479 = vld [vmem:[%s3472 + $0x18] sm:$0xf]
    %v3480 = vld [vmem:[%s3472 + $0x1c] sm:$0xf]
    %v3481 = vld [vmem:[%s3472 + $0x20] sm:$0xf]
    %v3482 = vld [vmem:[%s3472 + $0x24] sm:$0xf]
    %v3483 = vld [vmem:[%s3472 + $0x28] sm:$0xf]
    %v3484 = vld [vmem:[%s3472 + $0x2c] sm:$0xf]
    %v3485 = vld [vmem:[%s3472 + $0x30] sm:$0xf]
    %v3486 = vld [vmem:[%s3472 + $0x34] sm:$0xf]
    %v3487 = vld [vmem:[%s3472 + $0x38] sm:$0xf]
    %v3488 = vld [vmem:[%s3472 + $0x3c] sm:$0xf]
    %v3489 = vld [vmem:[%s3472 + $0x40] sm:$0xf]
    %v3490 = vld [vmem:[%s3472 + $0x44] sm:$0xf]
    %v3491 = vld [vmem:[%s3472 + $0x48] sm:$0xf]
    %v3492 = vld [vmem:[%s3472 + $0x4c] sm:$0xf]
    %v3493 = vld [vmem:[%s3472 + $0x50] sm:$0xf]
    %v3494 = vld [vmem:[%s3472 + $0x54] sm:$0xf]
    %v3495 = vld [vmem:[%s3472 + $0x58] sm:$0xf]
    %v3496 = vld [vmem:[%s3472 + $0x5c] sm:$0xf]
    %v3497 = vld [vmem:[%s3472 + $0x60] sm:$0xf]
    %v3498 = vld [vmem:[%s3472 + $0x64] sm:$0xf]
    %v3499 = vld [vmem:[%s3472 + $0x68] sm:$0xf]
    %v3500 = vld [vmem:[%s3472 + $0x6c] sm:$0xf]
    %v3501 = vld [vmem:[%s3472 + $0x70] sm:$0xf]
    %v3502 = vld [vmem:[%s3472 + $0x74] sm:$0xf]
    %v3503 = vld [vmem:[%s3472 + $0x78] sm:$0xf]
    %v3504 = vld [vmem:[%s3472 + $0x7c] sm:$0xf]
    %v3505 = vld [vmem:[%s3472 + $0x80] sm:$0xf]
    %v3506 = vld [vmem:[%s3472 + $0x84] sm:$0xf]
    %v3507 = vld [vmem:[%s3472 + $0x88] sm:$0xf]
    %v3508 = vld [vmem:[%s3472 + $0x8c] sm:$0xf]
    %v3509 = vld [vmem:[%s3472 + $0x90] sm:$0xf]
    %v3510 = vld [vmem:[%s3472 + $0x94] sm:$0x3]
    %v3511 = vpack.c.bf16 %v3469, %v3469
    %v3512 = vpack.c.bf16 %v3470, %v3470
    %v3513 = vpack.c.bf16 %v3471, %v3471
    %v3552 = vunpack.c.l.b16 %v3473
    %v3553 = vunpack.c.l.b16 %v3474
    %v3554 = vunpack.c.l.b16 %v3475
    %v3555 = vunpack.c.l.b16 %v3476
    %v3556 = vunpack.c.l.b16 %v3477
    %v3557 = vunpack.c.l.b16 %v3478
    %v3558 = vunpack.c.l.b16 %v3479
    %v3559 = vunpack.c.l.b16 %v3480
    %v3560 = vunpack.c.l.b16 %v3481
    %v3561 = vunpack.c.l.b16 %v3482
    %v3562 = vunpack.c.l.b16 %v3483
    %v3563 = vunpack.c.l.b16 %v3484
    %v3564 = vunpack.c.l.b16 %v3485
    %v3565 = vunpack.c.l.b16 %v3486
    %v3566 = vunpack.c.l.b16 %v3487
    %v3567 = vunpack.c.l.b16 %v3488
    %v3568 = vunpack.c.l.b16 %v3489
    %v3569 = vunpack.c.l.b16 %v3490
    %v3570 = vunpack.c.l.b16 %v3491
    %v3571 = vunpack.c.l.b16 %v3492
    %v3572 = vunpack.c.l.b16 %v3493
    %v3573 = vunpack.c.l.b16 %v3494
    %v3574 = vunpack.c.l.b16 %v3495
    %v3575 = vunpack.c.l.b16 %v3496
    %v3576 = vunpack.c.l.b16 %v3497
    %v3577 = vunpack.c.l.b16 %v3498
    %v3578 = vunpack.c.l.b16 %v3499
    %v3579 = vunpack.c.l.b16 %v3500
    %v3580 = vunpack.c.l.b16 %v3501
    %v3581 = vunpack.c.l.b16 %v3502
    %v3582 = vunpack.c.l.b16 %v3503
    %v3583 = vunpack.c.l.b16 %v3504
    %v3584 = vunpack.c.l.b16 %v3505
    %v3585 = vunpack.c.l.b16 %v3506
    %v3586 = vunpack.c.l.b16 %v3507
    %v3587 = vunpack.c.l.b16 %v3508
    %v3588 = vunpack.c.l.b16 %v3509
    %v3589 = vunpack.c.l.b16 %v3510
    %v3590 = vpack.c.b16 %v3553, %v3552
    %v3591 = vpack.c.b16 %v3555, %v3554
    %v3592 = vpack.c.b16 %v3557, %v3556
    %v3593 = vpack.c.b16 %v3559, %v3558
    %v3594 = vpack.c.b16 %v3561, %v3560
    %v3595 = vpack.c.b16 %v3563, %v3562
    %v3596 = vpack.c.b16 %v3565, %v3564
    %v3597 = vpack.c.b16 %v3567, %v3566
    %v3598 = vpack.c.b16 %v3569, %v3568
    %v3599 = vpack.c.b16 %v3571, %v3570
    %v3600 = vpack.c.b16 %v3573, %v3572
    %v3601 = vpack.c.b16 %v3575, %v3574
    %v3602 = vpack.c.b16 %v3577, %v3576
    %v3603 = vpack.c.b16 %v3579, %v3578
    %v3604 = vpack.c.b16 %v3581, %v3580
    %v3605 = vpack.c.b16 %v3583, %v3582
    %v3606 = vpack.c.b16 %v3585, %v3584
    %v3607 = vpack.c.b16 %v3587, %v3586
    %v3608 = vpack.c.b16 %v3589, %v3588
    %v3628 = vsel %vm2674, %v3513, 0
    %v3631 = vsel %vm2678, %v3608, 0
    %3633 = vmatprep.subr.bf16.mxu0 0
    %3634 = vmatpush1.bf16.msra.mxu0 %v3590
    %3635 = vmatprep.subr.bf16.mxu0 0
    %3636 = vmatpush1.bf16.msra.mxu0 %v3591
    %3637 = vmatprep.subr.bf16.mxu0 0
    %3638 = vmatpush1.bf16.msra.mxu0 %v3592
    %3639 = vmatprep.subr.bf16.mxu0 0
    %3640 = vmatpush1.bf16.msra.mxu0 %v3593
    %3641 = vmatprep.subr.bf16.mxu0 0
    %3642 = vmatpush1.bf16.msra.mxu0 %v3594
    %3643 = vmatprep.subr.bf16.mxu0 0
    %3644 = vmatpush1.bf16.msra.mxu0 %v3595
    %3645 = vmatprep.subr.bf16.mxu0 0
    %3646 = vmatpush1.bf16.msra.mxu0 %v3596
    %3647 = vmatprep.subr.bf16.mxu0 0
    %3648 = vmatpush1.bf16.msra.mxu0 %v3597
    %3649 = vmatprep.subr.bf16.mxu0 0
    %3650 = vmatpush1.bf16.msra.mxu0 %v3598
    %3651 = vmatprep.subr.bf16.mxu0 0
    %3652 = vmatpush1.bf16.msra.mxu0 %v3599
    %3653 = vmatprep.subr.bf16.mxu0 0
    %3654 = vmatpush1.bf16.msra.mxu0 %v3600
    %3655 = vmatprep.subr.bf16.mxu0 0
    %3656 = vmatpush1.bf16.msra.mxu0 %v3601
    %3657 = vmatprep.subr.bf16.mxu0 0
    %3658 = vmatpush1.bf16.msra.mxu0 %v3602
    %3659 = vmatprep.subr.bf16.mxu0 0
    %3660 = vmatpush1.bf16.msra.mxu0 %v3603
    %3661 = vmatprep.subr.bf16.mxu0 0
    %3662 = vmatpush1.bf16.msra.mxu0 %v3604
    %3663 = vmatprep.subr.bf16.mxu0 0
    %3664 = vmatpush1.bf16.msra.mxu0 %v3605
    %3665 = vmatprep.mubr.bf16.mxu0 %v3512
    %3666 = vmatmul.mubr.bf16.gmra.mrb[0].mxu0 %v3511
    %v3667 = vpop.f32.mrb[0].mxu0
    %v3668 = vadd.f32 0.0, %v3667
    %v3669 = vpop.f32.mrb[0].mxu0
    %v3670 = vpop.f32.mrb[0].mxu0
    %v3671 = vpop.f32.mrb[0].mxu0
    %3672 = vdwg.mxu0
    %3673 = vmatprep.subr.bf16.mxu0 0
    %3674 = vmatpush1.bf16.msra.mxu0 %v3606
    %3675 = vmatprep.subr.bf16.mxu0 0
    %3676 = vmatpush1.bf16.msra.mxu0 %v3607
    %3677 = vmatprep.subr.bf16.mxu0 0
    %3678 = vmatpush1.bf16.msra.mxu0 %v3631
    %3679 = vmatprep.subr.bf16.mxu0 0
    %3680 = vmatpush1.bf16.msra.mxu0 0
    %3681 = vmatprep.subr.bf16.mxu0 0
    %3682 = vmatpush1.bf16.msra.mxu0 0
    %3683 = vmatprep.subr.bf16.mxu0 0
    %3684 = vmatpush1.bf16.msra.mxu0 0
    %3685 = vmatprep.subr.bf16.mxu0 0
    %3686 = vmatpush1.bf16.msra.mxu0 0
    %3687 = vmatprep.subr.bf16.mxu0 0
    %3688 = vmatpush1.bf16.msra.mxu0 0
    %3689 = vmatprep.subr.bf16.mxu0 0
    %3690 = vmatpush1.bf16.msra.mxu0 0
    %3691 = vmatprep.subr.bf16.mxu0 0
    %3692 = vmatpush1.bf16.msra.mxu0 0
    %3693 = vmatprep.subr.bf16.mxu0 0
    %3694 = vmatpush1.bf16.msra.mxu0 0
    %3695 = vmatprep.subr.bf16.mxu0 0
    %3696 = vmatpush1.bf16.msra.mxu0 0
    %3697 = vmatprep.subr.bf16.mxu0 0
    %3698 = vmatpush1.bf16.msra.mxu0 0
    %3699 = vmatprep.subr.bf16.mxu0 0
    %3700 = vmatpush1.bf16.msra.mxu0 0
    %3701 = vmatprep.subr.bf16.mxu0 0
    %3702 = vmatpush1.bf16.msra.mxu0 0
    %3703 = vmatprep.subr.bf16.mxu0 0
    %3704 = vmatpush1.bf16.msra.mxu0 0
    %3705 = vmatprep.mubr.bf16.mxu0 0
    %3706 = vmatmul.mubr.bf16.gmra.mrb[0].mxu0 %v3628
    %v3707 = vpop.f32.mrb[0].mxu0
    %v3708 = vadd.f32 %v3668, %v3707
    %v3709 = vpop.f32.mrb[0].mxu0
    %v3710 = vpop.f32.mrb[0].mxu0
    %v3711 = vpop.f32.mrb[0].mxu0
    %3712 = vdwg.mxu0
    %v3713 = vadd.f32 %v2762, %v3708
    %s3714 = scalar_lea.vmem [#allocation10], 1200
    %v3715 = vld [vmem:[%s3714] sm:$0xff]
    %v3716 = vld [vmem:[%s3714 + $0x8] sm:$0xf]
    %v3717 = vld [vmem:[%s3714 + $0xc] sm:$0xff]
    %v3718 = vld [vmem:[%s3714 + $0x14] sm:$0xf]
    %v3719 = vld [vmem:[%s3714 + $0x18] sm:$0xff]
    %v3720 = vld [vmem:[%s3714 + $0x20] sm:$0xf]
    %v3721 = vld [vmem:[%s3714 + $0x24] sm:$0xff]
    %v3722 = vld [vmem:[%s3714 + $0x2c] sm:$0xf]
    %v3723 = vld [vmem:[%s3714 + $0x30] sm:$0xff]
    %v3724 = vld [vmem:[%s3714 + $0x38] sm:$0xf]
    %v3725 = vld [vmem:[%s3714 + $0x3c] sm:$0xff]
    %v3726 = vld [vmem:[%s3714 + $0x44] sm:$0xf]
    %v3727 = vld [vmem:[%s3714 + $0x48] sm:$0xff]
    %v3728 = vld [vmem:[%s3714 + $0x50] sm:$0xf]
    %v3729 = vld [vmem:[%s3714 + $0x54] sm:$0xff]
    %v3730 = vld [vmem:[%s3714 + $0x5c] sm:$0xf]
    %v3731 = vld [vmem:[%s3714 + $0x60] sm:$0xff]
    %v3732 = vld [vmem:[%s3714 + $0x68] sm:$0xf]
    %v3733 = vld [vmem:[%s3714 + $0x6c] sm:$0xff]
    %v3734 = vld [vmem:[%s3714 + $0x74] sm:$0xf]
    %v3735 = vld [vmem:[%s3714 + $0x78] sm:$0xff]
    %v3736 = vld [vmem:[%s3714 + $0x80] sm:$0xf]
    %v3737 = vld [vmem:[%s3714 + $0x84] sm:$0xff]
    %v3738 = vld [vmem:[%s3714 + $0x8c] sm:$0xf]
    %v3739 = vld [vmem:[%s3714 + $0x90] sm:$0xff]
    %v3740 = vld [vmem:[%s3714 + $0x98] sm:$0xf]
    %v3741 = vld [vmem:[%s3714 + $0x9c] sm:$0xff]
    %v3742 = vld [vmem:[%s3714 + $0xa4] sm:$0xf]
    %v3743 = vld [vmem:[%s3714 + $0xa8] sm:$0xff]
    %v3744 = vld [vmem:[%s3714 + $0xb0] sm:$0xf]
    %v3745 = vld [vmem:[%s3714 + $0xb4] sm:$0xff]
    %v3746 = vld [vmem:[%s3714 + $0xbc] sm:$0xf]
    %v3747 = vld [vmem:[%s3714 + $0xc0] sm:$0xff]
    %v3748 = vld [vmem:[%s3714 + $0xc8] sm:$0xf]
    %v3749 = vld [vmem:[%s3714 + $0xcc] sm:$0xff]
    %v3750 = vld [vmem:[%s3714 + $0xd4] sm:$0xf]
    %v3751 = vld [vmem:[%s3714 + $0xd8] sm:$0xff]
    %v3752 = vld [vmem:[%s3714 + $0xe0] sm:$0xf]
    %v3753 = vld [vmem:[%s3714 + $0xe4] sm:$0xff]
    %v3754 = vld [vmem:[%s3714 + $0xec] sm:$0xf]
    %v3755 = vld [vmem:[%s3714 + $0xf0] sm:$0xff]
    %v3756 = vld [vmem:[%s3714 + $0xf8] sm:$0xf]
    %v3757 = vld [vmem:[%s3714 + $0xfc] sm:$0xff]
    %v3758 = vld [vmem:[%s3714 + $0x104] sm:$0xf]
    %v3759 = vld [vmem:[%s3714 + $0x108] sm:$0xff]
    %v3760 = vld [vmem:[%s3714 + $0x110] sm:$0xf]
    %v3761 = vld [vmem:[%s3714 + $0x114] sm:$0xff]
    %v3762 = vld [vmem:[%s3714 + $0x11c] sm:$0xf]
    %v3763 = vld [vmem:[%s3714 + $0x120] sm:$0xff]
    %v3764 = vld [vmem:[%s3714 + $0x128] sm:$0xf]
    %v3765 = vld [vmem:[%s3714 + $0x12c] sm:$0xff]
    %v3766 = vld [vmem:[%s3714 + $0x134] sm:$0xf]
    %v3767 = vld [vmem:[%s3714 + $0x138] sm:$0xff]
    %v3768 = vld [vmem:[%s3714 + $0x140] sm:$0xf]
    %v3769 = vld [vmem:[%s3714 + $0x144] sm:$0xff]
    %v3770 = vld [vmem:[%s3714 + $0x14c] sm:$0xf]
    %v3771 = vld [vmem:[%s3714 + $0x150] sm:$0xff]
    %v3772 = vld [vmem:[%s3714 + $0x158] sm:$0xf]
    %v3773 = vld [vmem:[%s3714 + $0x15c] sm:$0xff]
    %v3774 = vld [vmem:[%s3714 + $0x164] sm:$0xf]
    %v3775 = vld [vmem:[%s3714 + $0x168] sm:$0xff]
    %v3776 = vld [vmem:[%s3714 + $0x170] sm:$0xf]
    %v3777 = vld [vmem:[%s3714 + $0x174] sm:$0xff]
    %v3778 = vld [vmem:[%s3714 + $0x17c] sm:$0xf]
    %v3779 = vld [vmem:[%s3714 + $0x180] sm:$0xff]
    %v3780 = vld [vmem:[%s3714 + $0x188] sm:$0xf]
    %v3781 = vld [vmem:[%s3714 + $0x18c] sm:$0xff]
    %v3782 = vld [vmem:[%s3714 + $0x194] sm:$0xf]
    %v3783 = vld [vmem:[%s3714 + $0x198] sm:$0xff]
    %v3784 = vld [vmem:[%s3714 + $0x1a0] sm:$0xf]
    %v3785 = vld [vmem:[%s3714 + $0x1a4] sm:$0xff]
    %v3786 = vld [vmem:[%s3714 + $0x1ac] sm:$0xf]
    %v3787 = vld [vmem:[%s3714 + $0x1b0] sm:$0xff]
    %v3788 = vld [vmem:[%s3714 + $0x1b8] sm:$0xf]
    %v3789 = vld [vmem:[%s3714 + $0x1bc] sm:$0xff]
    %v3790 = vld [vmem:[%s3714 + $0x1c4] sm:$0xf]
    %v3791 = vld [vmem:[%s3714 + $0x1c8] sm:$0xff]
    %v3792 = vld [vmem:[%s3714 + $0x1d0] sm:$0xf]
    %v3793 = vld [vmem:[%s3714 + $0x1d4] sm:$0xff]
    %v3794 = vld [vmem:[%s3714 + $0x1dc] sm:$0xf]
    %v3795 = vld [vmem:[%s3714 + $0x1e0] sm:$0xff]
    %v3796 = vld [vmem:[%s3714 + $0x1e8] sm:$0xf]
    %v3797 = vld [vmem:[%s3714 + $0x1ec] sm:$0xff]
    %v3798 = vld [vmem:[%s3714 + $0x1f4] sm:$0xf]
    %v3799 = vld [vmem:[%s3714 + $0x1f8] sm:$0xff]
    %v3800 = vld [vmem:[%s3714 + $0x200] sm:$0xf]
    %v3801 = vld [vmem:[%s3714 + $0x204] sm:$0xff]
    %v3802 = vld [vmem:[%s3714 + $0x20c] sm:$0xf]
    %v3803 = vld [vmem:[%s3714 + $0x210] sm:$0xff]
    %v3804 = vld [vmem:[%s3714 + $0x218] sm:$0xf]
    %v3805 = vld [vmem:[%s3714 + $0x21c] sm:$0xff]
    %v3806 = vld [vmem:[%s3714 + $0x224] sm:$0xf]
    %v3807 = vld [vmem:[%s3714 + $0x228] sm:$0xff]
    %v3808 = vld [vmem:[%s3714 + $0x230] sm:$0xf]
    %v3809 = vld [vmem:[%s3714 + $0x234] sm:$0xff]
    %v3810 = vld [vmem:[%s3714 + $0x23c] sm:$0xf]
    %v3811 = vld [vmem:[%s3714 + $0x240] sm:$0xff]
    %v3812 = vld [vmem:[%s3714 + $0x248] sm:$0xf]
    %v3813 = vld [vmem:[%s3714 + $0x24c] sm:$0xff]
    %v3814 = vld [vmem:[%s3714 + $0x254] sm:$0xf]
    %v3815 = vpack.c.bf16 %v1820, %v1820
    %v3816 = vpack.c.bf16 %v1821, %v1821
    %v3817 = vpack.c.bf16 %v1822, %v1822
    %s3818 = scalar_lea.vmem %s7, 6
    %v3819 = vld [vmem:[%s3818] sm:$0x7]
    %v3821 = vlaneseq
    %v3822 = vshrl.u32 %v3821, 7
    %v3823 = vsub.s32 0, %v3822
    %v3824 = vrot.slane %v3819, %v3823
    %v3825 = vlaneseq
    %v3826 = vshrl.u32 %v3825, 7
    %v3827 = vsub.s32 1, %v3826
    %v3828 = vrot.slane %v3819, %v3827
    %v3829 = vlaneseq
    %v3830 = vshrl.u32 %v3829, 7
    %v3831 = vsub.s32 2, %v3830
    %v3832 = vrot.slane %v3819, %v3831
    %3839 = vrot.lane.b32.xlu0 %v2866, 96
    %v3840 = vpop.permute.xlu0 %3839
    %3841 = vrot.lane.b32.xlu0 %v3815, 96
    %v3842 = vpop.permute.xlu0 %3841
    %3843 = vrot.lane.b32.xlu0 %v3816, 96
    %v3844 = vpop.permute.xlu0 %3843
    %3845 = vrot.lane.b32.xlu0 %v3817, 96
    %v3846 = vpop.permute.xlu0 %3845
    %vm3847 = vcmask 785408
    %v3848 = vsel %vm3847, %v3840, %v3842
    %v3849 = vsel %vm3847, %v3842, %v3844
    %v3850 = vsel %vm3847, %v3844, %v3846
    %v3954 = vunpack.c.l.b16 %v3715
    %v3955 = vunpack.c.h.b16 %v3715
    %v3956 = vunpack.c.l.b16 %v3716
    %v3957 = vunpack.c.l.b16 %v3717
    %v3958 = vunpack.c.h.b16 %v3717
    %v3959 = vunpack.c.l.b16 %v3718
    %v3960 = vunpack.c.l.b16 %v3719
    %v3961 = vunpack.c.h.b16 %v3719
    %v3962 = vunpack.c.l.b16 %v3720
    %v3963 = vunpack.c.l.b16 %v3721
    %v3964 = vunpack.c.h.b16 %v3721
    %v3965 = vunpack.c.l.b16 %v3722
    %v3966 = vunpack.c.l.b16 %v3723
    %v3967 = vunpack.c.h.b16 %v3723
    %v3968 = vunpack.c.l.b16 %v3724
    %v3969 = vunpack.c.l.b16 %v3725
    %v3970 = vunpack.c.h.b16 %v3725
    %v3971 = vunpack.c.l.b16 %v3726
    %v3972 = vunpack.c.l.b16 %v3727
    %v3973 = vunpack.c.h.b16 %v3727
    %v3974 = vunpack.c.l.b16 %v3728
    %v3975 = vunpack.c.l.b16 %v3729
    %v3976 = vunpack.c.h.b16 %v3729
    %v3977 = vunpack.c.l.b16 %v3730
    %v3978 = vunpack.c.l.b16 %v3731
    %v3979 = vunpack.c.h.b16 %v3731
    %v3980 = vunpack.c.l.b16 %v3732
    %v3981 = vunpack.c.l.b16 %v3733
    %v3982 = vunpack.c.h.b16 %v3733
    %v3983 = vunpack.c.l.b16 %v3734
    %v3984 = vunpack.c.l.b16 %v3735
    %v3985 = vunpack.c.h.b16 %v3735
    %v3986 = vunpack.c.l.b16 %v3736
    %v3987 = vunpack.c.l.b16 %v3737
    %v3988 = vunpack.c.h.b16 %v3737
    %v3989 = vunpack.c.l.b16 %v3738
    %v3990 = vunpack.c.l.b16 %v3739
    %v3991 = vunpack.c.h.b16 %v3739
    %v3992 = vunpack.c.l.b16 %v3740
    %v3993 = vunpack.c.l.b16 %v3741
    %v3994 = vunpack.c.h.b16 %v3741
    %v3995 = vunpack.c.l.b16 %v3742
    %v3996 = vunpack.c.l.b16 %v3743
    %v3997 = vunpack.c.h.b16 %v3743
    %v3998 = vunpack.c.l.b16 %v3744
    %v3999 = vunpack.c.l.b16 %v3745
    %v4000 = vunpack.c.h.b16 %v3745
    %v4001 = vunpack.c.l.b16 %v3746
    %v4002 = vunpack.c.l.b16 %v3747
    %v4003 = vunpack.c.h.b16 %v3747
    %v4004 = vunpack.c.l.b16 %v3748
    %v4005 = vunpack.c.l.b16 %v3749
    %v4006 = vunpack.c.h.b16 %v3749
    %v4007 = vunpack.c.l.b16 %v3750
    %v4008 = vunpack.c.l.b16 %v3751
    %v4009 = vunpack.c.h.b16 %v3751
    %v4010 = vunpack.c.l.b16 %v3752
    %v4011 = vunpack.c.l.b16 %v3753
    %v4012 = vunpack.c.h.b16 %v3753
    %v4013 = vunpack.c.l.b16 %v3754
    %v4014 = vunpack.c.l.b16 %v3755
    %v4015 = vunpack.c.h.b16 %v3755
    %v4016 = vunpack.c.l.b16 %v3756
    %v4017 = vunpack.c.l.b16 %v3757
    %v4018 = vunpack.c.h.b16 %v3757
    %v4019 = vunpack.c.l.b16 %v3758
    %v4020 = vunpack.c.l.b16 %v3759
    %v4021 = vunpack.c.h.b16 %v3759
    %v4022 = vunpack.c.l.b16 %v3760
    %v4023 = vunpack.c.l.b16 %v3761
    %v4024 = vunpack.c.h.b16 %v3761
    %v4025 = vunpack.c.l.b16 %v3762
    %v4026 = vunpack.c.l.b16 %v3763
    %v4027 = vunpack.c.h.b16 %v3763
    %v4028 = vunpack.c.l.b16 %v3764
    %v4029 = vunpack.c.l.b16 %v3765
    %v4030 = vunpack.c.h.b16 %v3765
    %v4031 = vunpack.c.l.b16 %v3766
    %v4032 = vunpack.c.l.b16 %v3767
    %v4033 = vunpack.c.h.b16 %v3767
    %v4034 = vunpack.c.l.b16 %v3768
    %v4035 = vunpack.c.l.b16 %v3769
    %v4036 = vunpack.c.h.b16 %v3769
    %v4037 = vunpack.c.l.b16 %v3770
    %v4038 = vunpack.c.l.b16 %v3771
    %v4039 = vunpack.c.h.b16 %v3771
    %v4040 = vunpack.c.l.b16 %v3772
    %v4041 = vunpack.c.l.b16 %v3773
    %v4042 = vunpack.c.h.b16 %v3773
    %v4043 = vunpack.c.l.b16 %v3774
    %v4044 = vunpack.c.l.b16 %v3775
    %v4045 = vunpack.c.h.b16 %v3775
    %v4046 = vunpack.c.l.b16 %v3776
    %v4047 = vunpack.c.l.b16 %v3777
    %v4048 = vunpack.c.h.b16 %v3777
    %v4049 = vunpack.c.l.b16 %v3778
    %v4050 = vunpack.c.l.b16 %v3779
    %v4051 = vunpack.c.h.b16 %v3779
    %v4052 = vunpack.c.l.b16 %v3780
    %v4053 = vunpack.c.l.b16 %v3781
    %v4054 = vunpack.c.h.b16 %v3781
    %v4055 = vunpack.c.l.b16 %v3782
    %v4056 = vunpack.c.l.b16 %v3783
    %v4057 = vunpack.c.h.b16 %v3783
    %v4058 = vunpack.c.l.b16 %v3784
    %v4059 = vunpack.c.l.b16 %v3785
    %v4060 = vunpack.c.h.b16 %v3785
    %v4061 = vunpack.c.l.b16 %v3786
    %v4062 = vunpack.c.l.b16 %v3787
    %v4063 = vunpack.c.h.b16 %v3787
    %v4064 = vunpack.c.l.b16 %v3788
    %v4065 = vunpack.c.l.b16 %v3789
    %v4066 = vunpack.c.h.b16 %v3789
    %v4067 = vunpack.c.l.b16 %v3790
    %v4068 = vunpack.c.l.b16 %v3791
    %v4069 = vunpack.c.h.b16 %v3791
    %v4070 = vunpack.c.l.b16 %v3792
    %v4071 = vunpack.c.l.b16 %v3793
    %v4072 = vunpack.c.h.b16 %v3793
    %v4073 = vunpack.c.l.b16 %v3794
    %v4074 = vunpack.c.l.b16 %v3795
    %v4075 = vunpack.c.h.b16 %v3795
    %v4076 = vunpack.c.l.b16 %v3796
    %v4077 = vunpack.c.l.b16 %v3797
    %v4078 = vunpack.c.h.b16 %v3797
    %v4079 = vunpack.c.l.b16 %v3798
    %v4080 = vunpack.c.l.b16 %v3799
    %v4081 = vunpack.c.h.b16 %v3799
    %v4082 = vunpack.c.l.b16 %v3800
    %v4083 = vunpack.c.l.b16 %v3801
    %v4084 = vunpack.c.h.b16 %v3801
    %v4085 = vunpack.c.l.b16 %v3802
    %v4086 = vunpack.c.l.b16 %v3803
    %v4087 = vunpack.c.h.b16 %v3803
    %v4088 = vunpack.c.l.b16 %v3804
    %v4089 = vunpack.c.l.b16 %v3805
    %v4090 = vunpack.c.h.b16 %v3805
    %v4091 = vunpack.c.l.b16 %v3806
    %v4092 = vunpack.c.l.b16 %v3807
    %v4093 = vunpack.c.h.b16 %v3807
    %v4094 = vunpack.c.l.b16 %v3808
    %v4095 = vunpack.c.l.b16 %v3809
    %v4096 = vunpack.c.h.b16 %v3809
    %v4097 = vunpack.c.l.b16 %v3810
    %v4098 = vunpack.c.l.b16 %v3811
    %v4099 = vunpack.c.h.b16 %v3811
    %v4100 = vunpack.c.l.b16 %v3812
    %v4101 = vunpack.c.l.b16 %v3813
    %v4102 = vunpack.c.h.b16 %v3813
    %v4103 = vunpack.c.l.b16 %v3814
    %v4104 = vpack.c.b16 %v3957, %v3954
    %v4105 = vpack.c.b16 %v3958, %v3955
    %v4106 = vpack.c.b16 %v3959, %v3956
    %v4107 = vpack.c.b16 %v3963, %v3960
    %v4108 = vpack.c.b16 %v3964, %v3961
    %v4109 = vpack.c.b16 %v3965, %v3962
    %v4110 = vpack.c.b16 %v3969, %v3966
    %v4111 = vpack.c.b16 %v3970, %v3967
    %v4112 = vpack.c.b16 %v3971, %v3968
    %v4113 = vpack.c.b16 %v3975, %v3972
    %v4114 = vpack.c.b16 %v3976, %v3973
    %v4115 = vpack.c.b16 %v3977, %v3974
    %v4116 = vpack.c.b16 %v3981, %v3978
    %v4117 = vpack.c.b16 %v3982, %v3979
    %v4118 = vpack.c.b16 %v3983, %v3980
    %v4119 = vpack.c.b16 %v3987, %v3984
    %v4120 = vpack.c.b16 %v3988, %v3985
    %v4121 = vpack.c.b16 %v3989, %v3986
    %v4122 = vpack.c.b16 %v3993, %v3990
    %v4123 = vpack.c.b16 %v3994, %v3991
    %v4124 = vpack.c.b16 %v3995, %v3992
    %v4125 = vpack.c.b16 %v3999, %v3996
    %v4126 = vpack.c.b16 %v4000, %v3997
    %v4127 = vpack.c.b16 %v4001, %v3998
    %v4128 = vpack.c.b16 %v4005, %v4002
    %v4129 = vpack.c.b16 %v4006, %v4003
    %v4130 = vpack.c.b16 %v4007, %v4004
    %v4131 = vpack.c.b16 %v4011, %v4008
    %v4132 = vpack.c.b16 %v4012, %v4009
    %v4133 = vpack.c.b16 %v4013, %v4010
    %v4134 = vpack.c.b16 %v4017, %v4014
    %v4135 = vpack.c.b16 %v4018, %v4015
    %v4136 = vpack.c.b16 %v4019, %v4016
    %v4137 = vpack.c.b16 %v4023, %v4020
    %v4138 = vpack.c.b16 %v4024, %v4021
    %v4139 = vpack.c.b16 %v4025, %v4022
    %v4140 = vpack.c.b16 %v4029, %v4026
    %v4141 = vpack.c.b16 %v4030, %v4027
    %v4142 = vpack.c.b16 %v4031, %v4028
    %v4143 = vpack.c.b16 %v4035, %v4032
    %v4144 = vpack.c.b16 %v4036, %v4033
    %v4145 = vpack.c.b16 %v4037, %v4034
    %v4146 = vpack.c.b16 %v4041, %v4038
    %v4147 = vpack.c.b16 %v4042, %v4039
    %v4148 = vpack.c.b16 %v4043, %v4040
    %v4149 = vpack.c.b16 %v4047, %v4044
    %v4150 = vpack.c.b16 %v4048, %v4045
    %v4151 = vpack.c.b16 %v4049, %v4046
    %v4152 = vpack.c.b16 %v4053, %v4050
    %v4153 = vpack.c.b16 %v4054, %v4051
    %v4154 = vpack.c.b16 %v4055, %v4052
    %v4155 = vpack.c.b16 %v4059, %v4056
    %v4156 = vpack.c.b16 %v4060, %v4057
    %v4157 = vpack.c.b16 %v4061, %v4058
    %v4158 = vpack.c.b16 %v4065, %v4062
    %v4159 = vpack.c.b16 %v4066, %v4063
    %v4160 = vpack.c.b16 %v4067, %v4064
    %v4161 = vpack.c.b16 %v4071, %v4068
    %v4162 = vpack.c.b16 %v4072, %v4069
    %v4163 = vpack.c.b16 %v4073, %v4070
    %v4164 = vpack.c.b16 %v4077, %v4074
    %v4165 = vpack.c.b16 %v4078, %v4075
    %v4166 = vpack.c.b16 %v4079, %v4076
    %v4167 = vpack.c.b16 %v4083, %v4080
    %v4168 = vpack.c.b16 %v4084, %v4081
    %v4169 = vpack.c.b16 %v4085, %v4082
    %v4170 = vpack.c.b16 %v4089, %v4086
    %v4171 = vpack.c.b16 %v4090, %v4087
    %v4172 = vpack.c.b16 %v4091, %v4088
    %v4173 = vpack.c.b16 %v4095, %v4092
    %v4174 = vpack.c.b16 %v4096, %v4093
    %v4175 = vpack.c.b16 %v4097, %v4094
    %v4176 = vpack.c.b16 %v4101, %v4098
    %v4177 = vpack.c.b16 %v4102, %v4099
    %v4178 = vpack.c.b16 %v4103, %v4100
    %v4255 = vsel %vm2351, %v3846, 0
    %4257 = vmatprep.subr.bf16.mxu0 %v4105
    %4258 = vmatpush1.bf16.msra.mxu0 %v4104
    %4259 = vmatprep.subr.bf16.mxu0 %v4108
    %4260 = vmatpush1.bf16.msra.mxu0 %v4107
    %4261 = vmatprep.subr.bf16.mxu0 %v4111
    %4262 = vmatpush1.bf16.msra.mxu0 %v4110
    %4263 = vmatprep.subr.bf16.mxu0 %v4114
    %4264 = vmatpush1.bf16.msra.mxu0 %v4113
    %4265 = vmatprep.subr.bf16.mxu0 %v4117
    %4266 = vmatpush1.bf16.msra.mxu0 %v4116
    %4267 = vmatprep.subr.bf16.mxu0 %v4120
    %4268 = vmatpush1.bf16.msra.mxu0 %v4119
    %4269 = vmatprep.subr.bf16.mxu0 %v4123
    %4270 = vmatpush1.bf16.msra.mxu0 %v4122
    %4271 = vmatprep.subr.bf16.mxu0 %v4126
    %4272 = vmatpush1.bf16.msra.mxu0 %v4125
    %4273 = vmatprep.subr.bf16.mxu0 %v4129
    %4274 = vmatpush1.bf16.msra.mxu0 %v4128
    %4275 = vmatprep.subr.bf16.mxu0 %v4132
    %4276 = vmatpush1.bf16.msra.mxu0 %v4131
    %4277 = vmatprep.subr.bf16.mxu0 %v4135
    %4278 = vmatpush1.bf16.msra.mxu0 %v4134
    %4279 = vmatprep.subr.bf16.mxu0 %v4138
    %4280 = vmatpush1.bf16.msra.mxu0 %v4137
    %4281 = vmatprep.subr.bf16.mxu0 %v4141
    %4282 = vmatpush1.bf16.msra.mxu0 %v4140
    %4283 = vmatprep.subr.bf16.mxu0 %v4144
    %4284 = vmatpush1.bf16.msra.mxu0 %v4143
    %4285 = vmatprep.subr.bf16.mxu0 %v4147
    %4286 = vmatpush1.bf16.msra.mxu0 %v4146
    %4287 = vmatprep.subr.bf16.mxu0 %v4150
    %4288 = vmatpush1.bf16.msra.mxu0 %v4149
    %4289 = vmatprep.mubr.bf16.mxu0 %v3849
    %4290 = vmatmul.mubr.bf16.gmra.mrb[0].mxu0 %v3848
    %v4291 = vpop.f32.mrb[0].mxu0
    %v4292 = vadd.f32 %v3824, %v4291
    %v4293 = vpop.f32.mrb[0].mxu0
    %v4294 = vadd.f32 %v3828, %v4293
    %v4295 = vpop.f32.mrb[0].mxu0
    %v4296 = vpop.f32.mrb[0].mxu0
    %4297 = vdwg.mxu0
    %4298 = vmatprep.subr.bf16.mxu0 %v4153
    %4299 = vmatpush1.bf16.msra.mxu0 %v4152
    %4300 = vmatprep.subr.bf16.mxu0 %v4156
    %4301 = vmatpush1.bf16.msra.mxu0 %v4155
    %4302 = vmatprep.subr.bf16.mxu0 %v4159
    %4303 = vmatpush1.bf16.msra.mxu0 %v4158
    %4304 = vmatprep.subr.bf16.mxu0 %v4162
    %4305 = vmatpush1.bf16.msra.mxu0 %v4161
    %4306 = vmatprep.subr.bf16.mxu0 %v4165
    %4307 = vmatpush1.bf16.msra.mxu0 %v4164
    %4308 = vmatprep.subr.bf16.mxu0 %v4168
    %4309 = vmatpush1.bf16.msra.mxu0 %v4167
    %4310 = vmatprep.subr.bf16.mxu0 %v4171
    %4311 = vmatpush1.bf16.msra.mxu0 %v4170
    %4312 = vmatprep.subr.bf16.mxu0 %v4174
    %4313 = vmatpush1.bf16.msra.mxu0 %v4173
    %4314 = vmatprep.subr.bf16.mxu0 %v4177
    %4315 = vmatpush1.bf16.msra.mxu0 %v4176
    %4316 = vmatprep.subr.bf16.mxu0 0
    %4317 = vmatpush1.bf16.msra.mxu0 0
    %4318 = vmatprep.subr.bf16.mxu0 0
    %4319 = vmatpush1.bf16.msra.mxu0 0
    %4320 = vmatprep.subr.bf16.mxu0 0
    %4321 = vmatpush1.bf16.msra.mxu0 0
    %4322 = vmatprep.subr.bf16.mxu0 0
    %4323 = vmatpush1.bf16.msra.mxu0 0
    %4324 = vmatprep.subr.bf16.mxu0 0
    %4325 = vmatpush1.bf16.msra.mxu0 0
    %4326 = vmatprep.subr.bf16.mxu0 0
    %4327 = vmatpush1.bf16.msra.mxu0 0
    %4328 = vmatprep.subr.bf16.mxu0 0
    %4329 = vmatpush1.bf16.msra.mxu0 0
    %4330 = vmatprep.mubr.bf16.mxu0 %v4255
    %4331 = vmatmul.mubr.bf16.gmra.mrb[0].mxu0 %v3850
    %v4332 = vpop.f32.mrb[0].mxu0
    %v4333 = vadd.f32 %v4292, %v4332
    %v4334 = vpop.f32.mrb[0].mxu0
    %v4335 = vadd.f32 %v4294, %v4334
    %v4336 = vpop.f32.mrb[0].mxu0
    %v4337 = vpop.f32.mrb[0].mxu0
    %4338 = vdwg.mxu0
    %4339 = vmatprep.subr.bf16.mxu0 0
    %4340 = vmatpush1.bf16.msra.mxu0 %v4106
    %4341 = vmatprep.subr.bf16.mxu0 0
    %4342 = vmatpush1.bf16.msra.mxu0 %v4109
    %4343 = vmatprep.subr.bf16.mxu0 0
    %4344 = vmatpush1.bf16.msra.mxu0 %v4112
    %4345 = vmatprep.subr.bf16.mxu0 0
    %4346 = vmatpush1.bf16.msra.mxu0 %v4115
    %4347 = vmatprep.subr.bf16.mxu0 0
    %4348 = vmatpush1.bf16.msra.mxu0 %v4118
    %4349 = vmatprep.subr.bf16.mxu0 0
    %4350 = vmatpush1.bf16.msra.mxu0 %v4121
    %4351 = vmatprep.subr.bf16.mxu0 0
    %4352 = vmatpush1.bf16.msra.mxu0 %v4124
    %4353 = vmatprep.subr.bf16.mxu0 0
    %4354 = vmatpush1.bf16.msra.mxu0 %v4127
    %4355 = vmatprep.subr.bf16.mxu0 0
    %4356 = vmatpush1.bf16.msra.mxu0 %v4130
    %4357 = vmatprep.subr.bf16.mxu0 0
    %4358 = vmatpush1.bf16.msra.mxu0 %v4133
    %4359 = vmatprep.subr.bf16.mxu0 0
    %4360 = vmatpush1.bf16.msra.mxu0 %v4136
    %4361 = vmatprep.subr.bf16.mxu0 0
    %4362 = vmatpush1.bf16.msra.mxu0 %v4139
    %4363 = vmatprep.subr.bf16.mxu0 0
    %4364 = vmatpush1.bf16.msra.mxu0 %v4142
    %4365 = vmatprep.subr.bf16.mxu0 0
    %4366 = vmatpush1.bf16.msra.mxu0 %v4145
    %4367 = vmatprep.subr.bf16.mxu0 0
    %4368 = vmatpush1.bf16.msra.mxu0 %v4148
    %4369 = vmatprep.subr.bf16.mxu0 0
    %4370 = vmatpush1.bf16.msra.mxu0 %v4151
    %4371 = vmatprep.mubr.bf16.mxu0 %v3849
    %4372 = vmatmul.mubr.bf16.gmra.mrb[0].mxu0 %v3848
    %v4373 = vpop.f32.mrb[0].mxu0
    %v4374 = vadd.f32 %v3832, %v4373
    %v4375 = vpop.f32.mrb[0].mxu0
    %v4376 = vpop.f32.mrb[0].mxu0
    %v4377 = vpop.f32.mrb[0].mxu0
    %4378 = vdwg.mxu0
    %4379 = vmatprep.subr.bf16.mxu0 0
    %4380 = vmatpush1.bf16.msra.mxu0 %v4154
    %4381 = vmatprep.subr.bf16.mxu0 0
    %4382 = vmatpush1.bf16.msra.mxu0 %v4157
    %4383 = vmatprep.subr.bf16.mxu0 0
    %4384 = vmatpush1.bf16.msra.mxu0 %v4160
    %4385 = vmatprep.subr.bf16.mxu0 0
    %4386 = vmatpush1.bf16.msra.mxu0 %v4163
    %4387 = vmatprep.subr.bf16.mxu0 0
    %4388 = vmatpush1.bf16.msra.mxu0 %v4166
    %4389 = vmatprep.subr.bf16.mxu0 0
    %4390 = vmatpush1.bf16.msra.mxu0 %v4169
    %4391 = vmatprep.subr.bf16.mxu0 0
    %4392 = vmatpush1.bf16.msra.mxu0 %v4172
    %4393 = vmatprep.subr.bf16.mxu0 0
    %4394 = vmatpush1.bf16.msra.mxu0 %v4175
    %4395 = vmatprep.subr.bf16.mxu0 0
    %4396 = vmatpush1.bf16.msra.mxu0 %v4178
    %4397 = vmatprep.subr.bf16.mxu0 0
    %4398 = vmatpush1.bf16.msra.mxu0 0
    %4399 = vmatprep.subr.bf16.mxu0 0
    %4400 = vmatpush1.bf16.msra.mxu0 0
    %4401 = vmatprep.subr.bf16.mxu0 0
    %4402 = vmatpush1.bf16.msra.mxu0 0
    %4403 = vmatprep.subr.bf16.mxu0 0
    %4404 = vmatpush1.bf16.msra.mxu0 0
    %4405 = vmatprep.subr.bf16.mxu0 0
    %4406 = vmatpush1.bf16.msra.mxu0 0
    %4407 = vmatprep.subr.bf16.mxu0 0
    %4408 = vmatpush1.bf16.msra.mxu0 0
    %4409 = vmatprep.subr.bf16.mxu0 0
    %4410 = vmatpush1.bf16.msra.mxu0 0
    %4411 = vmatprep.mubr.bf16.mxu0 %v4255
    %4412 = vmatmul.mubr.bf16.gmra.mrb[0].mxu0 %v3850
    %v4413 = vpop.f32.mrb[0].mxu0
    %v4414 = vadd.f32 %v4374, %v4413
    %v4415 = vpop.f32.mrb[0].mxu0
    %v4416 = vpop.f32.mrb[0].mxu0
    %v4417 = vpop.f32.mrb[0].mxu0
    %4418 = vdwg.mxu0
    %v4419 = vmax.f32 %v4333, 0.0
    %v4420 = vmax.f32 %v4335, 0.0
    %v4421 = vmax.f32 %v4414, 0.0
    %s4422 = scalar_lea.vmem [#allocation11], 304
    %v4423 = vld [vmem:[%s4422] sm:$0xf]
    %v4424 = vld [vmem:[%s4422 + $0x4] sm:$0xf]
    %v4425 = vld [vmem:[%s4422 + $0x8] sm:$0xf]
    %v4426 = vld [vmem:[%s4422 + $0xc] sm:$0xf]
    %v4427 = vld [vmem:[%s4422 + $0x10] sm:$0xf]
    %v4428 = vld [vmem:[%s4422 + $0x14] sm:$0xf]
    %v4429 = vld [vmem:[%s4422 + $0x18] sm:$0xf]
    %v4430 = vld [vmem:[%s4422 + $0x1c] sm:$0xf]
    %v4431 = vld [vmem:[%s4422 + $0x20] sm:$0xf]
    %v4432 = vld [vmem:[%s4422 + $0x24] sm:$0xf]
    %v4433 = vld [vmem:[%s4422 + $0x28] sm:$0xf]
    %v4434 = vld [vmem:[%s4422 + $0x2c] sm:$0xf]
    %v4435 = vld [vmem:[%s4422 + $0x30] sm:$0xf]
    %v4436 = vld [vmem:[%s4422 + $0x34] sm:$0xf]
    %v4437 = vld [vmem:[%s4422 + $0x38] sm:$0xf]
    %v4438 = vld [vmem:[%s4422 + $0x3c] sm:$0xf]
    %v4439 = vld [vmem:[%s4422 + $0x40] sm:$0xf]
    %v4440 = vld [vmem:[%s4422 + $0x44] sm:$0xf]
    %v4441 = vld [vmem:[%s4422 + $0x48] sm:$0xf]
    %v4442 = vld [vmem:[%s4422 + $0x4c] sm:$0xf]
    %v4443 = vld [vmem:[%s4422 + $0x50] sm:$0xf]
    %v4444 = vld [vmem:[%s4422 + $0x54] sm:$0xf]
    %v4445 = vld [vmem:[%s4422 + $0x58] sm:$0xf]
    %v4446 = vld [vmem:[%s4422 + $0x5c] sm:$0xf]
    %v4447 = vld [vmem:[%s4422 + $0x60] sm:$0xf]
    %v4448 = vld [vmem:[%s4422 + $0x64] sm:$0xf]
    %v4449 = vld [vmem:[%s4422 + $0x68] sm:$0xf]
    %v4450 = vld [vmem:[%s4422 + $0x6c] sm:$0xf]
    %v4451 = vld [vmem:[%s4422 + $0x70] sm:$0xf]
    %v4452 = vld [vmem:[%s4422 + $0x74] sm:$0xf]
    %v4453 = vld [vmem:[%s4422 + $0x78] sm:$0xf]
    %v4454 = vld [vmem:[%s4422 + $0x7c] sm:$0xf]
    %v4455 = vld [vmem:[%s4422 + $0x80] sm:$0xf]
    %v4456 = vld [vmem:[%s4422 + $0x84] sm:$0xf]
    %v4457 = vld [vmem:[%s4422 + $0x88] sm:$0xf]
    %v4458 = vld [vmem:[%s4422 + $0x8c] sm:$0xf]
    %v4459 = vld [vmem:[%s4422 + $0x90] sm:$0xf]
    %v4460 = vld [vmem:[%s4422 + $0x94] sm:$0x3]
    %v4461 = vpack.c.bf16 %v4419, %v4419
    %v4462 = vpack.c.bf16 %v4420, %v4420
    %v4463 = vpack.c.bf16 %v4421, %v4421
    %v4502 = vunpack.c.l.b16 %v4423
    %v4503 = vunpack.c.l.b16 %v4424
    %v4504 = vunpack.c.l.b16 %v4425
    %v4505 = vunpack.c.l.b16 %v4426
    %v4506 = vunpack.c.l.b16 %v4427
    %v4507 = vunpack.c.l.b16 %v4428
    %v4508 = vunpack.c.l.b16 %v4429
    %v4509 = vunpack.c.l.b16 %v4430
    %v4510 = vunpack.c.l.b16 %v4431
    %v4511 = vunpack.c.l.b16 %v4432
    %v4512 = vunpack.c.l.b16 %v4433
    %v4513 = vunpack.c.l.b16 %v4434
    %v4514 = vunpack.c.l.b16 %v4435
    %v4515 = vunpack.c.l.b16 %v4436
    %v4516 = vunpack.c.l.b16 %v4437
    %v4517 = vunpack.c.l.b16 %v4438
    %v4518 = vunpack.c.l.b16 %v4439
    %v4519 = vunpack.c.l.b16 %v4440
    %v4520 = vunpack.c.l.b16 %v4441
    %v4521 = vunpack.c.l.b16 %v4442
    %v4522 = vunpack.c.l.b16 %v4443
    %v4523 = vunpack.c.l.b16 %v4444
    %v4524 = vunpack.c.l.b16 %v4445
    %v4525 = vunpack.c.l.b16 %v4446
    %v4526 = vunpack.c.l.b16 %v4447
    %v4527 = vunpack.c.l.b16 %v4448
    %v4528 = vunpack.c.l.b16 %v4449
    %v4529 = vunpack.c.l.b16 %v4450
    %v4530 = vunpack.c.l.b16 %v4451
    %v4531 = vunpack.c.l.b16 %v4452
    %v4532 = vunpack.c.l.b16 %v4453
    %v4533 = vunpack.c.l.b16 %v4454
    %v4534 = vunpack.c.l.b16 %v4455
    %v4535 = vunpack.c.l.b16 %v4456
    %v4536 = vunpack.c.l.b16 %v4457
    %v4537 = vunpack.c.l.b16 %v4458
    %v4538 = vunpack.c.l.b16 %v4459
    %v4539 = vunpack.c.l.b16 %v4460
    %v4540 = vpack.c.b16 %v4503, %v4502
    %v4541 = vpack.c.b16 %v4505, %v4504
    %v4542 = vpack.c.b16 %v4507, %v4506
    %v4543 = vpack.c.b16 %v4509, %v4508
    %v4544 = vpack.c.b16 %v4511, %v4510
    %v4545 = vpack.c.b16 %v4513, %v4512
    %v4546 = vpack.c.b16 %v4515, %v4514
    %v4547 = vpack.c.b16 %v4517, %v4516
    %v4548 = vpack.c.b16 %v4519, %v4518
    %v4549 = vpack.c.b16 %v4521, %v4520
    %v4550 = vpack.c.b16 %v4523, %v4522
    %v4551 = vpack.c.b16 %v4525, %v4524
    %v4552 = vpack.c.b16 %v4527, %v4526
    %v4553 = vpack.c.b16 %v4529, %v4528
    %v4554 = vpack.c.b16 %v4531, %v4530
    %v4555 = vpack.c.b16 %v4533, %v4532
    %v4556 = vpack.c.b16 %v4535, %v4534
    %v4557 = vpack.c.b16 %v4537, %v4536
    %v4558 = vpack.c.b16 %v4539, %v4538
    %v4578 = vsel %vm2674, %v4463, 0
    %v4581 = vsel %vm2678, %v4558, 0
    %4583 = vmatprep.subr.bf16.mxu0 0
    %4584 = vmatpush1.bf16.msra.mxu0 %v4540
    %4585 = vmatprep.subr.bf16.mxu0 0
    %4586 = vmatpush1.bf16.msra.mxu0 %v4541
    %4587 = vmatprep.subr.bf16.mxu0 0
    %4588 = vmatpush1.bf16.msra.mxu0 %v4542
    %4589 = vmatprep.subr.bf16.mxu0 0
    %4590 = vmatpush1.bf16.msra.mxu0 %v4543
    %4591 = vmatprep.subr.bf16.mxu0 0
    %4592 = vmatpush1.bf16.msra.mxu0 %v4544
    %4593 = vmatprep.subr.bf16.mxu0 0
    %4594 = vmatpush1.bf16.msra.mxu0 %v4545
    %4595 = vmatprep.subr.bf16.mxu0 0
    %4596 = vmatpush1.bf16.msra.mxu0 %v4546
    %4597 = vmatprep.subr.bf16.mxu0 0
    %4598 = vmatpush1.bf16.msra.mxu0 %v4547
    %4599 = vmatprep.subr.bf16.mxu0 0
    %4600 = vmatpush1.bf16.msra.mxu0 %v4548
    %4601 = vmatprep.subr.bf16.mxu0 0
    %4602 = vmatpush1.bf16.msra.mxu0 %v4549
    %4603 = vmatprep.subr.bf16.mxu0 0
    %4604 = vmatpush1.bf16.msra.mxu0 %v4550
    %4605 = vmatprep.subr.bf16.mxu0 0
    %4606 = vmatpush1.bf16.msra.mxu0 %v4551
    %4607 = vmatprep.subr.bf16.mxu0 0
    %4608 = vmatpush1.bf16.msra.mxu0 %v4552
    %4609 = vmatprep.subr.bf16.mxu0 0
    %4610 = vmatpush1.bf16.msra.mxu0 %v4553
    %4611 = vmatprep.subr.bf16.mxu0 0
    %4612 = vmatpush1.bf16.msra.mxu0 %v4554
    %4613 = vmatprep.subr.bf16.mxu0 0
    %4614 = vmatpush1.bf16.msra.mxu0 %v4555
    %4615 = vmatprep.mubr.bf16.mxu0 %v4462
    %4616 = vmatmul.mubr.bf16.gmra.mrb[0].mxu0 %v4461
    %v4617 = vpop.f32.mrb[0].mxu0
    %v4618 = vadd.f32 0.0, %v4617
    %v4619 = vpop.f32.mrb[0].mxu0
    %v4620 = vpop.f32.mrb[0].mxu0
    %v4621 = vpop.f32.mrb[0].mxu0
    %4622 = vdwg.mxu0
    %4623 = vmatprep.subr.bf16.mxu0 0
    %4624 = vmatpush1.bf16.msra.mxu0 %v4556
    %4625 = vmatprep.subr.bf16.mxu0 0
    %4626 = vmatpush1.bf16.msra.mxu0 %v4557
    %4627 = vmatprep.subr.bf16.mxu0 0
    %4628 = vmatpush1.bf16.msra.mxu0 %v4581
    %4629 = vmatprep.subr.bf16.mxu0 0
    %4630 = vmatpush1.bf16.msra.mxu0 0
    %4631 = vmatprep.subr.bf16.mxu0 0
    %4632 = vmatpush1.bf16.msra.mxu0 0
    %4633 = vmatprep.subr.bf16.mxu0 0
    %4634 = vmatpush1.bf16.msra.mxu0 0
    %4635 = vmatprep.subr.bf16.mxu0 0
    %4636 = vmatpush1.bf16.msra.mxu0 0
    %4637 = vmatprep.subr.bf16.mxu0 0
    %4638 = vmatpush1.bf16.msra.mxu0 0
    %4639 = vmatprep.subr.bf16.mxu0 0
    %4640 = vmatpush1.bf16.msra.mxu0 0
    %4641 = vmatprep.subr.bf16.mxu0 0
    %4642 = vmatpush1.bf16.msra.mxu0 0
    %4643 = vmatprep.subr.bf16.mxu0 0
    %4644 = vmatpush1.bf16.msra.mxu0 0
    %4645 = vmatprep.subr.bf16.mxu0 0
    %4646 = vmatpush1.bf16.msra.mxu0 0
    %4647 = vmatprep.subr.bf16.mxu0 0
    %4648 = vmatpush1.bf16.msra.mxu0 0
    %4649 = vmatprep.subr.bf16.mxu0 0
    %4650 = vmatpush1.bf16.msra.mxu0 0
    %4651 = vmatprep.subr.bf16.mxu0 0
    %4652 = vmatpush1.bf16.msra.mxu0 0
    %4653 = vmatprep.subr.bf16.mxu0 0
    %4654 = vmatpush1.bf16.msra.mxu0 0
    %4655 = vmatprep.mubr.bf16.mxu0 0
    %4656 = vmatmul.mubr.bf16.gmra.mrb[0].mxu0 %v4578
    %v4657 = vpop.f32.mrb[0].mxu0
    %v4658 = vadd.f32 %v4618, %v4657
    %v4659 = vpop.f32.mrb[0].mxu0
    %v4660 = vpop.f32.mrb[0].mxu0
    %v4661 = vpop.f32.mrb[0].mxu0
    %4662 = vdwg.mxu0
    %v4663 = vadd.f32 %v3713, %v4658
    %v4664 = vlaneseq
    %v4665 = vand.u32 %v4664, 127
    %vm4666 = vcmp.lt.s32.totalorder %v4665, 8
    %vm4667 = vcmp.ge.s32.totalorder %v4665, 8
    %vm4668 = vcmp.lt.s32.totalorder %v4665, 40
    %vm4669 = vmand %vm4667, %vm4668
    %vm4670 = vcmp.ge.s32.totalorder %v4665, 40
    %vm4671 = vcmp.lt.s32.totalorder %v4665, 72
    %vm4672 = vmand %vm4670, %vm4671
    %v4673 = vtanh.pop %v4663
    %v4674 = vsel %vm4669, %v4663, 0.0
    %v4675 = vmul.f32 %v4674, %v4674
    %4676 = vadd.xlane.f32.xlu0 %v4675
    %v4677 = vpop.xlane.xlu0 %4676
    %v4678 = vmax.f32 %v4677, 1e-24
    %v4679 = vrsqrt.pop %v4678
    %v4680 = vmul.f32 %v4674, %v4679
    %v4681 = vsel %vm4672, %v4673, 0.0
    %v4682 = vsel %vm4669, %v4680, %v4681
    %v4683 = vsel %vm4666, %v4673, %v4682
    %4684 = vst [vmem:[#allocation13] sm:$0xff] %v4683
    // Predicated region
    $region66: #{tpu_custom_call.1} parent=1 // pred_check
      _
    $region67: #{tpu_custom_call.1} parent=1 // pred_check_branch
      %4686 = sbr.rel (0) target = $region69
    $region68: #{tpu_custom_call.1} parent=1 // pred_region
      %s4688 = ssub.s32 128, 128
      %4689 = vsyncadd [#allocation4], %s4688
      %s4691 = sshll.u32 [#allocation13], 4
      %s4692 = int_to_ptr.vmem [resolvable:$true] %s4691
      %4694 = dma.vmem_to_hbm [thread:$0]  %s4692, 128, %s10, [#allocation4]
    $region69: #{tpu_custom_call.1} parent=1 // pred_fallthru
      _
    // Predicated region
    $region70: #{tpu_custom_call.1} parent=1 // pred_check
      _
    $region71: #{tpu_custom_call.1} parent=1 // pred_check_branch
      %4696 = sbr.rel (0) target = $region73
    $region72: #{tpu_custom_call.1} parent=1 // pred_region
      %4697 = dma.done [#allocation4], 128
    $region73: #{tpu_custom_call.1} parent=1 // pred_fallthru
      _
    %4698 = vsyncpa [#allocation3], 1
    %4699 = vsyncpa [#allocation6], 1
    %4700 = vsyncpa [#allocation9], 1
    %4701 = vsyncpa [#allocation12], 1
    %4702 = vsyncpa [#allocation4], 1

</llo_original>
